<compile_context>
chip_gen: v7x
topology: tpu7x:2x2x1
jax: 0.10.0
libtpu: 0.0.40
codegen_flags: <defaults>
</compile_context>

<pallas_src>
import functools

import jax
import jax.numpy as jnp
from jax import lax
from jax.experimental import pallas as pl
from jax.experimental.pallas import tpu as pltpu


def _perceiver_attention_kernel(x_ref, ctx_ref, mask_ref, wq_ref, wk_ref,
                                wv_ref, wo_ref, bo_ref, out_ref, *, scale):
    H = wq_ref.shape[0]

    x = x_ref[0]      # (N, Dq)
    ctx = ctx_ref[0]  # (M, Dc)
    m = mask_ref[0]   # (1, M), 1.0 = keep

    N, Dq = x.shape
    M, Dc = ctx.shape

    # Broadcast activations over heads once so every contraction below is a
    # standard leading-batch-dim matmul (no in-kernel transposes / XLU work).
    xb = jnp.broadcast_to(x, (H, N, Dq))
    cb = jnp.broadcast_to(ctx, (H, M, Dc))

    q = jnp.einsum('hnd,hde->hne', xb, wq_ref[...],
                   preferred_element_type=jnp.float32)            # (H, N, Dh)
    k = jnp.einsum('hmd,hde->hme', cb, wk_ref[...],
                   preferred_element_type=jnp.float32)            # (H, M, Dh)
    v = jnp.einsum('hmd,hde->hme', cb, wv_ref[...],
                   preferred_element_type=jnp.float32)            # (H, M, Dh)

    # sim = q @ k^T per head (contract last dims, no explicit transpose)
    sim = jnp.einsum('hne,hme->hnm', q, k,
                     preferred_element_type=jnp.float32) * scale  # (H, N, M)

    # masked_fill(~mask, -finfo(f32).max); mask row broadcasts over heads/rows.
    neg = jnp.float32(-jnp.finfo(jnp.float32).max)
    sim = jnp.where(m[None] > 0.0, sim, neg)

    # row-wise softmax (denominator reciprocal on the EUP)
    sim_max = jnp.max(sim, axis=-1, keepdims=True)
    p = jnp.exp(sim - sim_max)
    attn = p * pl.reciprocal(jnp.sum(p, axis=-1, keepdims=True), approx=True)

    # TODO(synk): attention dropout omitted (module default p=0.0 / eval mode -> identity).

    o = jnp.einsum('hnm,hme->hne', attn, v,
                   preferred_element_type=jnp.float32)            # (H, N, Dh)
    per_head = jnp.einsum('hne,heq->hnq', o, wo_ref[...],
                          preferred_element_type=jnp.float32)     # (H, N, Dq)
    out = jnp.sum(per_head, axis=0) + bo_ref[...]                 # (N, Dq)
    out_ref[0] = out.astype(out_ref.dtype)


def perceiver_attention(x, to_q_w, to_kv_w, to_out_w, to_out_b,
                        context=None, mask=None, *, heads, dim_head):
    """PerceiverAttention forward.

    x:        (B, N, query_dim)
    to_q_w:   (inner_dim, query_dim)      -- PyTorch nn.Linear weight layout
    to_kv_w:  (2*inner_dim, context_dim)
    to_out_w: (query_dim, inner_dim)
    to_out_b: (query_dim,)
    context:  (B, M, context_dim) or None (defaults to x)
    mask:     (B, M) bool / {0,1} or None
    """
    if context is None:
        context = x

    B, N, Dq = x.shape
    _, M, Dc = context.shape
    H, Dh = heads, dim_head
    inner = H * Dh
    scale = float(Dh) ** -0.5

    # Parameter re-layout (once, outside the kernel): per-head weight slabs.
    wq = to_q_w.T.reshape(Dq, H, Dh).transpose(1, 0, 2)            # (H, Dq, Dh)
    wk = to_kv_w[:inner].T.reshape(Dc, H, Dh).transpose(1, 0, 2)   # (H, Dc, Dh)
    wv = to_kv_w[inner:].T.reshape(Dc, H, Dh).transpose(1, 0, 2)   # (H, Dc, Dh)
    wo = to_out_w.T.reshape(H, Dh, Dq)                             # (H, Dh, Dq)
    bo = to_out_b.reshape(1, Dq)

    if mask is None:
        mask_f = jnp.ones((B, 1, M), dtype=jnp.float32)
    else:
        mask_f = mask.reshape(B, 1, M).astype(jnp.float32)

    kernel = functools.partial(_perceiver_attention_kernel, scale=scale)

    return pl.pallas_call(
        kernel,
        out_shape=jax.ShapeDtypeStruct((B, N, Dq), x.dtype),
        grid_spec=pltpu.PrefetchScalarGridSpec(
            num_scalar_prefetch=0,
            grid=(B,),
            in_specs=[
                pl.BlockSpec((1, N, Dq), lambda b: (b, 0, 0)),   # x (per batch)
                pl.BlockSpec((1, M, Dc), lambda b: (b, 0, 0)),   # context
                pl.BlockSpec((1, 1, M), lambda b: (b, 0, 0)),    # mask
                pl.BlockSpec((H, Dq, Dh), lambda b: (0, 0, 0)),  # Wq (resident)
                pl.BlockSpec((H, Dc, Dh), lambda b: (0, 0, 0)),  # Wk (resident)
                pl.BlockSpec((H, Dc, Dh), lambda b: (0, 0, 0)),  # Wv (resident)
                pl.BlockSpec((H, Dh, Dq), lambda b: (0, 0, 0)),  # Wo (resident)
                pl.BlockSpec((1, Dq), lambda b: (0, 0)),         # out bias
            ],
            out_specs=pl.BlockSpec((1, N, Dq), lambda b: (b, 0, 0)),
        ),
        compiler_params=pltpu.CompilerParams(
            dimension_semantics=("parallel",)),
    )(x, context, mask_f, wq, wk, wv, wo, bo)


def _reference(x, to_q_w, to_kv_w, to_out_w, to_out_b, context, mask,
               heads, dim_head):
    """Plain-JAX reference of PerceiverAttention.forward (high precision)."""
    if context is None:
        context = x
    B, N, _ = x.shape
    M = context.shape[1]
    H, Dh = heads, dim_head
    inner = H * Dh
    scale = float(Dh) ** -0.5
    hp = lax.Precision.HIGHEST

    q = jnp.einsum('bnd,ed->bne', x, to_q_w, precision=hp)
    kv = jnp.einsum('bmd,ed->bme', context, to_kv_w, precision=hp)
    k, v = kv[..., :inner], kv[..., inner:]

    def split(t, L):
        return t.reshape(B, L, H, Dh).transpose(0, 2, 1, 3)

    qh, kh, vh = split(q, N), split(k, M), split(v, M)
    sim = jnp.einsum('bhnd,bhmd->bhnm', qh, kh, precision=hp) * scale
    if mask is not None:
        neg = -jnp.finfo(sim.dtype).max
        sim = jnp.where(mask[:, None, None, :], sim, neg)
    attn = jax.nn.softmax(sim, axis=-1)
    o = jnp.einsum('bhnm,bhmd->bhnd', attn, vh, precision=hp)
    o = o.transpose(0, 2, 1, 3).reshape(B, N, inner)
    return jnp.einsum('bne,qe->bnq', o, to_out_w, precision=hp) + to_out_b


if __name__ == "__main__":
    key = jax.random.PRNGKey(0)
    ks = jax.random.split(key, 7)

    B, N, M = 2, 8, 16            # batch, query (latent) seq, context seq
    query_dim, context_dim = 128, 128
    heads, dim_head = 8, 64
    inner = heads * dim_head

    x = jax.random.normal(ks[0], (B, N, query_dim), dtype=jnp.float32)
    context = jax.random.normal(ks[1], (B, M, context_dim), dtype=jnp.float32)
    mask = jax.random.uniform(ks[2], (B, M)) > 0.25

    to_q_w = jax.random.normal(ks[3], (inner, query_dim), jnp.float32) * (query_dim ** -0.5)
    to_kv_w = jax.random.normal(ks[4], (2 * inner, context_dim), jnp.float32) * (context_dim ** -0.5)
    to_out_w = jax.random.normal(ks[5], (query_dim, inner), jnp.float32) * (inner ** -0.5)
    to_out_b = jax.random.normal(ks[6], (query_dim,), jnp.float32) * 0.02

    out = perceiver_attention(x, to_q_w, to_kv_w, to_out_w, to_out_b,
                              context=context, mask=mask,
                              heads=heads, dim_head=dim_head)
    out = jax.block_until_ready(out)

    ref = _reference(x, to_q_w, to_kv_w, to_out_w, to_out_b, context, mask,
                     heads, dim_head)

    assert out.shape == (B, N, query_dim)
    max_err = float(jnp.max(jnp.abs(out - ref)))
    assert max_err < 5e-2, f"mismatch vs reference, max abs err = {max_err}"

    print("KERNEL_OK")
</pallas_src>

<mosaic_0001>
module attributes {stable_mosaic.version = 11 : i64} {
  func.func @_perceiver_attention_kernel(%arg0: i32, %arg1: memref<1x8x128xf32, #tpu.memory_space<vmem>>, %arg2: memref<1x16x128xf32, #tpu.memory_space<vmem>>, %arg3: memref<1x1x16xf32, #tpu.memory_space<vmem>>, %arg4: memref<8x128x64xf32, #tpu.memory_space<vmem>>, %arg5: memref<8x128x64xf32, #tpu.memory_space<vmem>>, %arg6: memref<8x128x64xf32, #tpu.memory_space<vmem>>, %arg7: memref<8x64x128xf32, #tpu.memory_space<vmem>>, %arg8: memref<1x128xf32, #tpu.memory_space<vmem>>, %arg9: memref<1x8x128xf32, #tpu.memory_space<vmem>>) attributes {dimension_semantics = [#tpu.dimension_semantics<parallel>], iteration_bounds = array<i64: 2>, scalar_prefetch = 0 : i64, scratch_operands = 0 : i64, tpu.core_type = #tpu.core_type<tc>, window_params = [{transform_indices = @transform_0, window_bounds = array<i64: 1, 8, 128>}, {transform_indices = @transform_1, window_bounds = array<i64: 1, 16, 128>}, {transform_indices = @transform_2, window_bounds = array<i64: 1, 1, 16>}, {pipeline_mode = #tpu.pipeline_mode<synchronous>, transform_indices = @transform_3, window_bounds = array<i64: 8, 128, 64>}, {pipeline_mode = #tpu.pipeline_mode<synchronous>, transform_indices = @transform_4, window_bounds = array<i64: 8, 128, 64>}, {pipeline_mode = #tpu.pipeline_mode<synchronous>, transform_indices = @transform_5, window_bounds = array<i64: 8, 128, 64>}, {pipeline_mode = #tpu.pipeline_mode<synchronous>, transform_indices = @transform_6, window_bounds = array<i64: 8, 64, 128>}, {pipeline_mode = #tpu.pipeline_mode<synchronous>, transform_indices = @transform_7, window_bounds = array<i64: 1, 128>}, {transform_indices = @transform_8, window_bounds = array<i64: 1, 8, 128>}]} {
    %c0 = arith.constant 0 : index
    %c0_0 = arith.constant 0 : index
    %c0_1 = arith.constant 0 : index
    %0 = vector.load %arg1[%c0, %c0_0, %c0_1] : memref<1x8x128xf32, #tpu.memory_space<vmem>>, vector<1x8x128xf32>
    %1 = vector.shape_cast %0 : vector<1x8x128xf32> to vector<8x128xf32>
    %c0_2 = arith.constant 0 : index
    %c0_3 = arith.constant 0 : index
    %c0_4 = arith.constant 0 : index
    %2 = vector.load %arg2[%c0_2, %c0_3, %c0_4] : memref<1x16x128xf32, #tpu.memory_space<vmem>>, vector<1x16x128xf32>
    %3 = vector.shape_cast %2 : vector<1x16x128xf32> to vector<16x128xf32>
    %c0_5 = arith.constant 0 : index
    %c0_6 = arith.constant 0 : index
    %c0_7 = arith.constant 0 : index
    %4 = vector.load %arg3[%c0_5, %c0_6, %c0_7] : memref<1x1x16xf32, #tpu.memory_space<vmem>>, vector<1x1x16xf32>
    %5 = vector.shape_cast %4 : vector<1x1x16xf32> to vector<1x16xf32>
    %6 = vector.shape_cast %1 : vector<8x128xf32> to vector<1x8x128xf32>
    %7 = vector.broadcast %6 : vector<1x8x128xf32> to vector<8x8x128xf32>
    %8 = vector.shape_cast %3 : vector<16x128xf32> to vector<1x16x128xf32>
    %9 = vector.broadcast %8 : vector<1x16x128xf32> to vector<8x16x128xf32>
    %c0_8 = arith.constant 0 : index
    %c0_9 = arith.constant 0 : index
    %c0_10 = arith.constant 0 : index
    %10 = vector.load %arg4[%c0_8, %c0_9, %c0_10] : memref<8x128x64xf32, #tpu.memory_space<vmem>>, vector<8x128x64xf32>
    "tpu.trace_start"() <{level = 10 : i32, message = "hnd,hde->hne"}> : () -> ()
    %cst = arith.constant dense<0.000000e+00> : vector<8x8x64xf32>
    %11 = tpu.matmul %7, %10, %cst {dimension_numbers = #tpu.dot_dimension_numbers<[2], [1], [1], [2], [0, 0, 0, 1, 1, 2], [0], [0]>} : vector<8x8x128xf32>, vector<8x128x64xf32>, vector<8x8x64xf32> -> vector<8x8x64xf32>
    "tpu.trace_stop"() : () -> ()
    %c0_11 = arith.constant 0 : index
    %c0_12 = arith.constant 0 : index
    %c0_13 = arith.constant 0 : index
    %12 = vector.load %arg5[%c0_11, %c0_12, %c0_13] : memref<8x128x64xf32, #tpu.memory_space<vmem>>, vector<8x128x64xf32>
    "tpu.trace_start"() <{level = 10 : i32, message = "hmd,hde->hme"}> : () -> ()
    %cst_14 = arith.constant dense<0.000000e+00> : vector<8x16x64xf32>
    %13 = tpu.matmul %9, %12, %cst_14 {dimension_numbers = #tpu.dot_dimension_numbers<[2], [1], [1], [2], [0, 0, 0, 1, 1, 2], [0], [0]>} : vector<8x16x128xf32>, vector<8x128x64xf32>, vector<8x16x64xf32> -> vector<8x16x64xf32>
    "tpu.trace_stop"() : () -> ()
    %c0_15 = arith.constant 0 : index
    %c0_16 = arith.constant 0 : index
    %c0_17 = arith.constant 0 : index
    %14 = vector.load %arg6[%c0_15, %c0_16, %c0_17] : memref<8x128x64xf32, #tpu.memory_space<vmem>>, vector<8x128x64xf32>
    "tpu.trace_start"() <{level = 10 : i32, message = "hmd,hde->hme"}> : () -> ()
    %cst_18 = arith.constant dense<0.000000e+00> : vector<8x16x64xf32>
    %15 = tpu.matmul %9, %14, %cst_18 {dimension_numbers = #tpu.dot_dimension_numbers<[2], [1], [1], [2], [0, 0, 0, 1, 1, 2], [0], [0]>} : vector<8x16x128xf32>, vector<8x128x64xf32>, vector<8x16x64xf32> -> vector<8x16x64xf32>
    "tpu.trace_stop"() : () -> ()
    "tpu.trace_start"() <{level = 10 : i32, message = "hne,hme->hnm"}> : () -> ()
    %cst_19 = arith.constant dense<0.000000e+00> : vector<8x8x16xf32>
    %16 = tpu.matmul %11, %13, %cst_19 {dimension_numbers = #tpu.dot_dimension_numbers<[2], [2], [1], [1], [0, 0, 0, 1, 1, 1], [0], [0]>} : vector<8x8x64xf32>, vector<8x16x64xf32>, vector<8x8x16xf32> -> vector<8x8x16xf32>
    "tpu.trace_stop"() : () -> ()
    %cst_20 = arith.constant 1.250000e-01 : f32
    %17 = vector.broadcast %cst_20 : f32 to vector<8x8x16xf32>
    %18 = arith.mulf %16, %17 : vector<8x8x16xf32>
    %19 = vector.shape_cast %5 : vector<1x16xf32> to vector<1x1x16xf32>
    %cst_21 = arith.constant 0.000000e+00 : f32
    %20 = vector.broadcast %cst_21 : f32 to vector<1x1x16xf32>
    %21 = arith.cmpf ogt, %19, %20 : vector<1x1x16xf32>
    %cst_22 = arith.constant -3.40282347E+38 : f32
    %22 = vector.shape_cast %21 : vector<1x1x16xi1> to vector<1x1x16xi1>
    %23 = vector.broadcast %22 : vector<1x1x16xi1> to vector<8x8x16xi1>
    %24 = vector.broadcast %cst_22 : f32 to vector<8x8x16xf32>
    %25 = arith.select %23, %18, %24 : vector<8x8x16xi1>, vector<8x8x16xf32>
    %cst_23 = arith.constant dense<0xFF800000> : vector<8x8xf32>
    %26 = vector.multi_reduction <maximumf>, %25, %cst_23 [2] : vector<8x8x16xf32> to vector<8x8xf32>
    %27 = vector.shape_cast %26 : vector<8x8xf32> to vector<8x8x1xf32>
    %28 = vector.broadcast %27 : vector<8x8x1xf32> to vector<8x8x16xf32>
    %29 = arith.subf %25, %28 : vector<8x8x16xf32>
    %30 = math.exp %29 : vector<8x8x16xf32>
    %cst_24 = arith.constant dense<0.000000e+00> : vector<8x8xf32>
    %31 = vector.multi_reduction <add>, %30, %cst_24 [2] : vector<8x8x16xf32> to vector<8x8xf32>
    %32 = vector.shape_cast %31 : vector<8x8xf32> to vector<8x8x1xf32>
    %33 = tpu.reciprocal %32 {approx = true} : vector<8x8x1xf32> -> vector<8x8x1xf32>
    %34 = vector.broadcast %33 : vector<8x8x1xf32> to vector<8x8x16xf32>
    %35 = arith.mulf %30, %34 : vector<8x8x16xf32>
    "tpu.trace_start"() <{level = 10 : i32, message = "hnm,hme->hne"}> : () -> ()
    %cst_25 = arith.constant dense<0.000000e+00> : vector<8x8x64xf32>
    %36 = tpu.matmul %35, %15, %cst_25 {dimension_numbers = #tpu.dot_dimension_numbers<[2], [1], [1], [2], [0, 0, 0, 1, 1, 2], [0], [0]>} : vector<8x8x16xf32>, vector<8x16x64xf32>, vector<8x8x64xf32> -> vector<8x8x64xf32>
    "tpu.trace_stop"() : () -> ()
    %c0_26 = arith.constant 0 : index
    %c0_27 = arith.constant 0 : index
    %c0_28 = arith.constant 0 : index
    %37 = vector.load %arg7[%c0_26, %c0_27, %c0_28] : memref<8x64x128xf32, #tpu.memory_space<vmem>>, vector<8x64x128xf32>
    "tpu.trace_start"() <{level = 10 : i32, message = "hne,heq->hnq"}> : () -> ()
    %cst_29 = arith.constant dense<0.000000e+00> : vector<8x8x128xf32>
    %38 = tpu.matmul %36, %37, %cst_29 {dimension_numbers = #tpu.dot_dimension_numbers<[2], [1], [1], [2], [0, 0, 0, 1, 1, 2], [0], [0]>} : vector<8x8x64xf32>, vector<8x64x128xf32>, vector<8x8x128xf32> -> vector<8x8x128xf32>
    "tpu.trace_stop"() : () -> ()
    %cst_30 = arith.constant dense<0.000000e+00> : vector<8x128xf32>
    %39 = vector.multi_reduction <add>, %38, %cst_30 [0] : vector<8x8x128xf32> to vector<8x128xf32>
    %c0_31 = arith.constant 0 : index
    %c0_32 = arith.constant 0 : index
    %40 = vector.load %arg8[%c0_31, %c0_32] : memref<1x128xf32, #tpu.memory_space<vmem>>, vector<1x128xf32>
    %41 = vector.broadcast %40 : vector<1x128xf32> to vector<8x128xf32>
    %42 = arith.addf %39, %41 : vector<8x128xf32>
    %c0_33 = arith.constant 0 : index
    %c0_34 = arith.constant 0 : index
    %c0_35 = arith.constant 0 : index
    %43 = vector.load %arg9[%c0_33, %c0_34, %c0_35] : memref<1x8x128xf32, #tpu.memory_space<vmem>>, vector<1x8x128xf32>
    %44 = vector.shape_cast %43 : vector<1x8x128xf32> to vector<8x128xf32>
    %45 = vector.shape_cast %42 : vector<8x128xf32> to vector<1x8x128xf32>
    tpu.vector_store %arg9[%c0_33, %c0_34, %c0_35], %45 {strides = array<i32>} : memref<1x8x128xf32, #tpu.memory_space<vmem>>, vector<1x8x128xf32>,
    return
  }
  func.func @transform_0(%arg0: i32) -> (i32, i32, i32) {
    %c0_i32 = arith.constant 0 : i32
    %c0_i32_0 = arith.constant 0 : i32
    %c0_i32_1 = arith.constant 0 : i32
    return %arg0, %c0_i32, %c0_i32_0 : i32, i32, i32
  }
  func.func @transform_1(%arg0: i32) -> (i32, i32, i32) {
    %c0_i32 = arith.constant 0 : i32
    %c0_i32_0 = arith.constant 0 : i32
    %c0_i32_1 = arith.constant 0 : i32
    return %arg0, %c0_i32, %c0_i32_0 : i32, i32, i32
  }
  func.func @transform_2(%arg0: i32) -> (i32, i32, i32) {
    %c0_i32 = arith.constant 0 : i32
    %c0_i32_0 = arith.constant 0 : i32
    %c0_i32_1 = arith.constant 0 : i32
    return %arg0, %c0_i32, %c0_i32_0 : i32, i32, i32
  }
  func.func @transform_3(%arg0: i32) -> (i32, i32, i32) {
    %c0_i32 = arith.constant 0 : i32
    %c0_i32_0 = arith.constant 0 : i32
    %c0_i32_1 = arith.constant 0 : i32
    %c0_i32_2 = arith.constant 0 : i32
    return %c0_i32, %c0_i32_0, %c0_i32_1 : i32, i32, i32
  }
  func.func @transform_4(%arg0: i32) -> (i32, i32, i32) {
    %c0_i32 = arith.constant 0 : i32
    %c0_i32_0 = arith.constant 0 : i32
    %c0_i32_1 = arith.constant 0 : i32
    %c0_i32_2 = arith.constant 0 : i32
    return %c0_i32, %c0_i32_0, %c0_i32_1 : i32, i32, i32
  }
  func.func @transform_5(%arg0: i32) -> (i32, i32, i32) {
    %c0_i32 = arith.constant 0 : i32
    %c0_i32_0 = arith.constant 0 : i32
    %c0_i32_1 = arith.constant 0 : i32
    %c0_i32_2 = arith.constant 0 : i32
    return %c0_i32, %c0_i32_0, %c0_i32_1 : i32, i32, i32
  }
  func.func @transform_6(%arg0: i32) -> (i32, i32, i32) {
    %c0_i32 = arith.constant 0 : i32
    %c0_i32_0 = arith.constant 0 : i32
    %c0_i32_1 = arith.constant 0 : i32
    %c0_i32_2 = arith.constant 0 : i32
    return %c0_i32, %c0_i32_0, %c0_i32_1 : i32, i32, i32
  }
  func.func @transform_7(%arg0: i32) -> (i32, i32) {
    %c0_i32 = arith.constant 0 : i32
    %c0_i32_0 = arith.constant 0 : i32
    %c0_i32_1 = arith.constant 0 : i32
    return %c0_i32, %c0_i32_0 : i32, i32
  }
  func.func @transform_8(%arg0: i32) -> (i32, i32, i32) {
    %c0_i32 = arith.constant 0 : i32
    %c0_i32_0 = arith.constant 0 : i32
    %c0_i32_1 = arith.constant 0 : i32
    return %arg0, %c0_i32, %c0_i32_0 : i32, i32, i32
  }
}

</mosaic_0001>

<llo_original>
// kernel: tpu_custom_call.1
$region0: #{tpu_custom_call.1}
  #allocation0 [shape = 'u32[]', space=smem, size = 0x4, offset = 0x4, fixed_abs, tag = 'smem constant byte address 0x4 - core index']
  #allocation1 [shape = 'u32[144,128]{1,0:T(1,128)}', space=vmem, size = 0x12000, scoped, tag = 'internal scratch']
  %s0 = inlined_call_operand.vmem [shape: f32[2,8,128], index: 0, kind: input, shape index: {}]
  %s1 = inlined_call_operand.vmem [shape: f32[2,16,128], index: 1, kind: input, shape index: {}]
  %s2 = inlined_call_operand.vmem [shape: f32[2,1,16], index: 2, kind: input, shape index: {}]
  %s3 = inlined_call_operand.vmem [shape: f32[8,128,64], index: 3, kind: input, shape index: {}]
  %s4 = inlined_call_operand.vmem [shape: f32[8,128,64], index: 4, kind: input, shape index: {}]
  %s5 = inlined_call_operand.vmem [shape: f32[8,128,64], index: 5, kind: input, shape index: {}]
  %s6 = inlined_call_operand.vmem [shape: f32[8,64,128], index: 6, kind: input, shape index: {}]
  %s7 = inlined_call_operand.vmem [shape: f32[1,128], index: 7, kind: input, shape index: {}]
  %s8 = inlined_call_operand.hbm [shape: f32[2,8,128], index: 8, kind: output, shape index: {}]
  %s9 = sld [smem:[#allocation0]]
  $region65: #{tpu_custom_call.1} parent=0
    _
  %s11 = ssub.s32 1, %s9
  %s12 = scalar_select 0, %s11, %s9
  $region1: #{tpu_custom_call.1} parent=0
    #allocation2 [shape = 'u8[8192]{0}', space=vmem, size = 0x2000, scoped, tag = 'output window, operand 0']
    #allocation3 [shape = 's32[2]{0}', space=sflag, size = 0x8, scoped, tag = 'scoped memory for tpu_custom_call.1']
    %13 = vsyncpa [#allocation3], 0
    %s14 = scalar_lea.sflag [#allocation3], 1
    %15 = vsyncpa %s14, 0
    loop: start=0, step=1, limit=4
    $region2: #{tpu_custom_call.1} parent=1 // loop_pre_header
      _
    $region3: #{tpu_custom_call.1} parent=1 // loop_header
      %s17 = sphi 0, %s21
      %p18 = scmp.ge.s32.totalorder %s17, 4
      %s27 = sphi 0, %s29
      %s30 = sphi 0, %s27
      %s31 = sphi 0, %s30
      %s47 = sphi 0, %s31
      %s53 = sphi 0, %s55
      %s56 = sphi 0, %s53
      %s57 = sphi 0, %s56
      %s73 = sphi 0, %s57
      %s79 = sphi 0, %s81
      %s82 = sphi 0, %s79
      %s83 = sphi 0, %s82
      %s99 = sphi 0, %s83
      %s103 = sphi 0, %s103
      %s105 = sphi 0, %s103
      %s106 = sphi 0, %s105
      %s120 = sphi 0, %s106
      %s124 = sphi 0, %s124
      %s126 = sphi 0, %s124
      %s127 = sphi 0, %s126
      %s141 = sphi 0, %s127
      %s145 = sphi 0, %s145
      %s147 = sphi 0, %s145
      %s148 = sphi 0, %s147
      %s162 = sphi 0, %s148
      %s166 = sphi 0, %s166
      %s168 = sphi 0, %s166
      %s169 = sphi 0, %s168
      %s183 = sphi 0, %s169
      %s187 = sphi 0, %s187
      %s189 = sphi 0, %s187
      %s190 = sphi 0, %s189
      %s204 = sphi 0, %s190
      %s210 = sphi 0, %s212
      %s213 = sphi 0, %s210
      %s214 = sphi 0, %s213
      %s230 = sphi 0, %s214
    $region4: #{tpu_custom_call.1} parent=1 // loop_header_branch
      %20 = sbr.rel (%p18) target = $region8
    $region5: #{tpu_custom_call.1} parent=1 // loop_body
      %s22 = ssub.s32 %s17, 1
      %s23 = ssub.s32 %s17, 2
      %s24 = sadd.s32 %s17, 1
      %s25 = ssub.s32 %s17, %s24
      %p26 = scmp.eq.s32.totalorder %s25, 0
      %s28 = sadd.s32 %s27, 1
      %s29 = scalar_select %p26, %s27, %s28
      %p32 = pneg %p26
      %p33 = scmp.eq.s32.totalorder %s17, 1
      %p34 = por %p32, %p33
      %p35 = scmp.ne.s32.totalorder %s27, %s30
      %p36 = scmp.eq.s32.totalorder %s17, 0
      %p37 = por %p35, %p36
      %p38 = scmp.ne.s32.totalorder %s27, %s30
      %p39 = scmp.eq.s32.totalorder %s22, 1
      %p40 = por %p38, %p39
      %p41 = scmp.ne.s32.totalorder %s30, %s31
      %p42 = scmp.eq.s32.totalorder %s22, 0
      %p43 = por %p41, %p42
      %p44 = scmp.ne.s32.totalorder %s30, %s31
      %p45 = scmp.eq.s32.totalorder %s23, 1
      %p46 = por %p44, %p45
      %p48 = scmp.ne.s32.totalorder %s31, %s47
      %p49 = scmp.eq.s32.totalorder %s23, 0
      %p50 = por %p48, %p49
      %s51 = ssub.s32 %s17, %s24
      %p52 = scmp.eq.s32.totalorder %s51, 0
      %s54 = sadd.s32 %s53, 1
      %s55 = scalar_select %p52, %s53, %s54
      %p58 = pneg %p52
      %p59 = scmp.eq.s32.totalorder %s17, 1
      %p60 = por %p58, %p59
      %p61 = scmp.ne.s32.totalorder %s53, %s56
      %p62 = scmp.eq.s32.totalorder %s17, 0
      %p63 = por %p61, %p62
      %p64 = scmp.ne.s32.totalorder %s53, %s56
      %p65 = scmp.eq.s32.totalorder %s22, 1
      %p66 = por %p64, %p65
      %p67 = scmp.ne.s32.totalorder %s56, %s57
      %p68 = scmp.eq.s32.totalorder %s22, 0
      %p69 = por %p67, %p68
      %p70 = scmp.ne.s32.totalorder %s56, %s57
      %p71 = scmp.eq.s32.totalorder %s23, 1
      %p72 = por %p70, %p71
      %p74 = scmp.ne.s32.totalorder %s57, %s73
      %p75 = scmp.eq.s32.totalorder %s23, 0
      %p76 = por %p74, %p75
      %s77 = ssub.s32 %s17, %s24
      %p78 = scmp.eq.s32.totalorder %s77, 0
      %s80 = sadd.s32 %s79, 1
      %s81 = scalar_select %p78, %s79, %s80
      %p84 = pneg %p78
      %p85 = scmp.eq.s32.totalorder %s17, 1
      %p86 = por %p84, %p85
      %p87 = scmp.ne.s32.totalorder %s79, %s82
      %p88 = scmp.eq.s32.totalorder %s17, 0
      %p89 = por %p87, %p88
      %p90 = scmp.ne.s32.totalorder %s79, %s82
      %p91 = scmp.eq.s32.totalorder %s22, 1
      %p92 = por %p90, %p91
      %p93 = scmp.ne.s32.totalorder %s82, %s83
      %p94 = scmp.eq.s32.totalorder %s22, 0
      %p95 = por %p93, %p94
      %p96 = scmp.ne.s32.totalorder %s82, %s83
      %p97 = scmp.eq.s32.totalorder %s23, 1
      %p98 = por %p96, %p97
      %p100 = scmp.ne.s32.totalorder %s83, %s99
      %p101 = scmp.eq.s32.totalorder %s23, 0
      %p102 = por %p100, %p101
      %s104 = sadd.s32 %s103, 1
      %p107 = scmp.eq.s32.totalorder %s17, 1
      %p108 = scmp.ne.s32.totalorder %s103, %s105
      %p109 = scmp.eq.s32.totalorder %s17, 0
      %p110 = por %p108, %p109
      %p111 = scmp.ne.s32.totalorder %s103, %s105
      %p112 = scmp.eq.s32.totalorder %s22, 1
      %p113 = por %p111, %p112
      %p114 = scmp.ne.s32.totalorder %s105, %s106
      %p115 = scmp.eq.s32.totalorder %s22, 0
      %p116 = por %p114, %p115
      %p117 = scmp.ne.s32.totalorder %s105, %s106
      %p118 = scmp.eq.s32.totalorder %s23, 1
      %p119 = por %p117, %p118
      %p121 = scmp.ne.s32.totalorder %s106, %s120
      %p122 = scmp.eq.s32.totalorder %s23, 0
      %p123 = por %p121, %p122
      %s125 = sadd.s32 %s124, 1
      %p128 = scmp.eq.s32.totalorder %s17, 1
      %p129 = scmp.ne.s32.totalorder %s124, %s126
      %p130 = scmp.eq.s32.totalorder %s17, 0
      %p131 = por %p129, %p130
      %p132 = scmp.ne.s32.totalorder %s124, %s126
      %p133 = scmp.eq.s32.totalorder %s22, 1
      %p134 = por %p132, %p133
      %p135 = scmp.ne.s32.totalorder %s126, %s127
      %p136 = scmp.eq.s32.totalorder %s22, 0
      %p137 = por %p135, %p136
      %p138 = scmp.ne.s32.totalorder %s126, %s127
      %p139 = scmp.eq.s32.totalorder %s23, 1
      %p140 = por %p138, %p139
      %p142 = scmp.ne.s32.totalorder %s127, %s141
      %p143 = scmp.eq.s32.totalorder %s23, 0
      %p144 = por %p142, %p143
      %s146 = sadd.s32 %s145, 1
      %p149 = scmp.eq.s32.totalorder %s17, 1
      %p150 = scmp.ne.s32.totalorder %s145, %s147
      %p151 = scmp.eq.s32.totalorder %s17, 0
      %p152 = por %p150, %p151
      %p153 = scmp.ne.s32.totalorder %s145, %s147
      %p154 = scmp.eq.s32.totalorder %s22, 1
      %p155 = por %p153, %p154
      %p156 = scmp.ne.s32.totalorder %s147, %s148
      %p157 = scmp.eq.s32.totalorder %s22, 0
      %p158 = por %p156, %p157
      %p159 = scmp.ne.s32.totalorder %s147, %s148
      %p160 = scmp.eq.s32.totalorder %s23, 1
      %p161 = por %p159, %p160
      %p163 = scmp.ne.s32.totalorder %s148, %s162
      %p164 = scmp.eq.s32.totalorder %s23, 0
      %p165 = por %p163, %p164
      %s167 = sadd.s32 %s166, 1
      %p170 = scmp.eq.s32.totalorder %s17, 1
      %p171 = scmp.ne.s32.totalorder %s166, %s168
      %p172 = scmp.eq.s32.totalorder %s17, 0
      %p173 = por %p171, %p172
      %p174 = scmp.ne.s32.totalorder %s166, %s168
      %p175 = scmp.eq.s32.totalorder %s22, 1
      %p176 = por %p174, %p175
      %p177 = scmp.ne.s32.totalorder %s168, %s169
      %p178 = scmp.eq.s32.totalorder %s22, 0
      %p179 = por %p177, %p178
      %p180 = scmp.ne.s32.totalorder %s168, %s169
      %p181 = scmp.eq.s32.totalorder %s23, 1
      %p182 = por %p180, %p181
      %p184 = scmp.ne.s32.totalorder %s169, %s183
      %p185 = scmp.eq.s32.totalorder %s23, 0
      %p186 = por %p184, %p185
      %s188 = sadd.s32 %s187, 1
      %p191 = scmp.eq.s32.totalorder %s17, 1
      %p192 = scmp.ne.s32.totalorder %s187, %s189
      %p193 = scmp.eq.s32.totalorder %s17, 0
      %p194 = por %p192, %p193
      %p195 = scmp.ne.s32.totalorder %s187, %s189
      %p196 = scmp.eq.s32.totalorder %s22, 1
      %p197 = por %p195, %p196
      %p198 = scmp.ne.s32.totalorder %s189, %s190
      %p199 = scmp.eq.s32.totalorder %s22, 0
      %p200 = por %p198, %p199
      %p201 = scmp.ne.s32.totalorder %s189, %s190
      %p202 = scmp.eq.s32.totalorder %s23, 1
      %p203 = por %p201, %p202
      %p205 = scmp.ne.s32.totalorder %s190, %s204
      %p206 = scmp.eq.s32.totalorder %s23, 0
      %p207 = por %p205, %p206
      %s208 = ssub.s32 %s17, %s24
      %p209 = scmp.eq.s32.totalorder %s208, 0
      %s211 = sadd.s32 %s210, 1
      %s212 = scalar_select %p209, %s210, %s211
      %p215 = pneg %p209
      %p216 = scmp.eq.s32.totalorder %s17, 1
      %p217 = por %p215, %p216
      %p218 = scmp.ne.s32.totalorder %s210, %s213
      %p219 = scmp.eq.s32.totalorder %s17, 0
      %p220 = por %p218, %p219
      %p221 = scmp.ne.s32.totalorder %s210, %s213
      %p222 = scmp.eq.s32.totalorder %s22, 1
      %p223 = por %p221, %p222
      %p224 = scmp.ne.s32.totalorder %s213, %s214
      %p225 = scmp.eq.s32.totalorder %s22, 0
      %p226 = por %p224, %p225
      %p227 = scmp.ne.s32.totalorder %s213, %s214
      %p228 = scmp.eq.s32.totalorder %s23, 1
      %p229 = por %p227, %p228
      %p231 = scmp.ne.s32.totalorder %s214, %s230
      %p232 = scmp.eq.s32.totalorder %s23, 0
      %p233 = por %p231, %p232
      %p234 = scmp.le.s32.totalorder 1, %s17
      %p235 = scmp.lt.s32.totalorder %s17, 3
      %p236 = pnand %p234, %p235
      %p237 = pneg %p236
      // Predicated region
      $region9: #{tpu_custom_call.1} parent=5 // pred_check
        _
      $region10: #{tpu_custom_call.1} parent=5 // pred_check_branch
        %239 = sbr.rel (%p236) target = $region12
      $region11: #{tpu_custom_call.1} parent=5 // pred_region
        %s240 = ssub.s32 %s17, 1
        // Predicated region
        $region13: #{tpu_custom_call.1} parent=11 // pred_check
          %p241 = pneg %p116
        $region14: #{tpu_custom_call.1} parent=11 // pred_check_branch
          %243 = sbr.rel (%p241) target = $region16
        $region15: #{tpu_custom_call.1} parent=11 // pred_region
          _
        $region16: #{tpu_custom_call.1} parent=11 // pred_fallthru
          _
        // Predicated region
        $region17: #{tpu_custom_call.1} parent=11 // pred_check
          %p244 = pneg %p137
        $region18: #{tpu_custom_call.1} parent=11 // pred_check_branch
          %246 = sbr.rel (%p244) target = $region20
        $region19: #{tpu_custom_call.1} parent=11 // pred_region
          _
        $region20: #{tpu_custom_call.1} parent=11 // pred_fallthru
          _
        // Predicated region
        $region21: #{tpu_custom_call.1} parent=11 // pred_check
          %p247 = pneg %p158
        $region22: #{tpu_custom_call.1} parent=11 // pred_check_branch
          %249 = sbr.rel (%p247) target = $region24
        $region23: #{tpu_custom_call.1} parent=11 // pred_region
          _
        $region24: #{tpu_custom_call.1} parent=11 // pred_fallthru
          _
        // Predicated region
        $region25: #{tpu_custom_call.1} parent=11 // pred_check
          %p250 = pneg %p179
        $region26: #{tpu_custom_call.1} parent=11 // pred_check_branch
          %252 = sbr.rel (%p250) target = $region28
        $region27: #{tpu_custom_call.1} parent=11 // pred_region
          _
        $region28: #{tpu_custom_call.1} parent=11 // pred_fallthru
          _
        // Predicated region
        $region29: #{tpu_custom_call.1} parent=11 // pred_check
          %p253 = pneg %p200
        $region30: #{tpu_custom_call.1} parent=11 // pred_check_branch
          %255 = sbr.rel (%p253) target = $region32
        $region31: #{tpu_custom_call.1} parent=11 // pred_region
          _
        $region32: #{tpu_custom_call.1} parent=11 // pred_fallthru
          _
      $region12: #{tpu_custom_call.1} parent=5 // pred_fallthru
        _
      %p256 = scmp.lt.s32.totalorder %s17, 2
      // Predicated region
      $region33: #{tpu_custom_call.1} parent=5 // pred_check
        %p257 = pneg %p256
      $region34: #{tpu_custom_call.1} parent=5 // pred_check_branch
        %259 = sbr.rel (%p257) target = $region36
      $region35: #{tpu_custom_call.1} parent=5 // pred_region
        // Predicated region
        $region37: #{tpu_custom_call.1} parent=35 // pred_check
          %p260 = pneg %p37
        $region38: #{tpu_custom_call.1} parent=35 // pred_check_branch
          %262 = sbr.rel (%p260) target = $region40
        $region39: #{tpu_custom_call.1} parent=35 // pred_region
          %p263 = scmp.lt.s32.totalorder %s17, 1
          %s264 = scalar_select %p263, %s17, 1
          %s265 = smul.addr %s264, 8
          %s266 = scalar_lea.vmem %s0, %s265
        $region40: #{tpu_custom_call.1} parent=35 // pred_fallthru
          _
        // Predicated region
        $region41: #{tpu_custom_call.1} parent=35 // pred_check
          %p267 = pneg %p63
        $region42: #{tpu_custom_call.1} parent=35 // pred_check_branch
          %269 = sbr.rel (%p267) target = $region44
        $region43: #{tpu_custom_call.1} parent=35 // pred_region
          %p270 = scmp.lt.s32.totalorder %s17, 1
          %s271 = scalar_select %p270, %s17, 1
          %s272 = smul.addr %s271, 2
          %s273 = smul.addr %s272, 8
          %s274 = scalar_lea.vmem %s1, %s273
        $region44: #{tpu_custom_call.1} parent=35 // pred_fallthru
          _
        // Predicated region
        $region45: #{tpu_custom_call.1} parent=35 // pred_check
          %p275 = pneg %p89
        $region46: #{tpu_custom_call.1} parent=35 // pred_check_branch
          %277 = sbr.rel (%p275) target = $region48
        $region47: #{tpu_custom_call.1} parent=35 // pred_region
          %p278 = scmp.lt.s32.totalorder %s17, 1
          %s279 = scalar_select %p278, %s17, 1
          %s280 = scalar_lea.vmem %s2, %s279
        $region48: #{tpu_custom_call.1} parent=35 // pred_fallthru
          _
      $region36: #{tpu_custom_call.1} parent=5 // pred_fallthru
        _
      %p281 = scmp.le.s32.totalorder 1, %s17
      %p282 = scmp.lt.s32.totalorder %s17, 3
      %p283 = pnand %p281, %p282
      %p284 = pneg %p283
      // Predicated region
      $region49: #{tpu_custom_call.1} parent=5 // pred_check
        _
      $region50: #{tpu_custom_call.1} parent=5 // pred_check_branch
        %286 = sbr.rel (%p283) target = $region52
      $region51: #{tpu_custom_call.1} parent=5 // pred_region
        %s287 = ssub.s32 %s17, 1
        %p288 = scmp.lt.s32.totalorder %s22, 1
        %s289 = scalar_select %p288, %s22, 1
        %s290 = smul.addr %s289, 8
        %s291 = scalar_lea.vmem %s0, %s290
        %p292 = pneg %p43
        %p293 = pneg %p40
        %p294 = scmp.lt.s32.totalorder %s22, 1
        %s295 = scalar_select %p294, %s22, 1
        %s296 = smul.addr %s295, 2
        %s297 = smul.addr %s296, 8
        %s298 = scalar_lea.vmem %s1, %s297
        %p299 = pneg %p69
        %p300 = pneg %p66
        %p301 = scmp.lt.s32.totalorder %s22, 1
        %s302 = scalar_select %p301, %s22, 1
        %s303 = scalar_lea.vmem %s2, %s302
        %p304 = pneg %p95
        %p305 = pneg %p92
        %p306 = pneg %p116
        %p307 = pneg %p113
        %p308 = pneg %p137
        %p309 = pneg %p134
        %p310 = pneg %p158
        %p311 = pneg %p155
        %p312 = pneg %p179
        %p313 = pneg %p176
        %p314 = pneg %p200
        %p315 = pneg %p197
        %p316 = pneg %p226
        %p317 = pneg %p223
        %s318 = sand.u32 %s213, 1
        %s319 = scalar_lea.sflag [#allocation3], %s318
        %s320 = sand.u32 %s213, 1
        %s321 = smul.addr %s320, 8
        %s322 = scalar_lea.vmem [#allocation2], %s321
        %p323 = scmp.lt.s32.totalorder %s22, 1
        %s324 = scalar_select %p323, %s22, 1
        %s325 = smul.addr %s324, 8
        %s326 = scalar_lea.vmem %s0, %s325
        %p327 = scmp.lt.s32.totalorder %s22, 1
        %s328 = scalar_select %p327, %s22, 1
        %s329 = smul.addr %s328, 2
        %s330 = smul.addr %s329, 8
        %s331 = scalar_lea.vmem %s1, %s330
        %p332 = scmp.lt.s32.totalorder %s22, 1
        %s333 = scalar_select %p332, %s22, 1
        %s334 = scalar_lea.vmem %s2, %s333
        %v335 = vld [vmem:[%s326] sm:$0xff]
        %v336 = vld [vmem:[%s331] sm:$0xff]
        %v337 = vld [vmem:[%s331 + $0x8] sm:$0xff]
        %v338 = vld [vmem:[%s334] sm:$0x1]
        %v339 = vld [vmem:[%s3] sm:$0xff]
        %v340 = vld [vmem:[%s3 + $0x8] sm:$0xff]
        %v341 = vld [vmem:[%s3 + $0x10] sm:$0xff]
        %v342 = vld [vmem:[%s3 + $0x18] sm:$0xff]
        %v343 = vld [vmem:[%s3 + $0x20] sm:$0xff]
        %v344 = vld [vmem:[%s3 + $0x28] sm:$0xff]
        %v345 = vld [vmem:[%s3 + $0x30] sm:$0xff]
        %v346 = vld [vmem:[%s3 + $0x38] sm:$0xff]
        %v347 = vld [vmem:[%s3 + $0x40] sm:$0xff]
        %v348 = vld [vmem:[%s3 + $0x48] sm:$0xff]
        %v349 = vld [vmem:[%s3 + $0x50] sm:$0xff]
        %v350 = vld [vmem:[%s3 + $0x58] sm:$0xff]
        %v351 = vld [vmem:[%s3 + $0x60] sm:$0xff]
        %v352 = vld [vmem:[%s3 + $0x68] sm:$0xff]
        %v353 = vld [vmem:[%s3 + $0x70] sm:$0xff]
        %v354 = vld [vmem:[%s3 + $0x78] sm:$0xff]
        %v355 = vld [vmem:[%s3 + $0x80] sm:$0xff]
        %v356 = vld [vmem:[%s3 + $0x88] sm:$0xff]
        %v357 = vld [vmem:[%s3 + $0x90] sm:$0xff]
        %v358 = vld [vmem:[%s3 + $0x98] sm:$0xff]
        %v359 = vld [vmem:[%s3 + $0xa0] sm:$0xff]
        %v360 = vld [vmem:[%s3 + $0xa8] sm:$0xff]
        %v361 = vld [vmem:[%s3 + $0xb0] sm:$0xff]
        %v362 = vld [vmem:[%s3 + $0xb8] sm:$0xff]
        %v363 = vld [vmem:[%s3 + $0xc0] sm:$0xff]
        %v364 = vld [vmem:[%s3 + $0xc8] sm:$0xff]
        %v365 = vld [vmem:[%s3 + $0xd0] sm:$0xff]
        %v366 = vld [vmem:[%s3 + $0xd8] sm:$0xff]
        %v367 = vld [vmem:[%s3 + $0xe0] sm:$0xff]
        %v368 = vld [vmem:[%s3 + $0xe8] sm:$0xff]
        %v369 = vld [vmem:[%s3 + $0xf0] sm:$0xff]
        %v370 = vld [vmem:[%s3 + $0xf8] sm:$0xff]
        %v371 = vld [vmem:[%s3 + $0x100] sm:$0xff]
        %v372 = vld [vmem:[%s3 + $0x108] sm:$0xff]
        %v373 = vld [vmem:[%s3 + $0x110] sm:$0xff]
        %v374 = vld [vmem:[%s3 + $0x118] sm:$0xff]
        %v375 = vld [vmem:[%s3 + $0x120] sm:$0xff]
        %v376 = vld [vmem:[%s3 + $0x128] sm:$0xff]
        %v377 = vld [vmem:[%s3 + $0x130] sm:$0xff]
        %v378 = vld [vmem:[%s3 + $0x138] sm:$0xff]
        %v379 = vld [vmem:[%s3 + $0x140] sm:$0xff]
        %v380 = vld [vmem:[%s3 + $0x148] sm:$0xff]
        %v381 = vld [vmem:[%s3 + $0x150] sm:$0xff]
        %v382 = vld [vmem:[%s3 + $0x158] sm:$0xff]
        %v383 = vld [vmem:[%s3 + $0x160] sm:$0xff]
        %v384 = vld [vmem:[%s3 + $0x168] sm:$0xff]
        %v385 = vld [vmem:[%s3 + $0x170] sm:$0xff]
        %v386 = vld [vmem:[%s3 + $0x178] sm:$0xff]
        %v387 = vld [vmem:[%s3 + $0x180] sm:$0xff]
        %v388 = vld [vmem:[%s3 + $0x188] sm:$0xff]
        %v389 = vld [vmem:[%s3 + $0x190] sm:$0xff]
        %v390 = vld [vmem:[%s3 + $0x198] sm:$0xff]
        %v391 = vld [vmem:[%s3 + $0x1a0] sm:$0xff]
        %v392 = vld [vmem:[%s3 + $0x1a8] sm:$0xff]
        %v393 = vld [vmem:[%s3 + $0x1b0] sm:$0xff]
        %v394 = vld [vmem:[%s3 + $0x1b8] sm:$0xff]
        %v395 = vld [vmem:[%s3 + $0x1c0] sm:$0xff]
        %v396 = vld [vmem:[%s3 + $0x1c8] sm:$0xff]
        %v397 = vld [vmem:[%s3 + $0x1d0] sm:$0xff]
        %v398 = vld [vmem:[%s3 + $0x1d8] sm:$0xff]
        %v399 = vld [vmem:[%s3 + $0x1e0] sm:$0xff]
        %v400 = vld [vmem:[%s3 + $0x1e8] sm:$0xff]
        %v401 = vld [vmem:[%s3 + $0x1f0] sm:$0xff]
        %v402 = vld [vmem:[%s3 + $0x1f8] sm:$0xff]
        %v403 = vld [vmem:[%s3 + $0x200] sm:$0xff]
        %v404 = vld [vmem:[%s3 + $0x208] sm:$0xff]
        %v405 = vld [vmem:[%s3 + $0x210] sm:$0xff]
        %v406 = vld [vmem:[%s3 + $0x218] sm:$0xff]
        %v407 = vld [vmem:[%s3 + $0x220] sm:$0xff]
        %v408 = vld [vmem:[%s3 + $0x228] sm:$0xff]
        %v409 = vld [vmem:[%s3 + $0x230] sm:$0xff]
        %v410 = vld [vmem:[%s3 + $0x238] sm:$0xff]
        %v411 = vld [vmem:[%s3 + $0x240] sm:$0xff]
        %v412 = vld [vmem:[%s3 + $0x248] sm:$0xff]
        %v413 = vld [vmem:[%s3 + $0x250] sm:$0xff]
        %v414 = vld [vmem:[%s3 + $0x258] sm:$0xff]
        %v415 = vld [vmem:[%s3 + $0x260] sm:$0xff]
        %v416 = vld [vmem:[%s3 + $0x268] sm:$0xff]
        %v417 = vld [vmem:[%s3 + $0x270] sm:$0xff]
        %v418 = vld [vmem:[%s3 + $0x278] sm:$0xff]
        %v419 = vld [vmem:[%s3 + $0x280] sm:$0xff]
        %v420 = vld [vmem:[%s3 + $0x288] sm:$0xff]
        %v421 = vld [vmem:[%s3 + $0x290] sm:$0xff]
        %v422 = vld [vmem:[%s3 + $0x298] sm:$0xff]
        %v423 = vld [vmem:[%s3 + $0x2a0] sm:$0xff]
        %v424 = vld [vmem:[%s3 + $0x2a8] sm:$0xff]
        %v425 = vld [vmem:[%s3 + $0x2b0] sm:$0xff]
        %v426 = vld [vmem:[%s3 + $0x2b8] sm:$0xff]
        %v427 = vld [vmem:[%s3 + $0x2c0] sm:$0xff]
        %v428 = vld [vmem:[%s3 + $0x2c8] sm:$0xff]
        %v429 = vld [vmem:[%s3 + $0x2d0] sm:$0xff]
        %v430 = vld [vmem:[%s3 + $0x2d8] sm:$0xff]
        %v431 = vld [vmem:[%s3 + $0x2e0] sm:$0xff]
        %v432 = vld [vmem:[%s3 + $0x2e8] sm:$0xff]
        %v433 = vld [vmem:[%s3 + $0x2f0] sm:$0xff]
        %v434 = vld [vmem:[%s3 + $0x2f8] sm:$0xff]
        %v435 = vld [vmem:[%s3 + $0x300] sm:$0xff]
        %v436 = vld [vmem:[%s3 + $0x308] sm:$0xff]
        %v437 = vld [vmem:[%s3 + $0x310] sm:$0xff]
        %v438 = vld [vmem:[%s3 + $0x318] sm:$0xff]
        %v439 = vld [vmem:[%s3 + $0x320] sm:$0xff]
        %v440 = vld [vmem:[%s3 + $0x328] sm:$0xff]
        %v441 = vld [vmem:[%s3 + $0x330] sm:$0xff]
        %v442 = vld [vmem:[%s3 + $0x338] sm:$0xff]
        %v443 = vld [vmem:[%s3 + $0x340] sm:$0xff]
        %v444 = vld [vmem:[%s3 + $0x348] sm:$0xff]
        %v445 = vld [vmem:[%s3 + $0x350] sm:$0xff]
        %v446 = vld [vmem:[%s3 + $0x358] sm:$0xff]
        %v447 = vld [vmem:[%s3 + $0x360] sm:$0xff]
        %v448 = vld [vmem:[%s3 + $0x368] sm:$0xff]
        %v449 = vld [vmem:[%s3 + $0x370] sm:$0xff]
        %v450 = vld [vmem:[%s3 + $0x378] sm:$0xff]
        %v451 = vld [vmem:[%s3 + $0x380] sm:$0xff]
        %v452 = vld [vmem:[%s3 + $0x388] sm:$0xff]
        %v453 = vld [vmem:[%s3 + $0x390] sm:$0xff]
        %v454 = vld [vmem:[%s3 + $0x398] sm:$0xff]
        %v455 = vld [vmem:[%s3 + $0x3a0] sm:$0xff]
        %v456 = vld [vmem:[%s3 + $0x3a8] sm:$0xff]
        %v457 = vld [vmem:[%s3 + $0x3b0] sm:$0xff]
        %v458 = vld [vmem:[%s3 + $0x3b8] sm:$0xff]
        %v459 = vld [vmem:[%s3 + $0x3c0] sm:$0xff]
        %v460 = vld [vmem:[%s3 + $0x3c8] sm:$0xff]
        %v461 = vld [vmem:[%s3 + $0x3d0] sm:$0xff]
        %v462 = vld [vmem:[%s3 + $0x3d8] sm:$0xff]
        %v463 = vld [vmem:[%s3 + $0x3e0] sm:$0xff]
        %v464 = vld [vmem:[%s3 + $0x3e8] sm:$0xff]
        %v465 = vld [vmem:[%s3 + $0x3f0] sm:$0xff]
        %v466 = vld [vmem:[%s3 + $0x3f8] sm:$0xff]
        %467 = vmatprep.subr.mxu0 0.0
        %468 = vmatpush1.msra.mxu0 %v339
        %469 = vmatprep.subr.mxu0 0.0
        %470 = vmatpush1.msra.mxu0 %v340
        %471 = vmatprep.subr.mxu0 0.0
        %472 = vmatpush1.msra.mxu0 %v341
        %473 = vmatprep.subr.mxu0 0.0
        %474 = vmatpush1.msra.mxu0 %v342
        %475 = vmatprep.subr.mxu0 0.0
        %476 = vmatpush1.msra.mxu0 %v343
        %477 = vmatprep.subr.mxu0 0.0
        %478 = vmatpush1.msra.mxu0 %v344
        %479 = vmatprep.subr.mxu0 0.0
        %480 = vmatpush1.msra.mxu0 %v345
        %481 = vmatprep.subr.mxu0 0.0
        %482 = vmatpush1.msra.mxu0 %v346
        %483 = vmatprep.subr.mxu0 0.0
        %484 = vmatpush1.msra.mxu0 %v347
        %485 = vmatprep.subr.mxu0 0.0
        %486 = vmatpush1.msra.mxu0 %v348
        %487 = vmatprep.subr.mxu0 0.0
        %488 = vmatpush1.msra.mxu0 %v349
        %489 = vmatprep.subr.mxu0 0.0
        %490 = vmatpush1.msra.mxu0 %v350
        %491 = vmatprep.subr.mxu0 0.0
        %492 = vmatpush1.msra.mxu0 %v351
        %493 = vmatprep.subr.mxu0 0.0
        %494 = vmatpush1.msra.mxu0 %v352
        %495 = vmatprep.subr.mxu0 0.0
        %496 = vmatpush1.msra.mxu0 %v353
        %497 = vmatprep.subr.mxu0 0.0
        %498 = vmatpush1.msra.mxu0 %v354
        %499 = vmatprep.subr.mxu0 0.0
        %500 = vmatpush1.msra.mxu0 0.0
        %501 = vmatprep.subr.mxu0 0.0
        %502 = vmatpush1.msra.mxu0 0.0
        %503 = vmatprep.subr.mxu0 0.0
        %504 = vmatpush1.msra.mxu0 0.0
        %505 = vmatprep.subr.mxu0 0.0
        %506 = vmatpush1.msra.mxu0 0.0
        %507 = vmatprep.subr.mxu0 0.0
        %508 = vmatpush1.msra.mxu0 0.0
        %509 = vmatprep.subr.mxu0 0.0
        %510 = vmatpush1.msra.mxu0 0.0
        %511 = vmatprep.subr.mxu0 0.0
        %512 = vmatpush1.msra.mxu0 0.0
        %513 = vmatprep.subr.mxu0 0.0
        %514 = vmatpush1.msra.mxu0 0.0
        %515 = vmatprep.subr.mxu0 0.0
        %516 = vmatpush1.msra.mxu0 0.0
        %517 = vmatprep.subr.mxu0 0.0
        %518 = vmatpush1.msra.mxu0 0.0
        %519 = vmatprep.subr.mxu0 0.0
        %520 = vmatpush1.msra.mxu0 0.0
        %521 = vmatprep.subr.mxu0 0.0
        %522 = vmatpush1.msra.mxu0 0.0
        %523 = vmatprep.subr.mxu0 0.0
        %524 = vmatpush1.msra.mxu0 0.0
        %525 = vmatprep.subr.mxu0 0.0
        %526 = vmatpush1.msra.mxu0 0.0
        %527 = vmatprep.subr.mxu0 0.0
        %528 = vmatpush1.msra.mxu0 0.0
        %529 = vmatprep.subr.mxu0 0.0
        %530 = vmatpush1.msra.mxu0 0.0
        %531 = vmatprep.mubr.f32.mxu0 0.0
        %532 = vmatmul.mubr.f32.gmra.mrb[0].mxu0 %v335
        %v533 = vpop.f32.mrb[0].mxu0
        %v534 = vadd.f32 0.0, %v533
        %v535 = vpop.f32.mrb[0].mxu0
        %536 = vdwg.mxu0
        %537 = vmatprep.subr.mxu0 0.0
        %538 = vmatpush1.msra.mxu0 %v355
        %539 = vmatprep.subr.mxu0 0.0
        %540 = vmatpush1.msra.mxu0 %v356
        %541 = vmatprep.subr.mxu0 0.0
        %542 = vmatpush1.msra.mxu0 %v357
        %543 = vmatprep.subr.mxu0 0.0
        %544 = vmatpush1.msra.mxu0 %v358
        %545 = vmatprep.subr.mxu0 0.0
        %546 = vmatpush1.msra.mxu0 %v359
        %547 = vmatprep.subr.mxu0 0.0
        %548 = vmatpush1.msra.mxu0 %v360
        %549 = vmatprep.subr.mxu0 0.0
        %550 = vmatpush1.msra.mxu0 %v361
        %551 = vmatprep.subr.mxu0 0.0
        %552 = vmatpush1.msra.mxu0 %v362
        %553 = vmatprep.subr.mxu0 0.0
        %554 = vmatpush1.msra.mxu0 %v363
        %555 = vmatprep.subr.mxu0 0.0
        %556 = vmatpush1.msra.mxu0 %v364
        %557 = vmatprep.subr.mxu0 0.0
        %558 = vmatpush1.msra.mxu0 %v365
        %559 = vmatprep.subr.mxu0 0.0
        %560 = vmatpush1.msra.mxu0 %v366
        %561 = vmatprep.subr.mxu0 0.0
        %562 = vmatpush1.msra.mxu0 %v367
        %563 = vmatprep.subr.mxu0 0.0
        %564 = vmatpush1.msra.mxu0 %v368
        %565 = vmatprep.subr.mxu0 0.0
        %566 = vmatpush1.msra.mxu0 %v369
        %567 = vmatprep.subr.mxu0 0.0
        %568 = vmatpush1.msra.mxu0 %v370
        %569 = vmatprep.subr.mxu0 0.0
        %570 = vmatpush1.msra.mxu0 0.0
        %571 = vmatprep.subr.mxu0 0.0
        %572 = vmatpush1.msra.mxu0 0.0
        %573 = vmatprep.subr.mxu0 0.0
        %574 = vmatpush1.msra.mxu0 0.0
        %575 = vmatprep.subr.mxu0 0.0
        %576 = vmatpush1.msra.mxu0 0.0
        %577 = vmatprep.subr.mxu0 0.0
        %578 = vmatpush1.msra.mxu0 0.0
        %579 = vmatprep.subr.mxu0 0.0
        %580 = vmatpush1.msra.mxu0 0.0
        %581 = vmatprep.subr.mxu0 0.0
        %582 = vmatpush1.msra.mxu0 0.0
        %583 = vmatprep.subr.mxu0 0.0
        %584 = vmatpush1.msra.mxu0 0.0
        %585 = vmatprep.subr.mxu0 0.0
        %586 = vmatpush1.msra.mxu0 0.0
        %587 = vmatprep.subr.mxu0 0.0
        %588 = vmatpush1.msra.mxu0 0.0
        %589 = vmatprep.subr.mxu0 0.0
        %590 = vmatpush1.msra.mxu0 0.0
        %591 = vmatprep.subr.mxu0 0.0
        %592 = vmatpush1.msra.mxu0 0.0
        %593 = vmatprep.subr.mxu0 0.0
        %594 = vmatpush1.msra.mxu0 0.0
        %595 = vmatprep.subr.mxu0 0.0
        %596 = vmatpush1.msra.mxu0 0.0
        %597 = vmatprep.subr.mxu0 0.0
        %598 = vmatpush1.msra.mxu0 0.0
        %599 = vmatprep.subr.mxu0 0.0
        %600 = vmatpush1.msra.mxu0 0.0
        %601 = vmatprep.mubr.f32.mxu0 0.0
        %602 = vmatmul.mubr.f32.gmra.mrb[0].mxu0 %v335
        %v603 = vpop.f32.mrb[0].mxu0
        %v604 = vadd.f32 0.0, %v603
        %v605 = vpop.f32.mrb[0].mxu0
        %606 = vdwg.mxu0
        %607 = vmatprep.subr.mxu0 0.0
        %608 = vmatpush1.msra.mxu0 %v371
        %609 = vmatprep.subr.mxu0 0.0
        %610 = vmatpush1.msra.mxu0 %v372
        %611 = vmatprep.subr.mxu0 0.0
        %612 = vmatpush1.msra.mxu0 %v373
        %613 = vmatprep.subr.mxu0 0.0
        %614 = vmatpush1.msra.mxu0 %v374
        %615 = vmatprep.subr.mxu0 0.0
        %616 = vmatpush1.msra.mxu0 %v375
        %617 = vmatprep.subr.mxu0 0.0
        %618 = vmatpush1.msra.mxu0 %v376
        %619 = vmatprep.subr.mxu0 0.0
        %620 = vmatpush1.msra.mxu0 %v377
        %621 = vmatprep.subr.mxu0 0.0
        %622 = vmatpush1.msra.mxu0 %v378
        %623 = vmatprep.subr.mxu0 0.0
        %624 = vmatpush1.msra.mxu0 %v379
        %625 = vmatprep.subr.mxu0 0.0
        %626 = vmatpush1.msra.mxu0 %v380
        %627 = vmatprep.subr.mxu0 0.0
        %628 = vmatpush1.msra.mxu0 %v381
        %629 = vmatprep.subr.mxu0 0.0
        %630 = vmatpush1.msra.mxu0 %v382
        %631 = vmatprep.subr.mxu0 0.0
        %632 = vmatpush1.msra.mxu0 %v383
        %633 = vmatprep.subr.mxu0 0.0
        %634 = vmatpush1.msra.mxu0 %v384
        %635 = vmatprep.subr.mxu0 0.0
        %636 = vmatpush1.msra.mxu0 %v385
        %637 = vmatprep.subr.mxu0 0.0
        %638 = vmatpush1.msra.mxu0 %v386
        %639 = vmatprep.subr.mxu0 0.0
        %640 = vmatpush1.msra.mxu0 0.0
        %641 = vmatprep.subr.mxu0 0.0
        %642 = vmatpush1.msra.mxu0 0.0
        %643 = vmatprep.subr.mxu0 0.0
        %644 = vmatpush1.msra.mxu0 0.0
        %645 = vmatprep.subr.mxu0 0.0
        %646 = vmatpush1.msra.mxu0 0.0
        %647 = vmatprep.subr.mxu0 0.0
        %648 = vmatpush1.msra.mxu0 0.0
        %649 = vmatprep.subr.mxu0 0.0
        %650 = vmatpush1.msra.mxu0 0.0
        %651 = vmatprep.subr.mxu0 0.0
        %652 = vmatpush1.msra.mxu0 0.0
        %653 = vmatprep.subr.mxu0 0.0
        %654 = vmatpush1.msra.mxu0 0.0
        %655 = vmatprep.subr.mxu0 0.0
        %656 = vmatpush1.msra.mxu0 0.0
        %657 = vmatprep.subr.mxu0 0.0
        %658 = vmatpush1.msra.mxu0 0.0
        %659 = vmatprep.subr.mxu0 0.0
        %660 = vmatpush1.msra.mxu0 0.0
        %661 = vmatprep.subr.mxu0 0.0
        %662 = vmatpush1.msra.mxu0 0.0
        %663 = vmatprep.subr.mxu0 0.0
        %664 = vmatpush1.msra.mxu0 0.0
        %665 = vmatprep.subr.mxu0 0.0
        %666 = vmatpush1.msra.mxu0 0.0
        %667 = vmatprep.subr.mxu0 0.0
        %668 = vmatpush1.msra.mxu0 0.0
        %669 = vmatprep.subr.mxu0 0.0
        %670 = vmatpush1.msra.mxu0 0.0
        %671 = vmatprep.mubr.f32.mxu0 0.0
        %672 = vmatmul.mubr.f32.gmra.mrb[0].mxu0 %v335
        %v673 = vpop.f32.mrb[0].mxu0
        %v674 = vadd.f32 0.0, %v673
        %v675 = vpop.f32.mrb[0].mxu0
        %676 = vdwg.mxu0
        %677 = vmatprep.subr.mxu0 0.0
        %678 = vmatpush1.msra.mxu0 %v387
        %679 = vmatprep.subr.mxu0 0.0
        %680 = vmatpush1.msra.mxu0 %v388
        %681 = vmatprep.subr.mxu0 0.0
        %682 = vmatpush1.msra.mxu0 %v389
        %683 = vmatprep.subr.mxu0 0.0
        %684 = vmatpush1.msra.mxu0 %v390
        %685 = vmatprep.subr.mxu0 0.0
        %686 = vmatpush1.msra.mxu0 %v391
        %687 = vmatprep.subr.mxu0 0.0
        %688 = vmatpush1.msra.mxu0 %v392
        %689 = vmatprep.subr.mxu0 0.0
        %690 = vmatpush1.msra.mxu0 %v393
        %691 = vmatprep.subr.mxu0 0.0
        %692 = vmatpush1.msra.mxu0 %v394
        %693 = vmatprep.subr.mxu0 0.0
        %694 = vmatpush1.msra.mxu0 %v395
        %695 = vmatprep.subr.mxu0 0.0
        %696 = vmatpush1.msra.mxu0 %v396
        %697 = vmatprep.subr.mxu0 0.0
        %698 = vmatpush1.msra.mxu0 %v397
        %699 = vmatprep.subr.mxu0 0.0
        %700 = vmatpush1.msra.mxu0 %v398
        %701 = vmatprep.subr.mxu0 0.0
        %702 = vmatpush1.msra.mxu0 %v399
        %703 = vmatprep.subr.mxu0 0.0
        %704 = vmatpush1.msra.mxu0 %v400
        %705 = vmatprep.subr.mxu0 0.0
        %706 = vmatpush1.msra.mxu0 %v401
        %707 = vmatprep.subr.mxu0 0.0
        %708 = vmatpush1.msra.mxu0 %v402
        %709 = vmatprep.subr.mxu0 0.0
        %710 = vmatpush1.msra.mxu0 0.0
        %711 = vmatprep.subr.mxu0 0.0
        %712 = vmatpush1.msra.mxu0 0.0
        %713 = vmatprep.subr.mxu0 0.0
        %714 = vmatpush1.msra.mxu0 0.0
        %715 = vmatprep.subr.mxu0 0.0
        %716 = vmatpush1.msra.mxu0 0.0
        %717 = vmatprep.subr.mxu0 0.0
        %718 = vmatpush1.msra.mxu0 0.0
        %719 = vmatprep.subr.mxu0 0.0
        %720 = vmatpush1.msra.mxu0 0.0
        %721 = vmatprep.subr.mxu0 0.0
        %722 = vmatpush1.msra.mxu0 0.0
        %723 = vmatprep.subr.mxu0 0.0
        %724 = vmatpush1.msra.mxu0 0.0
        %725 = vmatprep.subr.mxu0 0.0
        %726 = vmatpush1.msra.mxu0 0.0
        %727 = vmatprep.subr.mxu0 0.0
        %728 = vmatpush1.msra.mxu0 0.0
        %729 = vmatprep.subr.mxu0 0.0
        %730 = vmatpush1.msra.mxu0 0.0
        %731 = vmatprep.subr.mxu0 0.0
        %732 = vmatpush1.msra.mxu0 0.0
        %733 = vmatprep.subr.mxu0 0.0
        %734 = vmatpush1.msra.mxu0 0.0
        %735 = vmatprep.subr.mxu0 0.0
        %736 = vmatpush1.msra.mxu0 0.0
        %737 = vmatprep.subr.mxu0 0.0
        %738 = vmatpush1.msra.mxu0 0.0
        %739 = vmatprep.subr.mxu0 0.0
        %740 = vmatpush1.msra.mxu0 0.0
        %741 = vmatprep.mubr.f32.mxu0 0.0
        %742 = vmatmul.mubr.f32.gmra.mrb[0].mxu0 %v335
        %v743 = vpop.f32.mrb[0].mxu0
        %v744 = vadd.f32 0.0, %v743
        %v745 = vpop.f32.mrb[0].mxu0
        %746 = vdwg.mxu0
        %747 = vmatprep.subr.mxu0 0.0
        %748 = vmatpush1.msra.mxu0 %v403
        %749 = vmatprep.subr.mxu0 0.0
        %750 = vmatpush1.msra.mxu0 %v404
        %751 = vmatprep.subr.mxu0 0.0
        %752 = vmatpush1.msra.mxu0 %v405
        %753 = vmatprep.subr.mxu0 0.0
        %754 = vmatpush1.msra.mxu0 %v406
        %755 = vmatprep.subr.mxu0 0.0
        %756 = vmatpush1.msra.mxu0 %v407
        %757 = vmatprep.subr.mxu0 0.0
        %758 = vmatpush1.msra.mxu0 %v408
        %759 = vmatprep.subr.mxu0 0.0
        %760 = vmatpush1.msra.mxu0 %v409
        %761 = vmatprep.subr.mxu0 0.0
        %762 = vmatpush1.msra.mxu0 %v410
        %763 = vmatprep.subr.mxu0 0.0
        %764 = vmatpush1.msra.mxu0 %v411
        %765 = vmatprep.subr.mxu0 0.0
        %766 = vmatpush1.msra.mxu0 %v412
        %767 = vmatprep.subr.mxu0 0.0
        %768 = vmatpush1.msra.mxu0 %v413
        %769 = vmatprep.subr.mxu0 0.0
        %770 = vmatpush1.msra.mxu0 %v414
        %771 = vmatprep.subr.mxu0 0.0
        %772 = vmatpush1.msra.mxu0 %v415
        %773 = vmatprep.subr.mxu0 0.0
        %774 = vmatpush1.msra.mxu0 %v416
        %775 = vmatprep.subr.mxu0 0.0
        %776 = vmatpush1.msra.mxu0 %v417
        %777 = vmatprep.subr.mxu0 0.0
        %778 = vmatpush1.msra.mxu0 %v418
        %779 = vmatprep.subr.mxu0 0.0
        %780 = vmatpush1.msra.mxu0 0.0
        %781 = vmatprep.subr.mxu0 0.0
        %782 = vmatpush1.msra.mxu0 0.0
        %783 = vmatprep.subr.mxu0 0.0
        %784 = vmatpush1.msra.mxu0 0.0
        %785 = vmatprep.subr.mxu0 0.0
        %786 = vmatpush1.msra.mxu0 0.0
        %787 = vmatprep.subr.mxu0 0.0
        %788 = vmatpush1.msra.mxu0 0.0
        %789 = vmatprep.subr.mxu0 0.0
        %790 = vmatpush1.msra.mxu0 0.0
        %791 = vmatprep.subr.mxu0 0.0
        %792 = vmatpush1.msra.mxu0 0.0
        %793 = vmatprep.subr.mxu0 0.0
        %794 = vmatpush1.msra.mxu0 0.0
        %795 = vmatprep.subr.mxu0 0.0
        %796 = vmatpush1.msra.mxu0 0.0
        %797 = vmatprep.subr.mxu0 0.0
        %798 = vmatpush1.msra.mxu0 0.0
        %799 = vmatprep.subr.mxu0 0.0
        %800 = vmatpush1.msra.mxu0 0.0
        %801 = vmatprep.subr.mxu0 0.0
        %802 = vmatpush1.msra.mxu0 0.0
        %803 = vmatprep.subr.mxu0 0.0
        %804 = vmatpush1.msra.mxu0 0.0
        %805 = vmatprep.subr.mxu0 0.0
        %806 = vmatpush1.msra.mxu0 0.0
        %807 = vmatprep.subr.mxu0 0.0
        %808 = vmatpush1.msra.mxu0 0.0
        %809 = vmatprep.subr.mxu0 0.0
        %810 = vmatpush1.msra.mxu0 0.0
        %811 = vmatprep.mubr.f32.mxu0 0.0
        %812 = vmatmul.mubr.f32.gmra.mrb[0].mxu0 %v335
        %v813 = vpop.f32.mrb[0].mxu0
        %v814 = vadd.f32 0.0, %v813
        %v815 = vpop.f32.mrb[0].mxu0
        %816 = vdwg.mxu0
        %817 = vmatprep.subr.mxu0 0.0
        %818 = vmatpush1.msra.mxu0 %v419
        %819 = vmatprep.subr.mxu0 0.0
        %820 = vmatpush1.msra.mxu0 %v420
        %821 = vmatprep.subr.mxu0 0.0
        %822 = vmatpush1.msra.mxu0 %v421
        %823 = vmatprep.subr.mxu0 0.0
        %824 = vmatpush1.msra.mxu0 %v422
        %825 = vmatprep.subr.mxu0 0.0
        %826 = vmatpush1.msra.mxu0 %v423
        %827 = vmatprep.subr.mxu0 0.0
        %828 = vmatpush1.msra.mxu0 %v424
        %829 = vmatprep.subr.mxu0 0.0
        %830 = vmatpush1.msra.mxu0 %v425
        %831 = vmatprep.subr.mxu0 0.0
        %832 = vmatpush1.msra.mxu0 %v426
        %833 = vmatprep.subr.mxu0 0.0
        %834 = vmatpush1.msra.mxu0 %v427
        %835 = vmatprep.subr.mxu0 0.0
        %836 = vmatpush1.msra.mxu0 %v428
        %837 = vmatprep.subr.mxu0 0.0
        %838 = vmatpush1.msra.mxu0 %v429
        %839 = vmatprep.subr.mxu0 0.0
        %840 = vmatpush1.msra.mxu0 %v430
        %841 = vmatprep.subr.mxu0 0.0
        %842 = vmatpush1.msra.mxu0 %v431
        %843 = vmatprep.subr.mxu0 0.0
        %844 = vmatpush1.msra.mxu0 %v432
        %845 = vmatprep.subr.mxu0 0.0
        %846 = vmatpush1.msra.mxu0 %v433
        %847 = vmatprep.subr.mxu0 0.0
        %848 = vmatpush1.msra.mxu0 %v434
        %849 = vmatprep.subr.mxu0 0.0
        %850 = vmatpush1.msra.mxu0 0.0
        %851 = vmatprep.subr.mxu0 0.0
        %852 = vmatpush1.msra.mxu0 0.0
        %853 = vmatprep.subr.mxu0 0.0
        %854 = vmatpush1.msra.mxu0 0.0
        %855 = vmatprep.subr.mxu0 0.0
        %856 = vmatpush1.msra.mxu0 0.0
        %857 = vmatprep.subr.mxu0 0.0
        %858 = vmatpush1.msra.mxu0 0.0
        %859 = vmatprep.subr.mxu0 0.0
        %860 = vmatpush1.msra.mxu0 0.0
        %861 = vmatprep.subr.mxu0 0.0
        %862 = vmatpush1.msra.mxu0 0.0
        %863 = vmatprep.subr.mxu0 0.0
        %864 = vmatpush1.msra.mxu0 0.0
        %865 = vmatprep.subr.mxu0 0.0
        %866 = vmatpush1.msra.mxu0 0.0
        %867 = vmatprep.subr.mxu0 0.0
        %868 = vmatpush1.msra.mxu0 0.0
        %869 = vmatprep.subr.mxu0 0.0
        %870 = vmatpush1.msra.mxu0 0.0
        %871 = vmatprep.subr.mxu0 0.0
        %872 = vmatpush1.msra.mxu0 0.0
        %873 = vmatprep.subr.mxu0 0.0
        %874 = vmatpush1.msra.mxu0 0.0
        %875 = vmatprep.subr.mxu0 0.0
        %876 = vmatpush1.msra.mxu0 0.0
        %877 = vmatprep.subr.mxu0 0.0
        %878 = vmatpush1.msra.mxu0 0.0
        %879 = vmatprep.subr.mxu0 0.0
        %880 = vmatpush1.msra.mxu0 0.0
        %881 = vmatprep.mubr.f32.mxu0 0.0
        %882 = vmatmul.mubr.f32.gmra.mrb[0].mxu0 %v335
        %v883 = vpop.f32.mrb[0].mxu0
        %v884 = vadd.f32 0.0, %v883
        %v885 = vpop.f32.mrb[0].mxu0
        %886 = vdwg.mxu0
        %887 = vmatprep.subr.mxu0 0.0
        %888 = vmatpush1.msra.mxu0 %v435
        %889 = vmatprep.subr.mxu0 0.0
        %890 = vmatpush1.msra.mxu0 %v436
        %891 = vmatprep.subr.mxu0 0.0
        %892 = vmatpush1.msra.mxu0 %v437
        %893 = vmatprep.subr.mxu0 0.0
        %894 = vmatpush1.msra.mxu0 %v438
        %895 = vmatprep.subr.mxu0 0.0
        %896 = vmatpush1.msra.mxu0 %v439
        %897 = vmatprep.subr.mxu0 0.0
        %898 = vmatpush1.msra.mxu0 %v440
        %899 = vmatprep.subr.mxu0 0.0
        %900 = vmatpush1.msra.mxu0 %v441
        %901 = vmatprep.subr.mxu0 0.0
        %902 = vmatpush1.msra.mxu0 %v442
        %903 = vmatprep.subr.mxu0 0.0
        %904 = vmatpush1.msra.mxu0 %v443
        %905 = vmatprep.subr.mxu0 0.0
        %906 = vmatpush1.msra.mxu0 %v444
        %907 = vmatprep.subr.mxu0 0.0
        %908 = vmatpush1.msra.mxu0 %v445
        %909 = vmatprep.subr.mxu0 0.0
        %910 = vmatpush1.msra.mxu0 %v446
        %911 = vmatprep.subr.mxu0 0.0
        %912 = vmatpush1.msra.mxu0 %v447
        %913 = vmatprep.subr.mxu0 0.0
        %914 = vmatpush1.msra.mxu0 %v448
        %915 = vmatprep.subr.mxu0 0.0
        %916 = vmatpush1.msra.mxu0 %v449
        %917 = vmatprep.subr.mxu0 0.0
        %918 = vmatpush1.msra.mxu0 %v450
        %919 = vmatprep.subr.mxu0 0.0
        %920 = vmatpush1.msra.mxu0 0.0
        %921 = vmatprep.subr.mxu0 0.0
        %922 = vmatpush1.msra.mxu0 0.0
        %923 = vmatprep.subr.mxu0 0.0
        %924 = vmatpush1.msra.mxu0 0.0
        %925 = vmatprep.subr.mxu0 0.0
        %926 = vmatpush1.msra.mxu0 0.0
        %927 = vmatprep.subr.mxu0 0.0
        %928 = vmatpush1.msra.mxu0 0.0
        %929 = vmatprep.subr.mxu0 0.0
        %930 = vmatpush1.msra.mxu0 0.0
        %931 = vmatprep.subr.mxu0 0.0
        %932 = vmatpush1.msra.mxu0 0.0
        %933 = vmatprep.subr.mxu0 0.0
        %934 = vmatpush1.msra.mxu0 0.0
        %935 = vmatprep.subr.mxu0 0.0
        %936 = vmatpush1.msra.mxu0 0.0
        %937 = vmatprep.subr.mxu0 0.0
        %938 = vmatpush1.msra.mxu0 0.0
        %939 = vmatprep.subr.mxu0 0.0
        %940 = vmatpush1.msra.mxu0 0.0
        %941 = vmatprep.subr.mxu0 0.0
        %942 = vmatpush1.msra.mxu0 0.0
        %943 = vmatprep.subr.mxu0 0.0
        %944 = vmatpush1.msra.mxu0 0.0
        %945 = vmatprep.subr.mxu0 0.0
        %946 = vmatpush1.msra.mxu0 0.0
        %947 = vmatprep.subr.mxu0 0.0
        %948 = vmatpush1.msra.mxu0 0.0
        %949 = vmatprep.subr.mxu0 0.0
        %950 = vmatpush1.msra.mxu0 0.0
        %951 = vmatprep.mubr.f32.mxu0 0.0
        %952 = vmatmul.mubr.f32.gmra.mrb[0].mxu0 %v335
        %v953 = vpop.f32.mrb[0].mxu0
        %v954 = vadd.f32 0.0, %v953
        %v955 = vpop.f32.mrb[0].mxu0
        %956 = vdwg.mxu0
        %957 = vmatprep.subr.mxu0 0.0
        %958 = vmatpush1.msra.mxu0 %v451
        %959 = vmatprep.subr.mxu0 0.0
        %960 = vmatpush1.msra.mxu0 %v452
        %961 = vmatprep.subr.mxu0 0.0
        %962 = vmatpush1.msra.mxu0 %v453
        %963 = vmatprep.subr.mxu0 0.0
        %964 = vmatpush1.msra.mxu0 %v454
        %965 = vmatprep.subr.mxu0 0.0
        %966 = vmatpush1.msra.mxu0 %v455
        %967 = vmatprep.subr.mxu0 0.0
        %968 = vmatpush1.msra.mxu0 %v456
        %969 = vmatprep.subr.mxu0 0.0
        %970 = vmatpush1.msra.mxu0 %v457
        %971 = vmatprep.subr.mxu0 0.0
        %972 = vmatpush1.msra.mxu0 %v458
        %973 = vmatprep.subr.mxu0 0.0
        %974 = vmatpush1.msra.mxu0 %v459
        %975 = vmatprep.subr.mxu0 0.0
        %976 = vmatpush1.msra.mxu0 %v460
        %977 = vmatprep.subr.mxu0 0.0
        %978 = vmatpush1.msra.mxu0 %v461
        %979 = vmatprep.subr.mxu0 0.0
        %980 = vmatpush1.msra.mxu0 %v462
        %981 = vmatprep.subr.mxu0 0.0
        %982 = vmatpush1.msra.mxu0 %v463
        %983 = vmatprep.subr.mxu0 0.0
        %984 = vmatpush1.msra.mxu0 %v464
        %985 = vmatprep.subr.mxu0 0.0
        %986 = vmatpush1.msra.mxu0 %v465
        %987 = vmatprep.subr.mxu0 0.0
        %988 = vmatpush1.msra.mxu0 %v466
        %989 = vmatprep.subr.mxu0 0.0
        %990 = vmatpush1.msra.mxu0 0.0
        %991 = vmatprep.subr.mxu0 0.0
        %992 = vmatpush1.msra.mxu0 0.0
        %993 = vmatprep.subr.mxu0 0.0
        %994 = vmatpush1.msra.mxu0 0.0
        %995 = vmatprep.subr.mxu0 0.0
        %996 = vmatpush1.msra.mxu0 0.0
        %997 = vmatprep.subr.mxu0 0.0
        %998 = vmatpush1.msra.mxu0 0.0
        %999 = vmatprep.subr.mxu0 0.0
        %1000 = vmatpush1.msra.mxu0 0.0
        %1001 = vmatprep.subr.mxu0 0.0
        %1002 = vmatpush1.msra.mxu0 0.0
        %1003 = vmatprep.subr.mxu0 0.0
        %1004 = vmatpush1.msra.mxu0 0.0
        %1005 = vmatprep.subr.mxu0 0.0
        %1006 = vmatpush1.msra.mxu0 0.0
        %1007 = vmatprep.subr.mxu0 0.0
        %1008 = vmatpush1.msra.mxu0 0.0
        %1009 = vmatprep.subr.mxu0 0.0
        %1010 = vmatpush1.msra.mxu0 0.0
        %1011 = vmatprep.subr.mxu0 0.0
        %1012 = vmatpush1.msra.mxu0 0.0
        %1013 = vmatprep.subr.mxu0 0.0
        %1014 = vmatpush1.msra.mxu0 0.0
        %1015 = vmatprep.subr.mxu0 0.0
        %1016 = vmatpush1.msra.mxu0 0.0
        %1017 = vmatprep.subr.mxu0 0.0
        %1018 = vmatpush1.msra.mxu0 0.0
        %1019 = vmatprep.subr.mxu0 0.0
        %1020 = vmatpush1.msra.mxu0 0.0
        %1021 = vmatprep.mubr.f32.mxu0 0.0
        %1022 = vmatmul.mubr.f32.gmra.mrb[0].mxu0 %v335
        %v1023 = vpop.f32.mrb[0].mxu0
        %v1024 = vadd.f32 0.0, %v1023
        %v1025 = vpop.f32.mrb[0].mxu0
        %1026 = vdwg.mxu0
        %v1027 = vld [vmem:[%s4] sm:$0xff]
        %v1028 = vld [vmem:[%s4 + $0x8] sm:$0xff]
        %v1029 = vld [vmem:[%s4 + $0x10] sm:$0xff]
        %v1030 = vld [vmem:[%s4 + $0x18] sm:$0xff]
        %v1031 = vld [vmem:[%s4 + $0x20] sm:$0xff]
        %v1032 = vld [vmem:[%s4 + $0x28] sm:$0xff]
        %v1033 = vld [vmem:[%s4 + $0x30] sm:$0xff]
        %v1034 = vld [vmem:[%s4 + $0x38] sm:$0xff]
        %v1035 = vld [vmem:[%s4 + $0x40] sm:$0xff]
        %v1036 = vld [vmem:[%s4 + $0x48] sm:$0xff]
        %v1037 = vld [vmem:[%s4 + $0x50] sm:$0xff]
        %v1038 = vld [vmem:[%s4 + $0x58] sm:$0xff]
        %v1039 = vld [vmem:[%s4 + $0x60] sm:$0xff]
        %v1040 = vld [vmem:[%s4 + $0x68] sm:$0xff]
        %v1041 = vld [vmem:[%s4 + $0x70] sm:$0xff]
        %v1042 = vld [vmem:[%s4 + $0x78] sm:$0xff]
        %v1043 = vld [vmem:[%s4 + $0x80] sm:$0xff]
        %v1044 = vld [vmem:[%s4 + $0x88] sm:$0xff]
        %v1045 = vld [vmem:[%s4 + $0x90] sm:$0xff]
        %v1046 = vld [vmem:[%s4 + $0x98] sm:$0xff]
        %v1047 = vld [vmem:[%s4 + $0xa0] sm:$0xff]
        %v1048 = vld [vmem:[%s4 + $0xa8] sm:$0xff]
        %v1049 = vld [vmem:[%s4 + $0xb0] sm:$0xff]
        %v1050 = vld [vmem:[%s4 + $0xb8] sm:$0xff]
        %v1051 = vld [vmem:[%s4 + $0xc0] sm:$0xff]
        %v1052 = vld [vmem:[%s4 + $0xc8] sm:$0xff]
        %v1053 = vld [vmem:[%s4 + $0xd0] sm:$0xff]
        %v1054 = vld [vmem:[%s4 + $0xd8] sm:$0xff]
        %v1055 = vld [vmem:[%s4 + $0xe0] sm:$0xff]
        %v1056 = vld [vmem:[%s4 + $0xe8] sm:$0xff]
        %v1057 = vld [vmem:[%s4 + $0xf0] sm:$0xff]
        %v1058 = vld [vmem:[%s4 + $0xf8] sm:$0xff]
        %v1059 = vld [vmem:[%s4 + $0x100] sm:$0xff]
        %v1060 = vld [vmem:[%s4 + $0x108] sm:$0xff]
        %v1061 = vld [vmem:[%s4 + $0x110] sm:$0xff]
        %v1062 = vld [vmem:[%s4 + $0x118] sm:$0xff]
        %v1063 = vld [vmem:[%s4 + $0x120] sm:$0xff]
        %v1064 = vld [vmem:[%s4 + $0x128] sm:$0xff]
        %v1065 = vld [vmem:[%s4 + $0x130] sm:$0xff]
        %v1066 = vld [vmem:[%s4 + $0x138] sm:$0xff]
        %v1067 = vld [vmem:[%s4 + $0x140] sm:$0xff]
        %v1068 = vld [vmem:[%s4 + $0x148] sm:$0xff]
        %v1069 = vld [vmem:[%s4 + $0x150] sm:$0xff]
        %v1070 = vld [vmem:[%s4 + $0x158] sm:$0xff]
        %v1071 = vld [vmem:[%s4 + $0x160] sm:$0xff]
        %v1072 = vld [vmem:[%s4 + $0x168] sm:$0xff]
        %v1073 = vld [vmem:[%s4 + $0x170] sm:$0xff]
        %v1074 = vld [vmem:[%s4 + $0x178] sm:$0xff]
        %v1075 = vld [vmem:[%s4 + $0x180] sm:$0xff]
        %v1076 = vld [vmem:[%s4 + $0x188] sm:$0xff]
        %v1077 = vld [vmem:[%s4 + $0x190] sm:$0xff]
        %v1078 = vld [vmem:[%s4 + $0x198] sm:$0xff]
        %v1079 = vld [vmem:[%s4 + $0x1a0] sm:$0xff]
        %v1080 = vld [vmem:[%s4 + $0x1a8] sm:$0xff]
        %v1081 = vld [vmem:[%s4 + $0x1b0] sm:$0xff]
        %v1082 = vld [vmem:[%s4 + $0x1b8] sm:$0xff]
        %v1083 = vld [vmem:[%s4 + $0x1c0] sm:$0xff]
        %v1084 = vld [vmem:[%s4 + $0x1c8] sm:$0xff]
        %v1085 = vld [vmem:[%s4 + $0x1d0] sm:$0xff]
        %v1086 = vld [vmem:[%s4 + $0x1d8] sm:$0xff]
        %v1087 = vld [vmem:[%s4 + $0x1e0] sm:$0xff]
        %v1088 = vld [vmem:[%s4 + $0x1e8] sm:$0xff]
        %v1089 = vld [vmem:[%s4 + $0x1f0] sm:$0xff]
        %v1090 = vld [vmem:[%s4 + $0x1f8] sm:$0xff]
        %v1091 = vld [vmem:[%s4 + $0x200] sm:$0xff]
        %v1092 = vld [vmem:[%s4 + $0x208] sm:$0xff]
        %v1093 = vld [vmem:[%s4 + $0x210] sm:$0xff]
        %v1094 = vld [vmem:[%s4 + $0x218] sm:$0xff]
        %v1095 = vld [vmem:[%s4 + $0x220] sm:$0xff]
        %v1096 = vld [vmem:[%s4 + $0x228] sm:$0xff]
        %v1097 = vld [vmem:[%s4 + $0x230] sm:$0xff]
        %v1098 = vld [vmem:[%s4 + $0x238] sm:$0xff]
        %v1099 = vld [vmem:[%s4 + $0x240] sm:$0xff]
        %v1100 = vld [vmem:[%s4 + $0x248] sm:$0xff]
        %v1101 = vld [vmem:[%s4 + $0x250] sm:$0xff]
        %v1102 = vld [vmem:[%s4 + $0x258] sm:$0xff]
        %v1103 = vld [vmem:[%s4 + $0x260] sm:$0xff]
        %v1104 = vld [vmem:[%s4 + $0x268] sm:$0xff]
        %v1105 = vld [vmem:[%s4 + $0x270] sm:$0xff]
        %v1106 = vld [vmem:[%s4 + $0x278] sm:$0xff]
        %v1107 = vld [vmem:[%s4 + $0x280] sm:$0xff]
        %v1108 = vld [vmem:[%s4 + $0x288] sm:$0xff]
        %v1109 = vld [vmem:[%s4 + $0x290] sm:$0xff]
        %v1110 = vld [vmem:[%s4 + $0x298] sm:$0xff]
        %v1111 = vld [vmem:[%s4 + $0x2a0] sm:$0xff]
        %v1112 = vld [vmem:[%s4 + $0x2a8] sm:$0xff]
        %v1113 = vld [vmem:[%s4 + $0x2b0] sm:$0xff]
        %v1114 = vld [vmem:[%s4 + $0x2b8] sm:$0xff]
        %v1115 = vld [vmem:[%s4 + $0x2c0] sm:$0xff]
        %v1116 = vld [vmem:[%s4 + $0x2c8] sm:$0xff]
        %v1117 = vld [vmem:[%s4 + $0x2d0] sm:$0xff]
        %v1118 = vld [vmem:[%s4 + $0x2d8] sm:$0xff]
        %v1119 = vld [vmem:[%s4 + $0x2e0] sm:$0xff]
        %v1120 = vld [vmem:[%s4 + $0x2e8] sm:$0xff]
        %v1121 = vld [vmem:[%s4 + $0x2f0] sm:$0xff]
        %v1122 = vld [vmem:[%s4 + $0x2f8] sm:$0xff]
        %v1123 = vld [vmem:[%s4 + $0x300] sm:$0xff]
        %v1124 = vld [vmem:[%s4 + $0x308] sm:$0xff]
        %v1125 = vld [vmem:[%s4 + $0x310] sm:$0xff]
        %v1126 = vld [vmem:[%s4 + $0x318] sm:$0xff]
        %v1127 = vld [vmem:[%s4 + $0x320] sm:$0xff]
        %v1128 = vld [vmem:[%s4 + $0x328] sm:$0xff]
        %v1129 = vld [vmem:[%s4 + $0x330] sm:$0xff]
        %v1130 = vld [vmem:[%s4 + $0x338] sm:$0xff]
        %v1131 = vld [vmem:[%s4 + $0x340] sm:$0xff]
        %v1132 = vld [vmem:[%s4 + $0x348] sm:$0xff]
        %v1133 = vld [vmem:[%s4 + $0x350] sm:$0xff]
        %v1134 = vld [vmem:[%s4 + $0x358] sm:$0xff]
        %v1135 = vld [vmem:[%s4 + $0x360] sm:$0xff]
        %v1136 = vld [vmem:[%s4 + $0x368] sm:$0xff]
        %v1137 = vld [vmem:[%s4 + $0x370] sm:$0xff]
        %v1138 = vld [vmem:[%s4 + $0x378] sm:$0xff]
        %v1139 = vld [vmem:[%s4 + $0x380] sm:$0xff]
        %v1140 = vld [vmem:[%s4 + $0x388] sm:$0xff]
        %v1141 = vld [vmem:[%s4 + $0x390] sm:$0xff]
        %v1142 = vld [vmem:[%s4 + $0x398] sm:$0xff]
        %v1143 = vld [vmem:[%s4 + $0x3a0] sm:$0xff]
        %v1144 = vld [vmem:[%s4 + $0x3a8] sm:$0xff]
        %v1145 = vld [vmem:[%s4 + $0x3b0] sm:$0xff]
        %v1146 = vld [vmem:[%s4 + $0x3b8] sm:$0xff]
        %v1147 = vld [vmem:[%s4 + $0x3c0] sm:$0xff]
        %v1148 = vld [vmem:[%s4 + $0x3c8] sm:$0xff]
        %v1149 = vld [vmem:[%s4 + $0x3d0] sm:$0xff]
        %v1150 = vld [vmem:[%s4 + $0x3d8] sm:$0xff]
        %v1151 = vld [vmem:[%s4 + $0x3e0] sm:$0xff]
        %v1152 = vld [vmem:[%s4 + $0x3e8] sm:$0xff]
        %v1153 = vld [vmem:[%s4 + $0x3f0] sm:$0xff]
        %v1154 = vld [vmem:[%s4 + $0x3f8] sm:$0xff]
        %1155 = vmatprep.subr.mxu0 0.0
        %1156 = vmatpush1.msra.mxu0 %v1027
        %1157 = vmatprep.subr.mxu0 0.0
        %1158 = vmatpush1.msra.mxu0 %v1028
        %1159 = vmatprep.subr.mxu0 0.0
        %1160 = vmatpush1.msra.mxu0 %v1029
        %1161 = vmatprep.subr.mxu0 0.0
        %1162 = vmatpush1.msra.mxu0 %v1030
        %1163 = vmatprep.subr.mxu0 0.0
        %1164 = vmatpush1.msra.mxu0 %v1031
        %1165 = vmatprep.subr.mxu0 0.0
        %1166 = vmatpush1.msra.mxu0 %v1032
        %1167 = vmatprep.subr.mxu0 0.0
        %1168 = vmatpush1.msra.mxu0 %v1033
        %1169 = vmatprep.subr.mxu0 0.0
        %1170 = vmatpush1.msra.mxu0 %v1034
        %1171 = vmatprep.subr.mxu0 0.0
        %1172 = vmatpush1.msra.mxu0 %v1035
        %1173 = vmatprep.subr.mxu0 0.0
        %1174 = vmatpush1.msra.mxu0 %v1036
        %1175 = vmatprep.subr.mxu0 0.0
        %1176 = vmatpush1.msra.mxu0 %v1037
        %1177 = vmatprep.subr.mxu0 0.0
        %1178 = vmatpush1.msra.mxu0 %v1038
        %1179 = vmatprep.subr.mxu0 0.0
        %1180 = vmatpush1.msra.mxu0 %v1039
        %1181 = vmatprep.subr.mxu0 0.0
        %1182 = vmatpush1.msra.mxu0 %v1040
        %1183 = vmatprep.subr.mxu0 0.0
        %1184 = vmatpush1.msra.mxu0 %v1041
        %1185 = vmatprep.subr.mxu0 0.0
        %1186 = vmatpush1.msra.mxu0 %v1042
        %1187 = vmatprep.subr.mxu0 0.0
        %1188 = vmatpush1.msra.mxu0 0.0
        %1189 = vmatprep.subr.mxu0 0.0
        %1190 = vmatpush1.msra.mxu0 0.0
        %1191 = vmatprep.subr.mxu0 0.0
        %1192 = vmatpush1.msra.mxu0 0.0
        %1193 = vmatprep.subr.mxu0 0.0
        %1194 = vmatpush1.msra.mxu0 0.0
        %1195 = vmatprep.subr.mxu0 0.0
        %1196 = vmatpush1.msra.mxu0 0.0
        %1197 = vmatprep.subr.mxu0 0.0
        %1198 = vmatpush1.msra.mxu0 0.0
        %1199 = vmatprep.subr.mxu0 0.0
        %1200 = vmatpush1.msra.mxu0 0.0
        %1201 = vmatprep.subr.mxu0 0.0
        %1202 = vmatpush1.msra.mxu0 0.0
        %1203 = vmatprep.subr.mxu0 0.0
        %1204 = vmatpush1.msra.mxu0 0.0
        %1205 = vmatprep.subr.mxu0 0.0
        %1206 = vmatpush1.msra.mxu0 0.0
        %1207 = vmatprep.subr.mxu0 0.0
        %1208 = vmatpush1.msra.mxu0 0.0
        %1209 = vmatprep.subr.mxu0 0.0
        %1210 = vmatpush1.msra.mxu0 0.0
        %1211 = vmatprep.subr.mxu0 0.0
        %1212 = vmatpush1.msra.mxu0 0.0
        %1213 = vmatprep.subr.mxu0 0.0
        %1214 = vmatpush1.msra.mxu0 0.0
        %1215 = vmatprep.subr.mxu0 0.0
        %1216 = vmatpush1.msra.mxu0 0.0
        %1217 = vmatprep.subr.mxu0 0.0
        %1218 = vmatpush1.msra.mxu0 0.0
        %1219 = vmatprep.mubr.f32.mxu0 0.0
        %1220 = vmatmul.mubr.f32.gmra.mrb[0].mxu0 %v336
        %v1221 = vpop.f32.mrb[0].mxu0
        %v1222 = vadd.f32 0.0, %v1221
        %v1223 = vpop.f32.mrb[0].mxu0
        %1224 = vmatprep.mubr.f32.mxu0 0.0
        %1225 = vmatmul.mubr.f32.gmra.mrb[0].mxu0 %v337
        %v1226 = vpop.f32.mrb[0].mxu0
        %v1227 = vadd.f32 0.0, %v1226
        %v1228 = vpop.f32.mrb[0].mxu0
        %1229 = vdwg.mxu0
        %1230 = vmatprep.subr.mxu0 0.0
        %1231 = vmatpush1.msra.mxu0 %v1043
        %1232 = vmatprep.subr.mxu0 0.0
        %1233 = vmatpush1.msra.mxu0 %v1044
        %1234 = vmatprep.subr.mxu0 0.0
        %1235 = vmatpush1.msra.mxu0 %v1045
        %1236 = vmatprep.subr.mxu0 0.0
        %1237 = vmatpush1.msra.mxu0 %v1046
        %1238 = vmatprep.subr.mxu0 0.0
        %1239 = vmatpush1.msra.mxu0 %v1047
        %1240 = vmatprep.subr.mxu0 0.0
        %1241 = vmatpush1.msra.mxu0 %v1048
        %1242 = vmatprep.subr.mxu0 0.0
        %1243 = vmatpush1.msra.mxu0 %v1049
        %1244 = vmatprep.subr.mxu0 0.0
        %1245 = vmatpush1.msra.mxu0 %v1050
        %1246 = vmatprep.subr.mxu0 0.0
        %1247 = vmatpush1.msra.mxu0 %v1051
        %1248 = vmatprep.subr.mxu0 0.0
        %1249 = vmatpush1.msra.mxu0 %v1052
        %1250 = vmatprep.subr.mxu0 0.0
        %1251 = vmatpush1.msra.mxu0 %v1053
        %1252 = vmatprep.subr.mxu0 0.0
        %1253 = vmatpush1.msra.mxu0 %v1054
        %1254 = vmatprep.subr.mxu0 0.0
        %1255 = vmatpush1.msra.mxu0 %v1055
        %1256 = vmatprep.subr.mxu0 0.0
        %1257 = vmatpush1.msra.mxu0 %v1056
        %1258 = vmatprep.subr.mxu0 0.0
        %1259 = vmatpush1.msra.mxu0 %v1057
        %1260 = vmatprep.subr.mxu0 0.0
        %1261 = vmatpush1.msra.mxu0 %v1058
        %1262 = vmatprep.subr.mxu0 0.0
        %1263 = vmatpush1.msra.mxu0 0.0
        %1264 = vmatprep.subr.mxu0 0.0
        %1265 = vmatpush1.msra.mxu0 0.0
        %1266 = vmatprep.subr.mxu0 0.0
        %1267 = vmatpush1.msra.mxu0 0.0
        %1268 = vmatprep.subr.mxu0 0.0
        %1269 = vmatpush1.msra.mxu0 0.0
        %1270 = vmatprep.subr.mxu0 0.0
        %1271 = vmatpush1.msra.mxu0 0.0
        %1272 = vmatprep.subr.mxu0 0.0
        %1273 = vmatpush1.msra.mxu0 0.0
        %1274 = vmatprep.subr.mxu0 0.0
        %1275 = vmatpush1.msra.mxu0 0.0
        %1276 = vmatprep.subr.mxu0 0.0
        %1277 = vmatpush1.msra.mxu0 0.0
        %1278 = vmatprep.subr.mxu0 0.0
        %1279 = vmatpush1.msra.mxu0 0.0
        %1280 = vmatprep.subr.mxu0 0.0
        %1281 = vmatpush1.msra.mxu0 0.0
        %1282 = vmatprep.subr.mxu0 0.0
        %1283 = vmatpush1.msra.mxu0 0.0
        %1284 = vmatprep.subr.mxu0 0.0
        %1285 = vmatpush1.msra.mxu0 0.0
        %1286 = vmatprep.subr.mxu0 0.0
        %1287 = vmatpush1.msra.mxu0 0.0
        %1288 = vmatprep.subr.mxu0 0.0
        %1289 = vmatpush1.msra.mxu0 0.0
        %1290 = vmatprep.subr.mxu0 0.0
        %1291 = vmatpush1.msra.mxu0 0.0
        %1292 = vmatprep.subr.mxu0 0.0
        %1293 = vmatpush1.msra.mxu0 0.0
        %1294 = vmatprep.mubr.f32.mxu0 0.0
        %1295 = vmatmul.mubr.f32.gmra.mrb[0].mxu0 %v336
        %v1296 = vpop.f32.mrb[0].mxu0
        %v1297 = vadd.f32 0.0, %v1296
        %v1298 = vpop.f32.mrb[0].mxu0
        %1299 = vmatprep.mubr.f32.mxu0 0.0
        %1300 = vmatmul.mubr.f32.gmra.mrb[0].mxu0 %v337
        %v1301 = vpop.f32.mrb[0].mxu0
        %v1302 = vadd.f32 0.0, %v1301
        %v1303 = vpop.f32.mrb[0].mxu0
        %1304 = vdwg.mxu0
        %1305 = vmatprep.subr.mxu0 0.0
        %1306 = vmatpush1.msra.mxu0 %v1059
        %1307 = vmatprep.subr.mxu0 0.0
        %1308 = vmatpush1.msra.mxu0 %v1060
        %1309 = vmatprep.subr.mxu0 0.0
        %1310 = vmatpush1.msra.mxu0 %v1061
        %1311 = vmatprep.subr.mxu0 0.0
        %1312 = vmatpush1.msra.mxu0 %v1062
        %1313 = vmatprep.subr.mxu0 0.0
        %1314 = vmatpush1.msra.mxu0 %v1063
        %1315 = vmatprep.subr.mxu0 0.0
        %1316 = vmatpush1.msra.mxu0 %v1064
        %1317 = vmatprep.subr.mxu0 0.0
        %1318 = vmatpush1.msra.mxu0 %v1065
        %1319 = vmatprep.subr.mxu0 0.0
        %1320 = vmatpush1.msra.mxu0 %v1066
        %1321 = vmatprep.subr.mxu0 0.0
        %1322 = vmatpush1.msra.mxu0 %v1067
        %1323 = vmatprep.subr.mxu0 0.0
        %1324 = vmatpush1.msra.mxu0 %v1068
        %1325 = vmatprep.subr.mxu0 0.0
        %1326 = vmatpush1.msra.mxu0 %v1069
        %1327 = vmatprep.subr.mxu0 0.0
        %1328 = vmatpush1.msra.mxu0 %v1070
        %1329 = vmatprep.subr.mxu0 0.0
        %1330 = vmatpush1.msra.mxu0 %v1071
        %1331 = vmatprep.subr.mxu0 0.0
        %1332 = vmatpush1.msra.mxu0 %v1072
        %1333 = vmatprep.subr.mxu0 0.0
        %1334 = vmatpush1.msra.mxu0 %v1073
        %1335 = vmatprep.subr.mxu0 0.0
        %1336 = vmatpush1.msra.mxu0 %v1074
        %1337 = vmatprep.subr.mxu0 0.0
        %1338 = vmatpush1.msra.mxu0 0.0
        %1339 = vmatprep.subr.mxu0 0.0
        %1340 = vmatpush1.msra.mxu0 0.0
        %1341 = vmatprep.subr.mxu0 0.0
        %1342 = vmatpush1.msra.mxu0 0.0
        %1343 = vmatprep.subr.mxu0 0.0
        %1344 = vmatpush1.msra.mxu0 0.0
        %1345 = vmatprep.subr.mxu0 0.0
        %1346 = vmatpush1.msra.mxu0 0.0
        %1347 = vmatprep.subr.mxu0 0.0
        %1348 = vmatpush1.msra.mxu0 0.0
        %1349 = vmatprep.subr.mxu0 0.0
        %1350 = vmatpush1.msra.mxu0 0.0
        %1351 = vmatprep.subr.mxu0 0.0
        %1352 = vmatpush1.msra.mxu0 0.0
        %1353 = vmatprep.subr.mxu0 0.0
        %1354 = vmatpush1.msra.mxu0 0.0
        %1355 = vmatprep.subr.mxu0 0.0
        %1356 = vmatpush1.msra.mxu0 0.0
        %1357 = vmatprep.subr.mxu0 0.0
        %1358 = vmatpush1.msra.mxu0 0.0
        %1359 = vmatprep.subr.mxu0 0.0
        %1360 = vmatpush1.msra.mxu0 0.0
        %1361 = vmatprep.subr.mxu0 0.0
        %1362 = vmatpush1.msra.mxu0 0.0
        %1363 = vmatprep.subr.mxu0 0.0
        %1364 = vmatpush1.msra.mxu0 0.0
        %1365 = vmatprep.subr.mxu0 0.0
        %1366 = vmatpush1.msra.mxu0 0.0
        %1367 = vmatprep.subr.mxu0 0.0
        %1368 = vmatpush1.msra.mxu0 0.0
        %1369 = vmatprep.mubr.f32.mxu0 0.0
        %1370 = vmatmul.mubr.f32.gmra.mrb[0].mxu0 %v336
        %v1371 = vpop.f32.mrb[0].mxu0
        %v1372 = vadd.f32 0.0, %v1371
        %v1373 = vpop.f32.mrb[0].mxu0
        %1374 = vmatprep.mubr.f32.mxu0 0.0
        %1375 = vmatmul.mubr.f32.gmra.mrb[0].mxu0 %v337
        %v1376 = vpop.f32.mrb[0].mxu0
        %v1377 = vadd.f32 0.0, %v1376
        %v1378 = vpop.f32.mrb[0].mxu0
        %1379 = vdwg.mxu0
        %1380 = vmatprep.subr.mxu0 0.0
        %1381 = vmatpush1.msra.mxu0 %v1075
        %1382 = vmatprep.subr.mxu0 0.0
        %1383 = vmatpush1.msra.mxu0 %v1076
        %1384 = vmatprep.subr.mxu0 0.0
        %1385 = vmatpush1.msra.mxu0 %v1077
        %1386 = vmatprep.subr.mxu0 0.0
        %1387 = vmatpush1.msra.mxu0 %v1078
        %1388 = vmatprep.subr.mxu0 0.0
        %1389 = vmatpush1.msra.mxu0 %v1079
        %1390 = vmatprep.subr.mxu0 0.0
        %1391 = vmatpush1.msra.mxu0 %v1080
        %1392 = vmatprep.subr.mxu0 0.0
        %1393 = vmatpush1.msra.mxu0 %v1081
        %1394 = vmatprep.subr.mxu0 0.0
        %1395 = vmatpush1.msra.mxu0 %v1082
        %1396 = vmatprep.subr.mxu0 0.0
        %1397 = vmatpush1.msra.mxu0 %v1083
        %1398 = vmatprep.subr.mxu0 0.0
        %1399 = vmatpush1.msra.mxu0 %v1084
        %1400 = vmatprep.subr.mxu0 0.0
        %1401 = vmatpush1.msra.mxu0 %v1085
        %1402 = vmatprep.subr.mxu0 0.0
        %1403 = vmatpush1.msra.mxu0 %v1086
        %1404 = vmatprep.subr.mxu0 0.0
        %1405 = vmatpush1.msra.mxu0 %v1087
        %1406 = vmatprep.subr.mxu0 0.0
        %1407 = vmatpush1.msra.mxu0 %v1088
        %1408 = vmatprep.subr.mxu0 0.0
        %1409 = vmatpush1.msra.mxu0 %v1089
        %1410 = vmatprep.subr.mxu0 0.0
        %1411 = vmatpush1.msra.mxu0 %v1090
        %1412 = vmatprep.subr.mxu0 0.0
        %1413 = vmatpush1.msra.mxu0 0.0
        %1414 = vmatprep.subr.mxu0 0.0
        %1415 = vmatpush1.msra.mxu0 0.0
        %1416 = vmatprep.subr.mxu0 0.0
        %1417 = vmatpush1.msra.mxu0 0.0
        %1418 = vmatprep.subr.mxu0 0.0
        %1419 = vmatpush1.msra.mxu0 0.0
        %1420 = vmatprep.subr.mxu0 0.0
        %1421 = vmatpush1.msra.mxu0 0.0
        %1422 = vmatprep.subr.mxu0 0.0
        %1423 = vmatpush1.msra.mxu0 0.0
        %1424 = vmatprep.subr.mxu0 0.0
        %1425 = vmatpush1.msra.mxu0 0.0
        %1426 = vmatprep.subr.mxu0 0.0
        %1427 = vmatpush1.msra.mxu0 0.0
        %1428 = vmatprep.subr.mxu0 0.0
        %1429 = vmatpush1.msra.mxu0 0.0
        %1430 = vmatprep.subr.mxu0 0.0
        %1431 = vmatpush1.msra.mxu0 0.0
        %1432 = vmatprep.subr.mxu0 0.0
        %1433 = vmatpush1.msra.mxu0 0.0
        %1434 = vmatprep.subr.mxu0 0.0
        %1435 = vmatpush1.msra.mxu0 0.0
        %1436 = vmatprep.subr.mxu0 0.0
        %1437 = vmatpush1.msra.mxu0 0.0
        %1438 = vmatprep.subr.mxu0 0.0
        %1439 = vmatpush1.msra.mxu0 0.0
        %1440 = vmatprep.subr.mxu0 0.0
        %1441 = vmatpush1.msra.mxu0 0.0
        %1442 = vmatprep.subr.mxu0 0.0
        %1443 = vmatpush1.msra.mxu0 0.0
        %1444 = vmatprep.mubr.f32.mxu0 0.0
        %1445 = vmatmul.mubr.f32.gmra.mrb[0].mxu0 %v336
        %v1446 = vpop.f32.mrb[0].mxu0
        %v1447 = vadd.f32 0.0, %v1446
        %v1448 = vpop.f32.mrb[0].mxu0
        %1449 = vmatprep.mubr.f32.mxu0 0.0
        %1450 = vmatmul.mubr.f32.gmra.mrb[0].mxu0 %v337
        %v1451 = vpop.f32.mrb[0].mxu0
        %v1452 = vadd.f32 0.0, %v1451
        %v1453 = vpop.f32.mrb[0].mxu0
        %1454 = vdwg.mxu0
        %1455 = vmatprep.subr.mxu0 0.0
        %1456 = vmatpush1.msra.mxu0 %v1091
        %1457 = vmatprep.subr.mxu0 0.0
        %1458 = vmatpush1.msra.mxu0 %v1092
        %1459 = vmatprep.subr.mxu0 0.0
        %1460 = vmatpush1.msra.mxu0 %v1093
        %1461 = vmatprep.subr.mxu0 0.0
        %1462 = vmatpush1.msra.mxu0 %v1094
        %1463 = vmatprep.subr.mxu0 0.0
        %1464 = vmatpush1.msra.mxu0 %v1095
        %1465 = vmatprep.subr.mxu0 0.0
        %1466 = vmatpush1.msra.mxu0 %v1096
        %1467 = vmatprep.subr.mxu0 0.0
        %1468 = vmatpush1.msra.mxu0 %v1097
        %1469 = vmatprep.subr.mxu0 0.0
        %1470 = vmatpush1.msra.mxu0 %v1098
        %1471 = vmatprep.subr.mxu0 0.0
        %1472 = vmatpush1.msra.mxu0 %v1099
        %1473 = vmatprep.subr.mxu0 0.0
        %1474 = vmatpush1.msra.mxu0 %v1100
        %1475 = vmatprep.subr.mxu0 0.0
        %1476 = vmatpush1.msra.mxu0 %v1101
        %1477 = vmatprep.subr.mxu0 0.0
        %1478 = vmatpush1.msra.mxu0 %v1102
        %1479 = vmatprep.subr.mxu0 0.0
        %1480 = vmatpush1.msra.mxu0 %v1103
        %1481 = vmatprep.subr.mxu0 0.0
        %1482 = vmatpush1.msra.mxu0 %v1104
        %1483 = vmatprep.subr.mxu0 0.0
        %1484 = vmatpush1.msra.mxu0 %v1105
        %1485 = vmatprep.subr.mxu0 0.0
        %1486 = vmatpush1.msra.mxu0 %v1106
        %1487 = vmatprep.subr.mxu0 0.0
        %1488 = vmatpush1.msra.mxu0 0.0
        %1489 = vmatprep.subr.mxu0 0.0
        %1490 = vmatpush1.msra.mxu0 0.0
        %1491 = vmatprep.subr.mxu0 0.0
        %1492 = vmatpush1.msra.mxu0 0.0
        %1493 = vmatprep.subr.mxu0 0.0
        %1494 = vmatpush1.msra.mxu0 0.0
        %1495 = vmatprep.subr.mxu0 0.0
        %1496 = vmatpush1.msra.mxu0 0.0
        %1497 = vmatprep.subr.mxu0 0.0
        %1498 = vmatpush1.msra.mxu0 0.0
        %1499 = vmatprep.subr.mxu0 0.0
        %1500 = vmatpush1.msra.mxu0 0.0
        %1501 = vmatprep.subr.mxu0 0.0
        %1502 = vmatpush1.msra.mxu0 0.0
        %1503 = vmatprep.subr.mxu0 0.0
        %1504 = vmatpush1.msra.mxu0 0.0
        %1505 = vmatprep.subr.mxu0 0.0
        %1506 = vmatpush1.msra.mxu0 0.0
        %1507 = vmatprep.subr.mxu0 0.0
        %1508 = vmatpush1.msra.mxu0 0.0
        %1509 = vmatprep.subr.mxu0 0.0
        %1510 = vmatpush1.msra.mxu0 0.0
        %1511 = vmatprep.subr.mxu0 0.0
        %1512 = vmatpush1.msra.mxu0 0.0
        %1513 = vmatprep.subr.mxu0 0.0
        %1514 = vmatpush1.msra.mxu0 0.0
        %1515 = vmatprep.subr.mxu0 0.0
        %1516 = vmatpush1.msra.mxu0 0.0
        %1517 = vmatprep.subr.mxu0 0.0
        %1518 = vmatpush1.msra.mxu0 0.0
        %1519 = vmatprep.mubr.f32.mxu0 0.0
        %1520 = vmatmul.mubr.f32.gmra.mrb[0].mxu0 %v336
        %v1521 = vpop.f32.mrb[0].mxu0
        %v1522 = vadd.f32 0.0, %v1521
        %v1523 = vpop.f32.mrb[0].mxu0
        %1524 = vmatprep.mubr.f32.mxu0 0.0
        %1525 = vmatmul.mubr.f32.gmra.mrb[0].mxu0 %v337
        %v1526 = vpop.f32.mrb[0].mxu0
        %v1527 = vadd.f32 0.0, %v1526
        %v1528 = vpop.f32.mrb[0].mxu0
        %1529 = vdwg.mxu0
        %1530 = vmatprep.subr.mxu0 0.0
        %1531 = vmatpush1.msra.mxu0 %v1107
        %1532 = vmatprep.subr.mxu0 0.0
        %1533 = vmatpush1.msra.mxu0 %v1108
        %1534 = vmatprep.subr.mxu0 0.0
        %1535 = vmatpush1.msra.mxu0 %v1109
        %1536 = vmatprep.subr.mxu0 0.0
        %1537 = vmatpush1.msra.mxu0 %v1110
        %1538 = vmatprep.subr.mxu0 0.0
        %1539 = vmatpush1.msra.mxu0 %v1111
        %1540 = vmatprep.subr.mxu0 0.0
        %1541 = vmatpush1.msra.mxu0 %v1112
        %1542 = vmatprep.subr.mxu0 0.0
        %1543 = vmatpush1.msra.mxu0 %v1113
        %1544 = vmatprep.subr.mxu0 0.0
        %1545 = vmatpush1.msra.mxu0 %v1114
        %1546 = vmatprep.subr.mxu0 0.0
        %1547 = vmatpush1.msra.mxu0 %v1115
        %1548 = vmatprep.subr.mxu0 0.0
        %1549 = vmatpush1.msra.mxu0 %v1116
        %1550 = vmatprep.subr.mxu0 0.0
        %1551 = vmatpush1.msra.mxu0 %v1117
        %1552 = vmatprep.subr.mxu0 0.0
        %1553 = vmatpush1.msra.mxu0 %v1118
        %1554 = vmatprep.subr.mxu0 0.0
        %1555 = vmatpush1.msra.mxu0 %v1119
        %1556 = vmatprep.subr.mxu0 0.0
        %1557 = vmatpush1.msra.mxu0 %v1120
        %1558 = vmatprep.subr.mxu0 0.0
        %1559 = vmatpush1.msra.mxu0 %v1121
        %1560 = vmatprep.subr.mxu0 0.0
        %1561 = vmatpush1.msra.mxu0 %v1122
        %1562 = vmatprep.subr.mxu0 0.0
        %1563 = vmatpush1.msra.mxu0 0.0
        %1564 = vmatprep.subr.mxu0 0.0
        %1565 = vmatpush1.msra.mxu0 0.0
        %1566 = vmatprep.subr.mxu0 0.0
        %1567 = vmatpush1.msra.mxu0 0.0
        %1568 = vmatprep.subr.mxu0 0.0
        %1569 = vmatpush1.msra.mxu0 0.0
        %1570 = vmatprep.subr.mxu0 0.0
        %1571 = vmatpush1.msra.mxu0 0.0
        %1572 = vmatprep.subr.mxu0 0.0
        %1573 = vmatpush1.msra.mxu0 0.0
        %1574 = vmatprep.subr.mxu0 0.0
        %1575 = vmatpush1.msra.mxu0 0.0
        %1576 = vmatprep.subr.mxu0 0.0
        %1577 = vmatpush1.msra.mxu0 0.0
        %1578 = vmatprep.subr.mxu0 0.0
        %1579 = vmatpush1.msra.mxu0 0.0
        %1580 = vmatprep.subr.mxu0 0.0
        %1581 = vmatpush1.msra.mxu0 0.0
        %1582 = vmatprep.subr.mxu0 0.0
        %1583 = vmatpush1.msra.mxu0 0.0
        %1584 = vmatprep.subr.mxu0 0.0
        %1585 = vmatpush1.msra.mxu0 0.0
        %1586 = vmatprep.subr.mxu0 0.0
        %1587 = vmatpush1.msra.mxu0 0.0
        %1588 = vmatprep.subr.mxu0 0.0
        %1589 = vmatpush1.msra.mxu0 0.0
        %1590 = vmatprep.subr.mxu0 0.0
        %1591 = vmatpush1.msra.mxu0 0.0
        %1592 = vmatprep.subr.mxu0 0.0
        %1593 = vmatpush1.msra.mxu0 0.0
        %1594 = vmatprep.mubr.f32.mxu0 0.0
        %1595 = vmatmul.mubr.f32.gmra.mrb[0].mxu0 %v336
        %v1596 = vpop.f32.mrb[0].mxu0
        %v1597 = vadd.f32 0.0, %v1596
        %v1598 = vpop.f32.mrb[0].mxu0
        %1599 = vmatprep.mubr.f32.mxu0 0.0
        %1600 = vmatmul.mubr.f32.gmra.mrb[0].mxu0 %v337
        %v1601 = vpop.f32.mrb[0].mxu0
        %v1602 = vadd.f32 0.0, %v1601
        %v1603 = vpop.f32.mrb[0].mxu0
        %1604 = vdwg.mxu0
        %1605 = vmatprep.subr.mxu0 0.0
        %1606 = vmatpush1.msra.mxu0 %v1123
        %1607 = vmatprep.subr.mxu0 0.0
        %1608 = vmatpush1.msra.mxu0 %v1124
        %1609 = vmatprep.subr.mxu0 0.0
        %1610 = vmatpush1.msra.mxu0 %v1125
        %1611 = vmatprep.subr.mxu0 0.0
        %1612 = vmatpush1.msra.mxu0 %v1126
        %1613 = vmatprep.subr.mxu0 0.0
        %1614 = vmatpush1.msra.mxu0 %v1127
        %1615 = vmatprep.subr.mxu0 0.0
        %1616 = vmatpush1.msra.mxu0 %v1128
        %1617 = vmatprep.subr.mxu0 0.0
        %1618 = vmatpush1.msra.mxu0 %v1129
        %1619 = vmatprep.subr.mxu0 0.0
        %1620 = vmatpush1.msra.mxu0 %v1130
        %1621 = vmatprep.subr.mxu0 0.0
        %1622 = vmatpush1.msra.mxu0 %v1131
        %1623 = vmatprep.subr.mxu0 0.0
        %1624 = vmatpush1.msra.mxu0 %v1132
        %1625 = vmatprep.subr.mxu0 0.0
        %1626 = vmatpush1.msra.mxu0 %v1133
        %1627 = vmatprep.subr.mxu0 0.0
        %1628 = vmatpush1.msra.mxu0 %v1134
        %1629 = vmatprep.subr.mxu0 0.0
        %1630 = vmatpush1.msra.mxu0 %v1135
        %1631 = vmatprep.subr.mxu0 0.0
        %1632 = vmatpush1.msra.mxu0 %v1136
        %1633 = vmatprep.subr.mxu0 0.0
        %1634 = vmatpush1.msra.mxu0 %v1137
        %1635 = vmatprep.subr.mxu0 0.0
        %1636 = vmatpush1.msra.mxu0 %v1138
        %1637 = vmatprep.subr.mxu0 0.0
        %1638 = vmatpush1.msra.mxu0 0.0
        %1639 = vmatprep.subr.mxu0 0.0
        %1640 = vmatpush1.msra.mxu0 0.0
        %1641 = vmatprep.subr.mxu0 0.0
        %1642 = vmatpush1.msra.mxu0 0.0
        %1643 = vmatprep.subr.mxu0 0.0
        %1644 = vmatpush1.msra.mxu0 0.0
        %1645 = vmatprep.subr.mxu0 0.0
        %1646 = vmatpush1.msra.mxu0 0.0
        %1647 = vmatprep.subr.mxu0 0.0
        %1648 = vmatpush1.msra.mxu0 0.0
        %1649 = vmatprep.subr.mxu0 0.0
        %1650 = vmatpush1.msra.mxu0 0.0
        %1651 = vmatprep.subr.mxu0 0.0
        %1652 = vmatpush1.msra.mxu0 0.0
        %1653 = vmatprep.subr.mxu0 0.0
        %1654 = vmatpush1.msra.mxu0 0.0
        %1655 = vmatprep.subr.mxu0 0.0
        %1656 = vmatpush1.msra.mxu0 0.0
        %1657 = vmatprep.subr.mxu0 0.0
        %1658 = vmatpush1.msra.mxu0 0.0
        %1659 = vmatprep.subr.mxu0 0.0
        %1660 = vmatpush1.msra.mxu0 0.0
        %1661 = vmatprep.subr.mxu0 0.0
        %1662 = vmatpush1.msra.mxu0 0.0
        %1663 = vmatprep.subr.mxu0 0.0
        %1664 = vmatpush1.msra.mxu0 0.0
        %1665 = vmatprep.subr.mxu0 0.0
        %1666 = vmatpush1.msra.mxu0 0.0
        %1667 = vmatprep.subr.mxu0 0.0
        %1668 = vmatpush1.msra.mxu0 0.0
        %1669 = vmatprep.mubr.f32.mxu0 0.0
        %1670 = vmatmul.mubr.f32.gmra.mrb[0].mxu0 %v336
        %v1671 = vpop.f32.mrb[0].mxu0
        %v1672 = vadd.f32 0.0, %v1671
        %v1673 = vpop.f32.mrb[0].mxu0
        %1674 = vmatprep.mubr.f32.mxu0 0.0
        %1675 = vmatmul.mubr.f32.gmra.mrb[0].mxu0 %v337
        %v1676 = vpop.f32.mrb[0].mxu0
        %v1677 = vadd.f32 0.0, %v1676
        %v1678 = vpop.f32.mrb[0].mxu0
        %1679 = vdwg.mxu0
        %1680 = vmatprep.subr.mxu0 0.0
        %1681 = vmatpush1.msra.mxu0 %v1139
        %1682 = vmatprep.subr.mxu0 0.0
        %1683 = vmatpush1.msra.mxu0 %v1140
        %1684 = vmatprep.subr.mxu0 0.0
        %1685 = vmatpush1.msra.mxu0 %v1141
        %1686 = vmatprep.subr.mxu0 0.0
        %1687 = vmatpush1.msra.mxu0 %v1142
        %1688 = vmatprep.subr.mxu0 0.0
        %1689 = vmatpush1.msra.mxu0 %v1143
        %1690 = vmatprep.subr.mxu0 0.0
        %1691 = vmatpush1.msra.mxu0 %v1144
        %1692 = vmatprep.subr.mxu0 0.0
        %1693 = vmatpush1.msra.mxu0 %v1145
        %1694 = vmatprep.subr.mxu0 0.0
        %1695 = vmatpush1.msra.mxu0 %v1146
        %1696 = vmatprep.subr.mxu0 0.0
        %1697 = vmatpush1.msra.mxu0 %v1147
        %1698 = vmatprep.subr.mxu0 0.0
        %1699 = vmatpush1.msra.mxu0 %v1148
        %1700 = vmatprep.subr.mxu0 0.0
        %1701 = vmatpush1.msra.mxu0 %v1149
        %1702 = vmatprep.subr.mxu0 0.0
        %1703 = vmatpush1.msra.mxu0 %v1150
        %1704 = vmatprep.subr.mxu0 0.0
        %1705 = vmatpush1.msra.mxu0 %v1151
        %1706 = vmatprep.subr.mxu0 0.0
        %1707 = vmatpush1.msra.mxu0 %v1152
        %1708 = vmatprep.subr.mxu0 0.0
        %1709 = vmatpush1.msra.mxu0 %v1153
        %1710 = vmatprep.subr.mxu0 0.0
        %1711 = vmatpush1.msra.mxu0 %v1154
        %1712 = vmatprep.subr.mxu0 0.0
        %1713 = vmatpush1.msra.mxu0 0.0
        %1714 = vmatprep.subr.mxu0 0.0
        %1715 = vmatpush1.msra.mxu0 0.0
        %1716 = vmatprep.subr.mxu0 0.0
        %1717 = vmatpush1.msra.mxu0 0.0
        %1718 = vmatprep.subr.mxu0 0.0
        %1719 = vmatpush1.msra.mxu0 0.0
        %1720 = vmatprep.subr.mxu0 0.0
        %1721 = vmatpush1.msra.mxu0 0.0
        %1722 = vmatprep.subr.mxu0 0.0
        %1723 = vmatpush1.msra.mxu0 0.0
        %1724 = vmatprep.subr.mxu0 0.0
        %1725 = vmatpush1.msra.mxu0 0.0
        %1726 = vmatprep.subr.mxu0 0.0
        %1727 = vmatpush1.msra.mxu0 0.0
        %1728 = vmatprep.subr.mxu0 0.0
        %1729 = vmatpush1.msra.mxu0 0.0
        %1730 = vmatprep.subr.mxu0 0.0
        %1731 = vmatpush1.msra.mxu0 0.0
        %1732 = vmatprep.subr.mxu0 0.0
        %1733 = vmatpush1.msra.mxu0 0.0
        %1734 = vmatprep.subr.mxu0 0.0
        %1735 = vmatpush1.msra.mxu0 0.0
        %1736 = vmatprep.subr.mxu0 0.0
        %1737 = vmatpush1.msra.mxu0 0.0
        %1738 = vmatprep.subr.mxu0 0.0
        %1739 = vmatpush1.msra.mxu0 0.0
        %1740 = vmatprep.subr.mxu0 0.0
        %1741 = vmatpush1.msra.mxu0 0.0
        %1742 = vmatprep.subr.mxu0 0.0
        %1743 = vmatpush1.msra.mxu0 0.0
        %1744 = vmatprep.mubr.f32.mxu0 0.0
        %1745 = vmatmul.mubr.f32.gmra.mrb[0].mxu0 %v336
        %v1746 = vpop.f32.mrb[0].mxu0
        %v1747 = vadd.f32 0.0, %v1746
        %v1748 = vpop.f32.mrb[0].mxu0
        %1749 = vmatprep.mubr.f32.mxu0 0.0
        %1750 = vmatmul.mubr.f32.gmra.mrb[0].mxu0 %v337
        %v1751 = vpop.f32.mrb[0].mxu0
        %v1752 = vadd.f32 0.0, %v1751
        %v1753 = vpop.f32.mrb[0].mxu0
        %1754 = vdwg.mxu0
        %v1755 = vld [vmem:[%s5] sm:$0xff]
        %v1756 = vld [vmem:[%s5 + $0x8] sm:$0xff]
        %v1757 = vld [vmem:[%s5 + $0x10] sm:$0xff]
        %v1758 = vld [vmem:[%s5 + $0x18] sm:$0xff]
        %v1759 = vld [vmem:[%s5 + $0x20] sm:$0xff]
        %v1760 = vld [vmem:[%s5 + $0x28] sm:$0xff]
        %v1761 = vld [vmem:[%s5 + $0x30] sm:$0xff]
        %v1762 = vld [vmem:[%s5 + $0x38] sm:$0xff]
        %v1763 = vld [vmem:[%s5 + $0x40] sm:$0xff]
        %v1764 = vld [vmem:[%s5 + $0x48] sm:$0xff]
        %v1765 = vld [vmem:[%s5 + $0x50] sm:$0xff]
        %v1766 = vld [vmem:[%s5 + $0x58] sm:$0xff]
        %v1767 = vld [vmem:[%s5 + $0x60] sm:$0xff]
        %v1768 = vld [vmem:[%s5 + $0x68] sm:$0xff]
        %v1769 = vld [vmem:[%s5 + $0x70] sm:$0xff]
        %v1770 = vld [vmem:[%s5 + $0x78] sm:$0xff]
        %v1771 = vld [vmem:[%s5 + $0x80] sm:$0xff]
        %v1772 = vld [vmem:[%s5 + $0x88] sm:$0xff]
        %v1773 = vld [vmem:[%s5 + $0x90] sm:$0xff]
        %v1774 = vld [vmem:[%s5 + $0x98] sm:$0xff]
        %v1775 = vld [vmem:[%s5 + $0xa0] sm:$0xff]
        %v1776 = vld [vmem:[%s5 + $0xa8] sm:$0xff]
        %v1777 = vld [vmem:[%s5 + $0xb0] sm:$0xff]
        %v1778 = vld [vmem:[%s5 + $0xb8] sm:$0xff]
        %v1779 = vld [vmem:[%s5 + $0xc0] sm:$0xff]
        %v1780 = vld [vmem:[%s5 + $0xc8] sm:$0xff]
        %v1781 = vld [vmem:[%s5 + $0xd0] sm:$0xff]
        %v1782 = vld [vmem:[%s5 + $0xd8] sm:$0xff]
        %v1783 = vld [vmem:[%s5 + $0xe0] sm:$0xff]
        %v1784 = vld [vmem:[%s5 + $0xe8] sm:$0xff]
        %v1785 = vld [vmem:[%s5 + $0xf0] sm:$0xff]
        %v1786 = vld [vmem:[%s5 + $0xf8] sm:$0xff]
        %v1787 = vld [vmem:[%s5 + $0x100] sm:$0xff]
        %v1788 = vld [vmem:[%s5 + $0x108] sm:$0xff]
        %v1789 = vld [vmem:[%s5 + $0x110] sm:$0xff]
        %v1790 = vld [vmem:[%s5 + $0x118] sm:$0xff]
        %v1791 = vld [vmem:[%s5 + $0x120] sm:$0xff]
        %v1792 = vld [vmem:[%s5 + $0x128] sm:$0xff]
        %v1793 = vld [vmem:[%s5 + $0x130] sm:$0xff]
        %v1794 = vld [vmem:[%s5 + $0x138] sm:$0xff]
        %v1795 = vld [vmem:[%s5 + $0x140] sm:$0xff]
        %v1796 = vld [vmem:[%s5 + $0x148] sm:$0xff]
        %v1797 = vld [vmem:[%s5 + $0x150] sm:$0xff]
        %v1798 = vld [vmem:[%s5 + $0x158] sm:$0xff]
        %v1799 = vld [vmem:[%s5 + $0x160] sm:$0xff]
        %v1800 = vld [vmem:[%s5 + $0x168] sm:$0xff]
        %v1801 = vld [vmem:[%s5 + $0x170] sm:$0xff]
        %v1802 = vld [vmem:[%s5 + $0x178] sm:$0xff]
        %v1803 = vld [vmem:[%s5 + $0x180] sm:$0xff]
        %v1804 = vld [vmem:[%s5 + $0x188] sm:$0xff]
        %v1805 = vld [vmem:[%s5 + $0x190] sm:$0xff]
        %v1806 = vld [vmem:[%s5 + $0x198] sm:$0xff]
        %v1807 = vld [vmem:[%s5 + $0x1a0] sm:$0xff]
        %v1808 = vld [vmem:[%s5 + $0x1a8] sm:$0xff]
        %v1809 = vld [vmem:[%s5 + $0x1b0] sm:$0xff]
        %v1810 = vld [vmem:[%s5 + $0x1b8] sm:$0xff]
        %v1811 = vld [vmem:[%s5 + $0x1c0] sm:$0xff]
        %v1812 = vld [vmem:[%s5 + $0x1c8] sm:$0xff]
        %v1813 = vld [vmem:[%s5 + $0x1d0] sm:$0xff]
        %v1814 = vld [vmem:[%s5 + $0x1d8] sm:$0xff]
        %v1815 = vld [vmem:[%s5 + $0x1e0] sm:$0xff]
        %v1816 = vld [vmem:[%s5 + $0x1e8] sm:$0xff]
        %v1817 = vld [vmem:[%s5 + $0x1f0] sm:$0xff]
        %v1818 = vld [vmem:[%s5 + $0x1f8] sm:$0xff]
        %v1819 = vld [vmem:[%s5 + $0x200] sm:$0xff]
        %v1820 = vld [vmem:[%s5 + $0x208] sm:$0xff]
        %v1821 = vld [vmem:[%s5 + $0x210] sm:$0xff]
        %v1822 = vld [vmem:[%s5 + $0x218] sm:$0xff]
        %v1823 = vld [vmem:[%s5 + $0x220] sm:$0xff]
        %v1824 = vld [vmem:[%s5 + $0x228] sm:$0xff]
        %v1825 = vld [vmem:[%s5 + $0x230] sm:$0xff]
        %v1826 = vld [vmem:[%s5 + $0x238] sm:$0xff]
        %v1827 = vld [vmem:[%s5 + $0x240] sm:$0xff]
        %v1828 = vld [vmem:[%s5 + $0x248] sm:$0xff]
        %v1829 = vld [vmem:[%s5 + $0x250] sm:$0xff]
        %v1830 = vld [vmem:[%s5 + $0x258] sm:$0xff]
        %v1831 = vld [vmem:[%s5 + $0x260] sm:$0xff]
        %v1832 = vld [vmem:[%s5 + $0x268] sm:$0xff]
        %v1833 = vld [vmem:[%s5 + $0x270] sm:$0xff]
        %v1834 = vld [vmem:[%s5 + $0x278] sm:$0xff]
        %v1835 = vld [vmem:[%s5 + $0x280] sm:$0xff]
        %v1836 = vld [vmem:[%s5 + $0x288] sm:$0xff]
        %v1837 = vld [vmem:[%s5 + $0x290] sm:$0xff]
        %v1838 = vld [vmem:[%s5 + $0x298] sm:$0xff]
        %v1839 = vld [vmem:[%s5 + $0x2a0] sm:$0xff]
        %v1840 = vld [vmem:[%s5 + $0x2a8] sm:$0xff]
        %v1841 = vld [vmem:[%s5 + $0x2b0] sm:$0xff]
        %v1842 = vld [vmem:[%s5 + $0x2b8] sm:$0xff]
        %v1843 = vld [vmem:[%s5 + $0x2c0] sm:$0xff]
        %v1844 = vld [vmem:[%s5 + $0x2c8] sm:$0xff]
        %v1845 = vld [vmem:[%s5 + $0x2d0] sm:$0xff]
        %v1846 = vld [vmem:[%s5 + $0x2d8] sm:$0xff]
        %v1847 = vld [vmem:[%s5 + $0x2e0] sm:$0xff]
        %v1848 = vld [vmem:[%s5 + $0x2e8] sm:$0xff]
        %v1849 = vld [vmem:[%s5 + $0x2f0] sm:$0xff]
        %v1850 = vld [vmem:[%s5 + $0x2f8] sm:$0xff]
        %v1851 = vld [vmem:[%s5 + $0x300] sm:$0xff]
        %v1852 = vld [vmem:[%s5 + $0x308] sm:$0xff]
        %v1853 = vld [vmem:[%s5 + $0x310] sm:$0xff]
        %v1854 = vld [vmem:[%s5 + $0x318] sm:$0xff]
        %v1855 = vld [vmem:[%s5 + $0x320] sm:$0xff]
        %v1856 = vld [vmem:[%s5 + $0x328] sm:$0xff]
        %v1857 = vld [vmem:[%s5 + $0x330] sm:$0xff]
        %v1858 = vld [vmem:[%s5 + $0x338] sm:$0xff]
        %v1859 = vld [vmem:[%s5 + $0x340] sm:$0xff]
        %v1860 = vld [vmem:[%s5 + $0x348] sm:$0xff]
        %v1861 = vld [vmem:[%s5 + $0x350] sm:$0xff]
        %v1862 = vld [vmem:[%s5 + $0x358] sm:$0xff]
        %v1863 = vld [vmem:[%s5 + $0x360] sm:$0xff]
        %v1864 = vld [vmem:[%s5 + $0x368] sm:$0xff]
        %v1865 = vld [vmem:[%s5 + $0x370] sm:$0xff]
        %v1866 = vld [vmem:[%s5 + $0x378] sm:$0xff]
        %v1867 = vld [vmem:[%s5 + $0x380] sm:$0xff]
        %v1868 = vld [vmem:[%s5 + $0x388] sm:$0xff]
        %v1869 = vld [vmem:[%s5 + $0x390] sm:$0xff]
        %v1870 = vld [vmem:[%s5 + $0x398] sm:$0xff]
        %v1871 = vld [vmem:[%s5 + $0x3a0] sm:$0xff]
        %v1872 = vld [vmem:[%s5 + $0x3a8] sm:$0xff]
        %v1873 = vld [vmem:[%s5 + $0x3b0] sm:$0xff]
        %v1874 = vld [vmem:[%s5 + $0x3b8] sm:$0xff]
        %v1875 = vld [vmem:[%s5 + $0x3c0] sm:$0xff]
        %v1876 = vld [vmem:[%s5 + $0x3c8] sm:$0xff]
        %v1877 = vld [vmem:[%s5 + $0x3d0] sm:$0xff]
        %v1878 = vld [vmem:[%s5 + $0x3d8] sm:$0xff]
        %v1879 = vld [vmem:[%s5 + $0x3e0] sm:$0xff]
        %v1880 = vld [vmem:[%s5 + $0x3e8] sm:$0xff]
        %v1881 = vld [vmem:[%s5 + $0x3f0] sm:$0xff]
        %v1882 = vld [vmem:[%s5 + $0x3f8] sm:$0xff]
        %1883 = vmatprep.subr.mxu0 0.0
        %1884 = vmatpush1.msra.mxu0 %v1755
        %1885 = vmatprep.subr.mxu0 0.0
        %1886 = vmatpush1.msra.mxu0 %v1756
        %1887 = vmatprep.subr.mxu0 0.0
        %1888 = vmatpush1.msra.mxu0 %v1757
        %1889 = vmatprep.subr.mxu0 0.0
        %1890 = vmatpush1.msra.mxu0 %v1758
        %1891 = vmatprep.subr.mxu0 0.0
        %1892 = vmatpush1.msra.mxu0 %v1759
        %1893 = vmatprep.subr.mxu0 0.0
        %1894 = vmatpush1.msra.mxu0 %v1760
        %1895 = vmatprep.subr.mxu0 0.0
        %1896 = vmatpush1.msra.mxu0 %v1761
        %1897 = vmatprep.subr.mxu0 0.0
        %1898 = vmatpush1.msra.mxu0 %v1762
        %1899 = vmatprep.subr.mxu0 0.0
        %1900 = vmatpush1.msra.mxu0 %v1763
        %1901 = vmatprep.subr.mxu0 0.0
        %1902 = vmatpush1.msra.mxu0 %v1764
        %1903 = vmatprep.subr.mxu0 0.0
        %1904 = vmatpush1.msra.mxu0 %v1765
        %1905 = vmatprep.subr.mxu0 0.0
        %1906 = vmatpush1.msra.mxu0 %v1766
        %1907 = vmatprep.subr.mxu0 0.0
        %1908 = vmatpush1.msra.mxu0 %v1767
        %1909 = vmatprep.subr.mxu0 0.0
        %1910 = vmatpush1.msra.mxu0 %v1768
        %1911 = vmatprep.subr.mxu0 0.0
        %1912 = vmatpush1.msra.mxu0 %v1769
        %1913 = vmatprep.subr.mxu0 0.0
        %1914 = vmatpush1.msra.mxu0 %v1770
        %1915 = vmatprep.subr.mxu0 0.0
        %1916 = vmatpush1.msra.mxu0 0.0
        %1917 = vmatprep.subr.mxu0 0.0
        %1918 = vmatpush1.msra.mxu0 0.0
        %1919 = vmatprep.subr.mxu0 0.0
        %1920 = vmatpush1.msra.mxu0 0.0
        %1921 = vmatprep.subr.mxu0 0.0
        %1922 = vmatpush1.msra.mxu0 0.0
        %1923 = vmatprep.subr.mxu0 0.0
        %1924 = vmatpush1.msra.mxu0 0.0
        %1925 = vmatprep.subr.mxu0 0.0
        %1926 = vmatpush1.msra.mxu0 0.0
        %1927 = vmatprep.subr.mxu0 0.0
        %1928 = vmatpush1.msra.mxu0 0.0
        %1929 = vmatprep.subr.mxu0 0.0
        %1930 = vmatpush1.msra.mxu0 0.0
        %1931 = vmatprep.subr.mxu0 0.0
        %1932 = vmatpush1.msra.mxu0 0.0
        %1933 = vmatprep.subr.mxu0 0.0
        %1934 = vmatpush1.msra.mxu0 0.0
        %1935 = vmatprep.subr.mxu0 0.0
        %1936 = vmatpush1.msra.mxu0 0.0
        %1937 = vmatprep.subr.mxu0 0.0
        %1938 = vmatpush1.msra.mxu0 0.0
        %1939 = vmatprep.subr.mxu0 0.0
        %1940 = vmatpush1.msra.mxu0 0.0
        %1941 = vmatprep.subr.mxu0 0.0
        %1942 = vmatpush1.msra.mxu0 0.0
        %1943 = vmatprep.subr.mxu0 0.0
        %1944 = vmatpush1.msra.mxu0 0.0
        %1945 = vmatprep.subr.mxu0 0.0
        %1946 = vmatpush1.msra.mxu0 0.0
        %1947 = vmatprep.mubr.f32.mxu0 0.0
        %1948 = vmatmul.mubr.f32.gmra.mrb[0].mxu0 %v336
        %v1949 = vpop.f32.mrb[0].mxu0
        %v1950 = vadd.f32 0.0, %v1949
        %v1951 = vpop.f32.mrb[0].mxu0
        %1952 = vmatprep.mubr.f32.mxu0 0.0
        %1953 = vmatmul.mubr.f32.gmra.mrb[0].mxu0 %v337
        %v1954 = vpop.f32.mrb[0].mxu0
        %v1955 = vadd.f32 0.0, %v1954
        %v1956 = vpop.f32.mrb[0].mxu0
        %1957 = vdwg.mxu0
        %1958 = vmatprep.subr.mxu0 0.0
        %1959 = vmatpush1.msra.mxu0 %v1771
        %1960 = vmatprep.subr.mxu0 0.0
        %1961 = vmatpush1.msra.mxu0 %v1772
        %1962 = vmatprep.subr.mxu0 0.0
        %1963 = vmatpush1.msra.mxu0 %v1773
        %1964 = vmatprep.subr.mxu0 0.0
        %1965 = vmatpush1.msra.mxu0 %v1774
        %1966 = vmatprep.subr.mxu0 0.0
        %1967 = vmatpush1.msra.mxu0 %v1775
        %1968 = vmatprep.subr.mxu0 0.0
        %1969 = vmatpush1.msra.mxu0 %v1776
        %1970 = vmatprep.subr.mxu0 0.0
        %1971 = vmatpush1.msra.mxu0 %v1777
        %1972 = vmatprep.subr.mxu0 0.0
        %1973 = vmatpush1.msra.mxu0 %v1778
        %1974 = vmatprep.subr.mxu0 0.0
        %1975 = vmatpush1.msra.mxu0 %v1779
        %1976 = vmatprep.subr.mxu0 0.0
        %1977 = vmatpush1.msra.mxu0 %v1780
        %1978 = vmatprep.subr.mxu0 0.0
        %1979 = vmatpush1.msra.mxu0 %v1781
        %1980 = vmatprep.subr.mxu0 0.0
        %1981 = vmatpush1.msra.mxu0 %v1782
        %1982 = vmatprep.subr.mxu0 0.0
        %1983 = vmatpush1.msra.mxu0 %v1783
        %1984 = vmatprep.subr.mxu0 0.0
        %1985 = vmatpush1.msra.mxu0 %v1784
        %1986 = vmatprep.subr.mxu0 0.0
        %1987 = vmatpush1.msra.mxu0 %v1785
        %1988 = vmatprep.subr.mxu0 0.0
        %1989 = vmatpush1.msra.mxu0 %v1786
        %1990 = vmatprep.subr.mxu0 0.0
        %1991 = vmatpush1.msra.mxu0 0.0
        %1992 = vmatprep.subr.mxu0 0.0
        %1993 = vmatpush1.msra.mxu0 0.0
        %1994 = vmatprep.subr.mxu0 0.0
        %1995 = vmatpush1.msra.mxu0 0.0
        %1996 = vmatprep.subr.mxu0 0.0
        %1997 = vmatpush1.msra.mxu0 0.0
        %1998 = vmatprep.subr.mxu0 0.0
        %1999 = vmatpush1.msra.mxu0 0.0
        %2000 = vmatprep.subr.mxu0 0.0
        %2001 = vmatpush1.msra.mxu0 0.0
        %2002 = vmatprep.subr.mxu0 0.0
        %2003 = vmatpush1.msra.mxu0 0.0
        %2004 = vmatprep.subr.mxu0 0.0
        %2005 = vmatpush1.msra.mxu0 0.0
        %2006 = vmatprep.subr.mxu0 0.0
        %2007 = vmatpush1.msra.mxu0 0.0
        %2008 = vmatprep.subr.mxu0 0.0
        %2009 = vmatpush1.msra.mxu0 0.0
        %2010 = vmatprep.subr.mxu0 0.0
        %2011 = vmatpush1.msra.mxu0 0.0
        %2012 = vmatprep.subr.mxu0 0.0
        %2013 = vmatpush1.msra.mxu0 0.0
        %2014 = vmatprep.subr.mxu0 0.0
        %2015 = vmatpush1.msra.mxu0 0.0
        %2016 = vmatprep.subr.mxu0 0.0
        %2017 = vmatpush1.msra.mxu0 0.0
        %2018 = vmatprep.subr.mxu0 0.0
        %2019 = vmatpush1.msra.mxu0 0.0
        %2020 = vmatprep.subr.mxu0 0.0
        %2021 = vmatpush1.msra.mxu0 0.0
        %2022 = vmatprep.mubr.f32.mxu0 0.0
        %2023 = vmatmul.mubr.f32.gmra.mrb[0].mxu0 %v336
        %v2024 = vpop.f32.mrb[0].mxu0
        %v2025 = vadd.f32 0.0, %v2024
        %v2026 = vpop.f32.mrb[0].mxu0
        %2027 = vmatprep.mubr.f32.mxu0 0.0
        %2028 = vmatmul.mubr.f32.gmra.mrb[0].mxu0 %v337
        %v2029 = vpop.f32.mrb[0].mxu0
        %v2030 = vadd.f32 0.0, %v2029
        %v2031 = vpop.f32.mrb[0].mxu0
        %2032 = vdwg.mxu0
        %2033 = vmatprep.subr.mxu0 0.0
        %2034 = vmatpush1.msra.mxu0 %v1787
        %2035 = vmatprep.subr.mxu0 0.0
        %2036 = vmatpush1.msra.mxu0 %v1788
        %2037 = vmatprep.subr.mxu0 0.0
        %2038 = vmatpush1.msra.mxu0 %v1789
        %2039 = vmatprep.subr.mxu0 0.0
        %2040 = vmatpush1.msra.mxu0 %v1790
        %2041 = vmatprep.subr.mxu0 0.0
        %2042 = vmatpush1.msra.mxu0 %v1791
        %2043 = vmatprep.subr.mxu0 0.0
        %2044 = vmatpush1.msra.mxu0 %v1792
        %2045 = vmatprep.subr.mxu0 0.0
        %2046 = vmatpush1.msra.mxu0 %v1793
        %2047 = vmatprep.subr.mxu0 0.0
        %2048 = vmatpush1.msra.mxu0 %v1794
        %2049 = vmatprep.subr.mxu0 0.0
        %2050 = vmatpush1.msra.mxu0 %v1795
        %2051 = vmatprep.subr.mxu0 0.0
        %2052 = vmatpush1.msra.mxu0 %v1796
        %2053 = vmatprep.subr.mxu0 0.0
        %2054 = vmatpush1.msra.mxu0 %v1797
        %2055 = vmatprep.subr.mxu0 0.0
        %2056 = vmatpush1.msra.mxu0 %v1798
        %2057 = vmatprep.subr.mxu0 0.0
        %2058 = vmatpush1.msra.mxu0 %v1799
        %2059 = vmatprep.subr.mxu0 0.0
        %2060 = vmatpush1.msra.mxu0 %v1800
        %2061 = vmatprep.subr.mxu0 0.0
        %2062 = vmatpush1.msra.mxu0 %v1801
        %2063 = vmatprep.subr.mxu0 0.0
        %2064 = vmatpush1.msra.mxu0 %v1802
        %2065 = vmatprep.subr.mxu0 0.0
        %2066 = vmatpush1.msra.mxu0 0.0
        %2067 = vmatprep.subr.mxu0 0.0
        %2068 = vmatpush1.msra.mxu0 0.0
        %2069 = vmatprep.subr.mxu0 0.0
        %2070 = vmatpush1.msra.mxu0 0.0
        %2071 = vmatprep.subr.mxu0 0.0
        %2072 = vmatpush1.msra.mxu0 0.0
        %2073 = vmatprep.subr.mxu0 0.0
        %2074 = vmatpush1.msra.mxu0 0.0
        %2075 = vmatprep.subr.mxu0 0.0
        %2076 = vmatpush1.msra.mxu0 0.0
        %2077 = vmatprep.subr.mxu0 0.0
        %2078 = vmatpush1.msra.mxu0 0.0
        %2079 = vmatprep.subr.mxu0 0.0
        %2080 = vmatpush1.msra.mxu0 0.0
        %2081 = vmatprep.subr.mxu0 0.0
        %2082 = vmatpush1.msra.mxu0 0.0
        %2083 = vmatprep.subr.mxu0 0.0
        %2084 = vmatpush1.msra.mxu0 0.0
        %2085 = vmatprep.subr.mxu0 0.0
        %2086 = vmatpush1.msra.mxu0 0.0
        %2087 = vmatprep.subr.mxu0 0.0
        %2088 = vmatpush1.msra.mxu0 0.0
        %2089 = vmatprep.subr.mxu0 0.0
        %2090 = vmatpush1.msra.mxu0 0.0
        %2091 = vmatprep.subr.mxu0 0.0
        %2092 = vmatpush1.msra.mxu0 0.0
        %2093 = vmatprep.subr.mxu0 0.0
        %2094 = vmatpush1.msra.mxu0 0.0
        %2095 = vmatprep.subr.mxu0 0.0
        %2096 = vmatpush1.msra.mxu0 0.0
        %2097 = vmatprep.mubr.f32.mxu0 0.0
        %2098 = vmatmul.mubr.f32.gmra.mrb[0].mxu0 %v336
        %v2099 = vpop.f32.mrb[0].mxu0
        %v2100 = vadd.f32 0.0, %v2099
        %v2101 = vpop.f32.mrb[0].mxu0
        %2102 = vmatprep.mubr.f32.mxu0 0.0
        %2103 = vmatmul.mubr.f32.gmra.mrb[0].mxu0 %v337
        %v2104 = vpop.f32.mrb[0].mxu0
        %v2105 = vadd.f32 0.0, %v2104
        %v2106 = vpop.f32.mrb[0].mxu0
        %2107 = vdwg.mxu0
        %2108 = vmatprep.subr.mxu0 0.0
        %2109 = vmatpush1.msra.mxu0 %v1803
        %2110 = vmatprep.subr.mxu0 0.0
        %2111 = vmatpush1.msra.mxu0 %v1804
        %2112 = vmatprep.subr.mxu0 0.0
        %2113 = vmatpush1.msra.mxu0 %v1805
        %2114 = vmatprep.subr.mxu0 0.0
        %2115 = vmatpush1.msra.mxu0 %v1806
        %2116 = vmatprep.subr.mxu0 0.0
        %2117 = vmatpush1.msra.mxu0 %v1807
        %2118 = vmatprep.subr.mxu0 0.0
        %2119 = vmatpush1.msra.mxu0 %v1808
        %2120 = vmatprep.subr.mxu0 0.0
        %2121 = vmatpush1.msra.mxu0 %v1809
        %2122 = vmatprep.subr.mxu0 0.0
        %2123 = vmatpush1.msra.mxu0 %v1810
        %2124 = vmatprep.subr.mxu0 0.0
        %2125 = vmatpush1.msra.mxu0 %v1811
        %2126 = vmatprep.subr.mxu0 0.0
        %2127 = vmatpush1.msra.mxu0 %v1812
        %2128 = vmatprep.subr.mxu0 0.0
        %2129 = vmatpush1.msra.mxu0 %v1813
        %2130 = vmatprep.subr.mxu0 0.0
        %2131 = vmatpush1.msra.mxu0 %v1814
        %2132 = vmatprep.subr.mxu0 0.0
        %2133 = vmatpush1.msra.mxu0 %v1815
        %2134 = vmatprep.subr.mxu0 0.0
        %2135 = vmatpush1.msra.mxu0 %v1816
        %2136 = vmatprep.subr.mxu0 0.0
        %2137 = vmatpush1.msra.mxu0 %v1817
        %2138 = vmatprep.subr.mxu0 0.0
        %2139 = vmatpush1.msra.mxu0 %v1818
        %2140 = vmatprep.subr.mxu0 0.0
        %2141 = vmatpush1.msra.mxu0 0.0
        %2142 = vmatprep.subr.mxu0 0.0
        %2143 = vmatpush1.msra.mxu0 0.0
        %2144 = vmatprep.subr.mxu0 0.0
        %2145 = vmatpush1.msra.mxu0 0.0
        %2146 = vmatprep.subr.mxu0 0.0
        %2147 = vmatpush1.msra.mxu0 0.0
        %2148 = vmatprep.subr.mxu0 0.0
        %2149 = vmatpush1.msra.mxu0 0.0
        %2150 = vmatprep.subr.mxu0 0.0
        %2151 = vmatpush1.msra.mxu0 0.0
        %2152 = vmatprep.subr.mxu0 0.0
        %2153 = vmatpush1.msra.mxu0 0.0
        %2154 = vmatprep.subr.mxu0 0.0
        %2155 = vmatpush1.msra.mxu0 0.0
        %2156 = vmatprep.subr.mxu0 0.0
        %2157 = vmatpush1.msra.mxu0 0.0
        %2158 = vmatprep.subr.mxu0 0.0
        %2159 = vmatpush1.msra.mxu0 0.0
        %2160 = vmatprep.subr.mxu0 0.0
        %2161 = vmatpush1.msra.mxu0 0.0
        %2162 = vmatprep.subr.mxu0 0.0
        %2163 = vmatpush1.msra.mxu0 0.0
        %2164 = vmatprep.subr.mxu0 0.0
        %2165 = vmatpush1.msra.mxu0 0.0
        %2166 = vmatprep.subr.mxu0 0.0
        %2167 = vmatpush1.msra.mxu0 0.0
        %2168 = vmatprep.subr.mxu0 0.0
        %2169 = vmatpush1.msra.mxu0 0.0
        %2170 = vmatprep.subr.mxu0 0.0
        %2171 = vmatpush1.msra.mxu0 0.0
        %2172 = vmatprep.mubr.f32.mxu0 0.0
        %2173 = vmatmul.mubr.f32.gmra.mrb[0].mxu0 %v336
        %v2174 = vpop.f32.mrb[0].mxu0
        %v2175 = vadd.f32 0.0, %v2174
        %v2176 = vpop.f32.mrb[0].mxu0
        %2177 = vmatprep.mubr.f32.mxu0 0.0
        %2178 = vmatmul.mubr.f32.gmra.mrb[0].mxu0 %v337
        %v2179 = vpop.f32.mrb[0].mxu0
        %v2180 = vadd.f32 0.0, %v2179
        %v2181 = vpop.f32.mrb[0].mxu0
        %2182 = vdwg.mxu0
        %2183 = vmatprep.subr.mxu0 0.0
        %2184 = vmatpush1.msra.mxu0 %v1819
        %2185 = vmatprep.subr.mxu0 0.0
        %2186 = vmatpush1.msra.mxu0 %v1820
        %2187 = vmatprep.subr.mxu0 0.0
        %2188 = vmatpush1.msra.mxu0 %v1821
        %2189 = vmatprep.subr.mxu0 0.0
        %2190 = vmatpush1.msra.mxu0 %v1822
        %2191 = vmatprep.subr.mxu0 0.0
        %2192 = vmatpush1.msra.mxu0 %v1823
        %2193 = vmatprep.subr.mxu0 0.0
        %2194 = vmatpush1.msra.mxu0 %v1824
        %2195 = vmatprep.subr.mxu0 0.0
        %2196 = vmatpush1.msra.mxu0 %v1825
        %2197 = vmatprep.subr.mxu0 0.0
        %2198 = vmatpush1.msra.mxu0 %v1826
        %2199 = vmatprep.subr.mxu0 0.0
        %2200 = vmatpush1.msra.mxu0 %v1827
        %2201 = vmatprep.subr.mxu0 0.0
        %2202 = vmatpush1.msra.mxu0 %v1828
        %2203 = vmatprep.subr.mxu0 0.0
        %2204 = vmatpush1.msra.mxu0 %v1829
        %2205 = vmatprep.subr.mxu0 0.0
        %2206 = vmatpush1.msra.mxu0 %v1830
        %2207 = vmatprep.subr.mxu0 0.0
        %2208 = vmatpush1.msra.mxu0 %v1831
        %2209 = vmatprep.subr.mxu0 0.0
        %2210 = vmatpush1.msra.mxu0 %v1832
        %2211 = vmatprep.subr.mxu0 0.0
        %2212 = vmatpush1.msra.mxu0 %v1833
        %2213 = vmatprep.subr.mxu0 0.0
        %2214 = vmatpush1.msra.mxu0 %v1834
        %2215 = vmatprep.subr.mxu0 0.0
        %2216 = vmatpush1.msra.mxu0 0.0
        %2217 = vmatprep.subr.mxu0 0.0
        %2218 = vmatpush1.msra.mxu0 0.0
        %2219 = vmatprep.subr.mxu0 0.0
        %2220 = vmatpush1.msra.mxu0 0.0
        %2221 = vmatprep.subr.mxu0 0.0
        %2222 = vmatpush1.msra.mxu0 0.0
        %2223 = vmatprep.subr.mxu0 0.0
        %2224 = vmatpush1.msra.mxu0 0.0
        %2225 = vmatprep.subr.mxu0 0.0
        %2226 = vmatpush1.msra.mxu0 0.0
        %2227 = vmatprep.subr.mxu0 0.0
        %2228 = vmatpush1.msra.mxu0 0.0
        %2229 = vmatprep.subr.mxu0 0.0
        %2230 = vmatpush1.msra.mxu0 0.0
        %2231 = vmatprep.subr.mxu0 0.0
        %2232 = vmatpush1.msra.mxu0 0.0
        %2233 = vmatprep.subr.mxu0 0.0
        %2234 = vmatpush1.msra.mxu0 0.0
        %2235 = vmatprep.subr.mxu0 0.0
        %2236 = vmatpush1.msra.mxu0 0.0
        %2237 = vmatprep.subr.mxu0 0.0
        %2238 = vmatpush1.msra.mxu0 0.0
        %2239 = vmatprep.subr.mxu0 0.0
        %2240 = vmatpush1.msra.mxu0 0.0
        %2241 = vmatprep.subr.mxu0 0.0
        %2242 = vmatpush1.msra.mxu0 0.0
        %2243 = vmatprep.subr.mxu0 0.0
        %2244 = vmatpush1.msra.mxu0 0.0
        %2245 = vmatprep.subr.mxu0 0.0
        %2246 = vmatpush1.msra.mxu0 0.0
        %2247 = vmatprep.mubr.f32.mxu0 0.0
        %2248 = vmatmul.mubr.f32.gmra.mrb[0].mxu0 %v336
        %v2249 = vpop.f32.mrb[0].mxu0
        %v2250 = vadd.f32 0.0, %v2249
        %v2251 = vpop.f32.mrb[0].mxu0
        %2252 = vmatprep.mubr.f32.mxu0 0.0
        %2253 = vmatmul.mubr.f32.gmra.mrb[0].mxu0 %v337
        %v2254 = vpop.f32.mrb[0].mxu0
        %v2255 = vadd.f32 0.0, %v2254
        %v2256 = vpop.f32.mrb[0].mxu0
        %2257 = vdwg.mxu0
        %2258 = vmatprep.subr.mxu0 0.0
        %2259 = vmatpush1.msra.mxu0 %v1835
        %2260 = vmatprep.subr.mxu0 0.0
        %2261 = vmatpush1.msra.mxu0 %v1836
        %2262 = vmatprep.subr.mxu0 0.0
        %2263 = vmatpush1.msra.mxu0 %v1837
        %2264 = vmatprep.subr.mxu0 0.0
        %2265 = vmatpush1.msra.mxu0 %v1838
        %2266 = vmatprep.subr.mxu0 0.0
        %2267 = vmatpush1.msra.mxu0 %v1839
        %2268 = vmatprep.subr.mxu0 0.0
        %2269 = vmatpush1.msra.mxu0 %v1840
        %2270 = vmatprep.subr.mxu0 0.0
        %2271 = vmatpush1.msra.mxu0 %v1841
        %2272 = vmatprep.subr.mxu0 0.0
        %2273 = vmatpush1.msra.mxu0 %v1842
        %2274 = vmatprep.subr.mxu0 0.0
        %2275 = vmatpush1.msra.mxu0 %v1843
        %2276 = vmatprep.subr.mxu0 0.0
        %2277 = vmatpush1.msra.mxu0 %v1844
        %2278 = vmatprep.subr.mxu0 0.0
        %2279 = vmatpush1.msra.mxu0 %v1845
        %2280 = vmatprep.subr.mxu0 0.0
        %2281 = vmatpush1.msra.mxu0 %v1846
        %2282 = vmatprep.subr.mxu0 0.0
        %2283 = vmatpush1.msra.mxu0 %v1847
        %2284 = vmatprep.subr.mxu0 0.0
        %2285 = vmatpush1.msra.mxu0 %v1848
        %2286 = vmatprep.subr.mxu0 0.0
        %2287 = vmatpush1.msra.mxu0 %v1849
        %2288 = vmatprep.subr.mxu0 0.0
        %2289 = vmatpush1.msra.mxu0 %v1850
        %2290 = vmatprep.subr.mxu0 0.0
        %2291 = vmatpush1.msra.mxu0 0.0
        %2292 = vmatprep.subr.mxu0 0.0
        %2293 = vmatpush1.msra.mxu0 0.0
        %2294 = vmatprep.subr.mxu0 0.0
        %2295 = vmatpush1.msra.mxu0 0.0
        %2296 = vmatprep.subr.mxu0 0.0
        %2297 = vmatpush1.msra.mxu0 0.0
        %2298 = vmatprep.subr.mxu0 0.0
        %2299 = vmatpush1.msra.mxu0 0.0
        %2300 = vmatprep.subr.mxu0 0.0
        %2301 = vmatpush1.msra.mxu0 0.0
        %2302 = vmatprep.subr.mxu0 0.0
        %2303 = vmatpush1.msra.mxu0 0.0
        %2304 = vmatprep.subr.mxu0 0.0
        %2305 = vmatpush1.msra.mxu0 0.0
        %2306 = vmatprep.subr.mxu0 0.0
        %2307 = vmatpush1.msra.mxu0 0.0
        %2308 = vmatprep.subr.mxu0 0.0
        %2309 = vmatpush1.msra.mxu0 0.0
        %2310 = vmatprep.subr.mxu0 0.0
        %2311 = vmatpush1.msra.mxu0 0.0
        %2312 = vmatprep.subr.mxu0 0.0
        %2313 = vmatpush1.msra.mxu0 0.0
        %2314 = vmatprep.subr.mxu0 0.0
        %2315 = vmatpush1.msra.mxu0 0.0
        %2316 = vmatprep.subr.mxu0 0.0
        %2317 = vmatpush1.msra.mxu0 0.0
        %2318 = vmatprep.subr.mxu0 0.0
        %2319 = vmatpush1.msra.mxu0 0.0
        %2320 = vmatprep.subr.mxu0 0.0
        %2321 = vmatpush1.msra.mxu0 0.0
        %2322 = vmatprep.mubr.f32.mxu0 0.0
        %2323 = vmatmul.mubr.f32.gmra.mrb[0].mxu0 %v336
        %v2324 = vpop.f32.mrb[0].mxu0
        %v2325 = vadd.f32 0.0, %v2324
        %v2326 = vpop.f32.mrb[0].mxu0
        %2327 = vmatprep.mubr.f32.mxu0 0.0
        %2328 = vmatmul.mubr.f32.gmra.mrb[0].mxu0 %v337
        %v2329 = vpop.f32.mrb[0].mxu0
        %v2330 = vadd.f32 0.0, %v2329
        %v2331 = vpop.f32.mrb[0].mxu0
        %2332 = vdwg.mxu0
        %2333 = vmatprep.subr.mxu0 0.0
        %2334 = vmatpush1.msra.mxu0 %v1851
        %2335 = vmatprep.subr.mxu0 0.0
        %2336 = vmatpush1.msra.mxu0 %v1852
        %2337 = vmatprep.subr.mxu0 0.0
        %2338 = vmatpush1.msra.mxu0 %v1853
        %2339 = vmatprep.subr.mxu0 0.0
        %2340 = vmatpush1.msra.mxu0 %v1854
        %2341 = vmatprep.subr.mxu0 0.0
        %2342 = vmatpush1.msra.mxu0 %v1855
        %2343 = vmatprep.subr.mxu0 0.0
        %2344 = vmatpush1.msra.mxu0 %v1856
        %2345 = vmatprep.subr.mxu0 0.0
        %2346 = vmatpush1.msra.mxu0 %v1857
        %2347 = vmatprep.subr.mxu0 0.0
        %2348 = vmatpush1.msra.mxu0 %v1858
        %2349 = vmatprep.subr.mxu0 0.0
        %2350 = vmatpush1.msra.mxu0 %v1859
        %2351 = vmatprep.subr.mxu0 0.0
        %2352 = vmatpush1.msra.mxu0 %v1860
        %2353 = vmatprep.subr.mxu0 0.0
        %2354 = vmatpush1.msra.mxu0 %v1861
        %2355 = vmatprep.subr.mxu0 0.0
        %2356 = vmatpush1.msra.mxu0 %v1862
        %2357 = vmatprep.subr.mxu0 0.0
        %2358 = vmatpush1.msra.mxu0 %v1863
        %2359 = vmatprep.subr.mxu0 0.0
        %2360 = vmatpush1.msra.mxu0 %v1864
        %2361 = vmatprep.subr.mxu0 0.0
        %2362 = vmatpush1.msra.mxu0 %v1865
        %2363 = vmatprep.subr.mxu0 0.0
        %2364 = vmatpush1.msra.mxu0 %v1866
        %2365 = vmatprep.subr.mxu0 0.0
        %2366 = vmatpush1.msra.mxu0 0.0
        %2367 = vmatprep.subr.mxu0 0.0
        %2368 = vmatpush1.msra.mxu0 0.0
        %2369 = vmatprep.subr.mxu0 0.0
        %2370 = vmatpush1.msra.mxu0 0.0
        %2371 = vmatprep.subr.mxu0 0.0
        %2372 = vmatpush1.msra.mxu0 0.0
        %2373 = vmatprep.subr.mxu0 0.0
        %2374 = vmatpush1.msra.mxu0 0.0
        %2375 = vmatprep.subr.mxu0 0.0
        %2376 = vmatpush1.msra.mxu0 0.0
        %2377 = vmatprep.subr.mxu0 0.0
        %2378 = vmatpush1.msra.mxu0 0.0
        %2379 = vmatprep.subr.mxu0 0.0
        %2380 = vmatpush1.msra.mxu0 0.0
        %2381 = vmatprep.subr.mxu0 0.0
        %2382 = vmatpush1.msra.mxu0 0.0
        %2383 = vmatprep.subr.mxu0 0.0
        %2384 = vmatpush1.msra.mxu0 0.0
        %2385 = vmatprep.subr.mxu0 0.0
        %2386 = vmatpush1.msra.mxu0 0.0
        %2387 = vmatprep.subr.mxu0 0.0
        %2388 = vmatpush1.msra.mxu0 0.0
        %2389 = vmatprep.subr.mxu0 0.0
        %2390 = vmatpush1.msra.mxu0 0.0
        %2391 = vmatprep.subr.mxu0 0.0
        %2392 = vmatpush1.msra.mxu0 0.0
        %2393 = vmatprep.subr.mxu0 0.0
        %2394 = vmatpush1.msra.mxu0 0.0
        %2395 = vmatprep.subr.mxu0 0.0
        %2396 = vmatpush1.msra.mxu0 0.0
        %2397 = vmatprep.mubr.f32.mxu0 0.0
        %2398 = vmatmul.mubr.f32.gmra.mrb[0].mxu0 %v336
        %v2399 = vpop.f32.mrb[0].mxu0
        %v2400 = vadd.f32 0.0, %v2399
        %v2401 = vpop.f32.mrb[0].mxu0
        %2402 = vmatprep.mubr.f32.mxu0 0.0
        %2403 = vmatmul.mubr.f32.gmra.mrb[0].mxu0 %v337
        %v2404 = vpop.f32.mrb[0].mxu0
        %v2405 = vadd.f32 0.0, %v2404
        %v2406 = vpop.f32.mrb[0].mxu0
        %2407 = vdwg.mxu0
        %2408 = vmatprep.subr.mxu0 0.0
        %2409 = vmatpush1.msra.mxu0 %v1867
        %2410 = vmatprep.subr.mxu0 0.0
        %2411 = vmatpush1.msra.mxu0 %v1868
        %2412 = vmatprep.subr.mxu0 0.0
        %2413 = vmatpush1.msra.mxu0 %v1869
        %2414 = vmatprep.subr.mxu0 0.0
        %2415 = vmatpush1.msra.mxu0 %v1870
        %2416 = vmatprep.subr.mxu0 0.0
        %2417 = vmatpush1.msra.mxu0 %v1871
        %2418 = vmatprep.subr.mxu0 0.0
        %2419 = vmatpush1.msra.mxu0 %v1872
        %2420 = vmatprep.subr.mxu0 0.0
        %2421 = vmatpush1.msra.mxu0 %v1873
        %2422 = vmatprep.subr.mxu0 0.0
        %2423 = vmatpush1.msra.mxu0 %v1874
        %2424 = vmatprep.subr.mxu0 0.0
        %2425 = vmatpush1.msra.mxu0 %v1875
        %2426 = vmatprep.subr.mxu0 0.0
        %2427 = vmatpush1.msra.mxu0 %v1876
        %2428 = vmatprep.subr.mxu0 0.0
        %2429 = vmatpush1.msra.mxu0 %v1877
        %2430 = vmatprep.subr.mxu0 0.0
        %2431 = vmatpush1.msra.mxu0 %v1878
        %2432 = vmatprep.subr.mxu0 0.0
        %2433 = vmatpush1.msra.mxu0 %v1879
        %2434 = vmatprep.subr.mxu0 0.0
        %2435 = vmatpush1.msra.mxu0 %v1880
        %2436 = vmatprep.subr.mxu0 0.0
        %2437 = vmatpush1.msra.mxu0 %v1881
        %2438 = vmatprep.subr.mxu0 0.0
        %2439 = vmatpush1.msra.mxu0 %v1882
        %2440 = vmatprep.subr.mxu0 0.0
        %2441 = vmatpush1.msra.mxu0 0.0
        %2442 = vmatprep.subr.mxu0 0.0
        %2443 = vmatpush1.msra.mxu0 0.0
        %2444 = vmatprep.subr.mxu0 0.0
        %2445 = vmatpush1.msra.mxu0 0.0
        %2446 = vmatprep.subr.mxu0 0.0
        %2447 = vmatpush1.msra.mxu0 0.0
        %2448 = vmatprep.subr.mxu0 0.0
        %2449 = vmatpush1.msra.mxu0 0.0
        %2450 = vmatprep.subr.mxu0 0.0
        %2451 = vmatpush1.msra.mxu0 0.0
        %2452 = vmatprep.subr.mxu0 0.0
        %2453 = vmatpush1.msra.mxu0 0.0
        %2454 = vmatprep.subr.mxu0 0.0
        %2455 = vmatpush1.msra.mxu0 0.0
        %2456 = vmatprep.subr.mxu0 0.0
        %2457 = vmatpush1.msra.mxu0 0.0
        %2458 = vmatprep.subr.mxu0 0.0
        %2459 = vmatpush1.msra.mxu0 0.0
        %2460 = vmatprep.subr.mxu0 0.0
        %2461 = vmatpush1.msra.mxu0 0.0
        %2462 = vmatprep.subr.mxu0 0.0
        %2463 = vmatpush1.msra.mxu0 0.0
        %2464 = vmatprep.subr.mxu0 0.0
        %2465 = vmatpush1.msra.mxu0 0.0
        %2466 = vmatprep.subr.mxu0 0.0
        %2467 = vmatpush1.msra.mxu0 0.0
        %2468 = vmatprep.subr.mxu0 0.0
        %2469 = vmatpush1.msra.mxu0 0.0
        %2470 = vmatprep.subr.mxu0 0.0
        %2471 = vmatpush1.msra.mxu0 0.0
        %2472 = vmatprep.mubr.f32.mxu0 0.0
        %2473 = vmatmul.mubr.f32.gmra.mrb[0].mxu0 %v336
        %v2474 = vpop.f32.mrb[0].mxu0
        %v2475 = vadd.f32 0.0, %v2474
        %v2476 = vpop.f32.mrb[0].mxu0
        %2477 = vmatprep.mubr.f32.mxu0 0.0
        %2478 = vmatmul.mubr.f32.gmra.mrb[0].mxu0 %v337
        %v2479 = vpop.f32.mrb[0].mxu0
        %v2480 = vadd.f32 0.0, %v2479
        %v2481 = vpop.f32.mrb[0].mxu0
        %2482 = vdwg.mxu0
        %vm2483 = vcmask 523264
        %v2485 = vsel %vm2483, %v534, 0
        %v2488 = vsel %vm2483, %v1222, 0
        %v2491 = vsel %vm2483, %v1227, 0
        %2493 = vmatprep.subr.mxu0 0.0
        %2494 = vmatpush1.xpose.msra.mxu0 %v2488
        %2495 = vmatprep.subr.mxu0 0.0
        %2496 = vmatpush1.xpose.msra.mxu0 %v2491
        %2497 = vmatprep.subr.mxu0 0.0
        %2498 = vmatpush1.xpose.msra.mxu0 0.0
        %2499 = vmatprep.subr.mxu0 0.0
        %2500 = vmatpush1.xpose.msra.mxu0 0.0
        %2501 = vmatprep.subr.mxu0 0.0
        %2502 = vmatpush1.xpose.msra.mxu0 0.0
        %2503 = vmatprep.subr.mxu0 0.0
        %2504 = vmatpush1.xpose.msra.mxu0 0.0
        %2505 = vmatprep.subr.mxu0 0.0
        %2506 = vmatpush1.xpose.msra.mxu0 0.0
        %2507 = vmatprep.subr.mxu0 0.0
        %2508 = vmatpush1.xpose.msra.mxu0 0.0
        %2509 = vmatprep.subr.mxu0 0.0
        %2510 = vmatpush1.xpose.msra.mxu0 0.0
        %2511 = vmatprep.subr.mxu0 0.0
        %2512 = vmatpush1.xpose.msra.mxu0 0.0
        %2513 = vmatprep.subr.mxu0 0.0
        %2514 = vmatpush1.xpose.msra.mxu0 0.0
        %2515 = vmatprep.subr.mxu0 0.0
        %2516 = vmatpush1.xpose.msra.mxu0 0.0
        %2517 = vmatprep.subr.mxu0 0.0
        %2518 = vmatpush1.xpose.msra.mxu0 0.0
        %2519 = vmatprep.subr.mxu0 0.0
        %2520 = vmatpush1.xpose.msra.mxu0 0.0
        %2521 = vmatprep.subr.mxu0 0.0
        %2522 = vmatpush1.xpose.msra.mxu0 0.0
        %2523 = vmatprep.subr.mxu0 0.0
        %2524 = vmatpush1.xpose.msra.mxu0 0.0
        %2525 = vmatprep.subr.mxu0 0.0
        %2526 = vmatpush1.xpose.msra.mxu0 0.0
        %2527 = vmatprep.subr.mxu0 0.0
        %2528 = vmatpush1.xpose.msra.mxu0 0.0
        %2529 = vmatprep.subr.mxu0 0.0
        %2530 = vmatpush1.xpose.msra.mxu0 0.0
        %2531 = vmatprep.subr.mxu0 0.0
        %2532 = vmatpush1.xpose.msra.mxu0 0.0
        %2533 = vmatprep.subr.mxu0 0.0
        %2534 = vmatpush1.xpose.msra.mxu0 0.0
        %2535 = vmatprep.subr.mxu0 0.0
        %2536 = vmatpush1.xpose.msra.mxu0 0.0
        %2537 = vmatprep.subr.mxu0 0.0
        %2538 = vmatpush1.xpose.msra.mxu0 0.0
        %2539 = vmatprep.subr.mxu0 0.0
        %2540 = vmatpush1.xpose.msra.mxu0 0.0
        %2541 = vmatprep.subr.mxu0 0.0
        %2542 = vmatpush1.xpose.msra.mxu0 0.0
        %2543 = vmatprep.subr.mxu0 0.0
        %2544 = vmatpush1.xpose.msra.mxu0 0.0
        %2545 = vmatprep.subr.mxu0 0.0
        %2546 = vmatpush1.xpose.msra.mxu0 0.0
        %2547 = vmatprep.subr.mxu0 0.0
        %2548 = vmatpush1.xpose.msra.mxu0 0.0
        %2549 = vmatprep.subr.mxu0 0.0
        %2550 = vmatpush1.xpose.msra.mxu0 0.0
        %2551 = vmatprep.subr.mxu0 0.0
        %2552 = vmatpush1.xpose.msra.mxu0 0.0
        %2553 = vmatprep.subr.mxu0 0.0
        %2554 = vmatpush1.xpose.msra.mxu0 0.0
        %2555 = vmatprep.subr.mxu0 0.0
        %2556 = vmatpush1.xpose.msra.mxu0 0.0
        %2557 = vmatprep.mubr.f32.mxu0 0.0
        %2558 = vmatmul.mubr.f32.gmra.mrb[0].mxu0 %v2485
        %v2559 = vpop.f32.mrb[0].mxu0
        %v2560 = vadd.f32 0.0, %v2559
        %v2561 = vpop.f32.mrb[0].mxu0
        %2562 = vdwg.mxu0
        %v2564 = vsel %vm2483, %v604, 0
        %v2567 = vsel %vm2483, %v1297, 0
        %v2570 = vsel %vm2483, %v1302, 0
        %2572 = vmatprep.subr.mxu0 0.0
        %2573 = vmatpush1.xpose.msra.mxu0 %v2567
        %2574 = vmatprep.subr.mxu0 0.0
        %2575 = vmatpush1.xpose.msra.mxu0 %v2570
        %2576 = vmatprep.subr.mxu0 0.0
        %2577 = vmatpush1.xpose.msra.mxu0 0.0
        %2578 = vmatprep.subr.mxu0 0.0
        %2579 = vmatpush1.xpose.msra.mxu0 0.0
        %2580 = vmatprep.subr.mxu0 0.0
        %2581 = vmatpush1.xpose.msra.mxu0 0.0
        %2582 = vmatprep.subr.mxu0 0.0
        %2583 = vmatpush1.xpose.msra.mxu0 0.0
        %2584 = vmatprep.subr.mxu0 0.0
        %2585 = vmatpush1.xpose.msra.mxu0 0.0
        %2586 = vmatprep.subr.mxu0 0.0
        %2587 = vmatpush1.xpose.msra.mxu0 0.0
        %2588 = vmatprep.subr.mxu0 0.0
        %2589 = vmatpush1.xpose.msra.mxu0 0.0
        %2590 = vmatprep.subr.mxu0 0.0
        %2591 = vmatpush1.xpose.msra.mxu0 0.0
        %2592 = vmatprep.subr.mxu0 0.0
        %2593 = vmatpush1.xpose.msra.mxu0 0.0
        %2594 = vmatprep.subr.mxu0 0.0
        %2595 = vmatpush1.xpose.msra.mxu0 0.0
        %2596 = vmatprep.subr.mxu0 0.0
        %2597 = vmatpush1.xpose.msra.mxu0 0.0
        %2598 = vmatprep.subr.mxu0 0.0
        %2599 = vmatpush1.xpose.msra.mxu0 0.0
        %2600 = vmatprep.subr.mxu0 0.0
        %2601 = vmatpush1.xpose.msra.mxu0 0.0
        %2602 = vmatprep.subr.mxu0 0.0
        %2603 = vmatpush1.xpose.msra.mxu0 0.0
        %2604 = vmatprep.subr.mxu0 0.0
        %2605 = vmatpush1.xpose.msra.mxu0 0.0
        %2606 = vmatprep.subr.mxu0 0.0
        %2607 = vmatpush1.xpose.msra.mxu0 0.0
        %2608 = vmatprep.subr.mxu0 0.0
        %2609 = vmatpush1.xpose.msra.mxu0 0.0
        %2610 = vmatprep.subr.mxu0 0.0
        %2611 = vmatpush1.xpose.msra.mxu0 0.0
        %2612 = vmatprep.subr.mxu0 0.0
        %2613 = vmatpush1.xpose.msra.mxu0 0.0
        %2614 = vmatprep.subr.mxu0 0.0
        %2615 = vmatpush1.xpose.msra.mxu0 0.0
        %2616 = vmatprep.subr.mxu0 0.0
        %2617 = vmatpush1.xpose.msra.mxu0 0.0
        %2618 = vmatprep.subr.mxu0 0.0
        %2619 = vmatpush1.xpose.msra.mxu0 0.0
        %2620 = vmatprep.subr.mxu0 0.0
        %2621 = vmatpush1.xpose.msra.mxu0 0.0
        %2622 = vmatprep.subr.mxu0 0.0
        %2623 = vmatpush1.xpose.msra.mxu0 0.0
        %2624 = vmatprep.subr.mxu0 0.0
        %2625 = vmatpush1.xpose.msra.mxu0 0.0
        %2626 = vmatprep.subr.mxu0 0.0
        %2627 = vmatpush1.xpose.msra.mxu0 0.0
        %2628 = vmatprep.subr.mxu0 0.0
        %2629 = vmatpush1.xpose.msra.mxu0 0.0
        %2630 = vmatprep.subr.mxu0 0.0
        %2631 = vmatpush1.xpose.msra.mxu0 0.0
        %2632 = vmatprep.subr.mxu0 0.0
        %2633 = vmatpush1.xpose.msra.mxu0 0.0
        %2634 = vmatprep.subr.mxu0 0.0
        %2635 = vmatpush1.xpose.msra.mxu0 0.0
        %2636 = vmatprep.mubr.f32.mxu0 0.0
        %2637 = vmatmul.mubr.f32.gmra.mrb[0].mxu0 %v2564
        %v2638 = vpop.f32.mrb[0].mxu0
        %v2639 = vadd.f32 0.0, %v2638
        %v2640 = vpop.f32.mrb[0].mxu0
        %2641 = vdwg.mxu0
        %v2643 = vsel %vm2483, %v674, 0
        %v2646 = vsel %vm2483, %v1372, 0
        %v2649 = vsel %vm2483, %v1377, 0
        %2651 = vmatprep.subr.mxu0 0.0
        %2652 = vmatpush1.xpose.msra.mxu0 %v2646
        %2653 = vmatprep.subr.mxu0 0.0
        %2654 = vmatpush1.xpose.msra.mxu0 %v2649
        %2655 = vmatprep.subr.mxu0 0.0
        %2656 = vmatpush1.xpose.msra.mxu0 0.0
        %2657 = vmatprep.subr.mxu0 0.0
        %2658 = vmatpush1.xpose.msra.mxu0 0.0
        %2659 = vmatprep.subr.mxu0 0.0
        %2660 = vmatpush1.xpose.msra.mxu0 0.0
        %2661 = vmatprep.subr.mxu0 0.0
        %2662 = vmatpush1.xpose.msra.mxu0 0.0
        %2663 = vmatprep.subr.mxu0 0.0
        %2664 = vmatpush1.xpose.msra.mxu0 0.0
        %2665 = vmatprep.subr.mxu0 0.0
        %2666 = vmatpush1.xpose.msra.mxu0 0.0
        %2667 = vmatprep.subr.mxu0 0.0
        %2668 = vmatpush1.xpose.msra.mxu0 0.0
        %2669 = vmatprep.subr.mxu0 0.0
        %2670 = vmatpush1.xpose.msra.mxu0 0.0
        %2671 = vmatprep.subr.mxu0 0.0
        %2672 = vmatpush1.xpose.msra.mxu0 0.0
        %2673 = vmatprep.subr.mxu0 0.0
        %2674 = vmatpush1.xpose.msra.mxu0 0.0
        %2675 = vmatprep.subr.mxu0 0.0
        %2676 = vmatpush1.xpose.msra.mxu0 0.0
        %2677 = vmatprep.subr.mxu0 0.0
        %2678 = vmatpush1.xpose.msra.mxu0 0.0
        %2679 = vmatprep.subr.mxu0 0.0
        %2680 = vmatpush1.xpose.msra.mxu0 0.0
        %2681 = vmatprep.subr.mxu0 0.0
        %2682 = vmatpush1.xpose.msra.mxu0 0.0
        %2683 = vmatprep.subr.mxu0 0.0
        %2684 = vmatpush1.xpose.msra.mxu0 0.0
        %2685 = vmatprep.subr.mxu0 0.0
        %2686 = vmatpush1.xpose.msra.mxu0 0.0
        %2687 = vmatprep.subr.mxu0 0.0
        %2688 = vmatpush1.xpose.msra.mxu0 0.0
        %2689 = vmatprep.subr.mxu0 0.0
        %2690 = vmatpush1.xpose.msra.mxu0 0.0
        %2691 = vmatprep.subr.mxu0 0.0
        %2692 = vmatpush1.xpose.msra.mxu0 0.0
        %2693 = vmatprep.subr.mxu0 0.0
        %2694 = vmatpush1.xpose.msra.mxu0 0.0
        %2695 = vmatprep.subr.mxu0 0.0
        %2696 = vmatpush1.xpose.msra.mxu0 0.0
        %2697 = vmatprep.subr.mxu0 0.0
        %2698 = vmatpush1.xpose.msra.mxu0 0.0
        %2699 = vmatprep.subr.mxu0 0.0
        %2700 = vmatpush1.xpose.msra.mxu0 0.0
        %2701 = vmatprep.subr.mxu0 0.0
        %2702 = vmatpush1.xpose.msra.mxu0 0.0
        %2703 = vmatprep.subr.mxu0 0.0
        %2704 = vmatpush1.xpose.msra.mxu0 0.0
        %2705 = vmatprep.subr.mxu0 0.0
        %2706 = vmatpush1.xpose.msra.mxu0 0.0
        %2707 = vmatprep.subr.mxu0 0.0
        %2708 = vmatpush1.xpose.msra.mxu0 0.0
        %2709 = vmatprep.subr.mxu0 0.0
        %2710 = vmatpush1.xpose.msra.mxu0 0.0
        %2711 = vmatprep.subr.mxu0 0.0
        %2712 = vmatpush1.xpose.msra.mxu0 0.0
        %2713 = vmatprep.subr.mxu0 0.0
        %2714 = vmatpush1.xpose.msra.mxu0 0.0
        %2715 = vmatprep.mubr.f32.mxu0 0.0
        %2716 = vmatmul.mubr.f32.gmra.mrb[0].mxu0 %v2643
        %v2717 = vpop.f32.mrb[0].mxu0
        %v2718 = vadd.f32 0.0, %v2717
        %v2719 = vpop.f32.mrb[0].mxu0
        %2720 = vdwg.mxu0
        %v2722 = vsel %vm2483, %v744, 0
        %v2725 = vsel %vm2483, %v1447, 0
        %v2728 = vsel %vm2483, %v1452, 0
        %2730 = vmatprep.subr.mxu0 0.0
        %2731 = vmatpush1.xpose.msra.mxu0 %v2725
        %2732 = vmatprep.subr.mxu0 0.0
        %2733 = vmatpush1.xpose.msra.mxu0 %v2728
        %2734 = vmatprep.subr.mxu0 0.0
        %2735 = vmatpush1.xpose.msra.mxu0 0.0
        %2736 = vmatprep.subr.mxu0 0.0
        %2737 = vmatpush1.xpose.msra.mxu0 0.0
        %2738 = vmatprep.subr.mxu0 0.0
        %2739 = vmatpush1.xpose.msra.mxu0 0.0
        %2740 = vmatprep.subr.mxu0 0.0
        %2741 = vmatpush1.xpose.msra.mxu0 0.0
        %2742 = vmatprep.subr.mxu0 0.0
        %2743 = vmatpush1.xpose.msra.mxu0 0.0
        %2744 = vmatprep.subr.mxu0 0.0
        %2745 = vmatpush1.xpose.msra.mxu0 0.0
        %2746 = vmatprep.subr.mxu0 0.0
        %2747 = vmatpush1.xpose.msra.mxu0 0.0
        %2748 = vmatprep.subr.mxu0 0.0
        %2749 = vmatpush1.xpose.msra.mxu0 0.0
        %2750 = vmatprep.subr.mxu0 0.0
        %2751 = vmatpush1.xpose.msra.mxu0 0.0
        %2752 = vmatprep.subr.mxu0 0.0
        %2753 = vmatpush1.xpose.msra.mxu0 0.0
        %2754 = vmatprep.subr.mxu0 0.0
        %2755 = vmatpush1.xpose.msra.mxu0 0.0
        %2756 = vmatprep.subr.mxu0 0.0
        %2757 = vmatpush1.xpose.msra.mxu0 0.0
        %2758 = vmatprep.subr.mxu0 0.0
        %2759 = vmatpush1.xpose.msra.mxu0 0.0
        %2760 = vmatprep.subr.mxu0 0.0
        %2761 = vmatpush1.xpose.msra.mxu0 0.0
        %2762 = vmatprep.subr.mxu0 0.0
        %2763 = vmatpush1.xpose.msra.mxu0 0.0
        %2764 = vmatprep.subr.mxu0 0.0
        %2765 = vmatpush1.xpose.msra.mxu0 0.0
        %2766 = vmatprep.subr.mxu0 0.0
        %2767 = vmatpush1.xpose.msra.mxu0 0.0
        %2768 = vmatprep.subr.mxu0 0.0
        %2769 = vmatpush1.xpose.msra.mxu0 0.0
        %2770 = vmatprep.subr.mxu0 0.0
        %2771 = vmatpush1.xpose.msra.mxu0 0.0
        %2772 = vmatprep.subr.mxu0 0.0
        %2773 = vmatpush1.xpose.msra.mxu0 0.0
        %2774 = vmatprep.subr.mxu0 0.0
        %2775 = vmatpush1.xpose.msra.mxu0 0.0
        %2776 = vmatprep.subr.mxu0 0.0
        %2777 = vmatpush1.xpose.msra.mxu0 0.0
        %2778 = vmatprep.subr.mxu0 0.0
        %2779 = vmatpush1.xpose.msra.mxu0 0.0
        %2780 = vmatprep.subr.mxu0 0.0
        %2781 = vmatpush1.xpose.msra.mxu0 0.0
        %2782 = vmatprep.subr.mxu0 0.0
        %2783 = vmatpush1.xpose.msra.mxu0 0.0
        %2784 = vmatprep.subr.mxu0 0.0
        %2785 = vmatpush1.xpose.msra.mxu0 0.0
        %2786 = vmatprep.subr.mxu0 0.0
        %2787 = vmatpush1.xpose.msra.mxu0 0.0
        %2788 = vmatprep.subr.mxu0 0.0
        %2789 = vmatpush1.xpose.msra.mxu0 0.0
        %2790 = vmatprep.subr.mxu0 0.0
        %2791 = vmatpush1.xpose.msra.mxu0 0.0
        %2792 = vmatprep.subr.mxu0 0.0
        %2793 = vmatpush1.xpose.msra.mxu0 0.0
        %2794 = vmatprep.mubr.f32.mxu0 0.0
        %2795 = vmatmul.mubr.f32.gmra.mrb[0].mxu0 %v2722
        %v2796 = vpop.f32.mrb[0].mxu0
        %v2797 = vadd.f32 0.0, %v2796
        %v2798 = vpop.f32.mrb[0].mxu0
        %2799 = vdwg.mxu0
        %v2801 = vsel %vm2483, %v814, 0
        %v2804 = vsel %vm2483, %v1522, 0
        %v2807 = vsel %vm2483, %v1527, 0
        %2809 = vmatprep.subr.mxu0 0.0
        %2810 = vmatpush1.xpose.msra.mxu0 %v2804
        %2811 = vmatprep.subr.mxu0 0.0
        %2812 = vmatpush1.xpose.msra.mxu0 %v2807
        %2813 = vmatprep.subr.mxu0 0.0
        %2814 = vmatpush1.xpose.msra.mxu0 0.0
        %2815 = vmatprep.subr.mxu0 0.0
        %2816 = vmatpush1.xpose.msra.mxu0 0.0
        %2817 = vmatprep.subr.mxu0 0.0
        %2818 = vmatpush1.xpose.msra.mxu0 0.0
        %2819 = vmatprep.subr.mxu0 0.0
        %2820 = vmatpush1.xpose.msra.mxu0 0.0
        %2821 = vmatprep.subr.mxu0 0.0
        %2822 = vmatpush1.xpose.msra.mxu0 0.0
        %2823 = vmatprep.subr.mxu0 0.0
        %2824 = vmatpush1.xpose.msra.mxu0 0.0
        %2825 = vmatprep.subr.mxu0 0.0
        %2826 = vmatpush1.xpose.msra.mxu0 0.0
        %2827 = vmatprep.subr.mxu0 0.0
        %2828 = vmatpush1.xpose.msra.mxu0 0.0
        %2829 = vmatprep.subr.mxu0 0.0
        %2830 = vmatpush1.xpose.msra.mxu0 0.0
        %2831 = vmatprep.subr.mxu0 0.0
        %2832 = vmatpush1.xpose.msra.mxu0 0.0
        %2833 = vmatprep.subr.mxu0 0.0
        %2834 = vmatpush1.xpose.msra.mxu0 0.0
        %2835 = vmatprep.subr.mxu0 0.0
        %2836 = vmatpush1.xpose.msra.mxu0 0.0
        %2837 = vmatprep.subr.mxu0 0.0
        %2838 = vmatpush1.xpose.msra.mxu0 0.0
        %2839 = vmatprep.subr.mxu0 0.0
        %2840 = vmatpush1.xpose.msra.mxu0 0.0
        %2841 = vmatprep.subr.mxu0 0.0
        %2842 = vmatpush1.xpose.msra.mxu0 0.0
        %2843 = vmatprep.subr.mxu0 0.0
        %2844 = vmatpush1.xpose.msra.mxu0 0.0
        %2845 = vmatprep.subr.mxu0 0.0
        %2846 = vmatpush1.xpose.msra.mxu0 0.0
        %2847 = vmatprep.subr.mxu0 0.0
        %2848 = vmatpush1.xpose.msra.mxu0 0.0
        %2849 = vmatprep.subr.mxu0 0.0
        %2850 = vmatpush1.xpose.msra.mxu0 0.0
        %2851 = vmatprep.subr.mxu0 0.0
        %2852 = vmatpush1.xpose.msra.mxu0 0.0
        %2853 = vmatprep.subr.mxu0 0.0
        %2854 = vmatpush1.xpose.msra.mxu0 0.0
        %2855 = vmatprep.subr.mxu0 0.0
        %2856 = vmatpush1.xpose.msra.mxu0 0.0
        %2857 = vmatprep.subr.mxu0 0.0
        %2858 = vmatpush1.xpose.msra.mxu0 0.0
        %2859 = vmatprep.subr.mxu0 0.0
        %2860 = vmatpush1.xpose.msra.mxu0 0.0
        %2861 = vmatprep.subr.mxu0 0.0
        %2862 = vmatpush1.xpose.msra.mxu0 0.0
        %2863 = vmatprep.subr.mxu0 0.0
        %2864 = vmatpush1.xpose.msra.mxu0 0.0
        %2865 = vmatprep.subr.mxu0 0.0
        %2866 = vmatpush1.xpose.msra.mxu0 0.0
        %2867 = vmatprep.subr.mxu0 0.0
        %2868 = vmatpush1.xpose.msra.mxu0 0.0
        %2869 = vmatprep.subr.mxu0 0.0
        %2870 = vmatpush1.xpose.msra.mxu0 0.0
        %2871 = vmatprep.subr.mxu0 0.0
        %2872 = vmatpush1.xpose.msra.mxu0 0.0
        %2873 = vmatprep.mubr.f32.mxu0 0.0
        %2874 = vmatmul.mubr.f32.gmra.mrb[0].mxu0 %v2801
        %v2875 = vpop.f32.mrb[0].mxu0
        %v2876 = vadd.f32 0.0, %v2875
        %v2877 = vpop.f32.mrb[0].mxu0
        %2878 = vdwg.mxu0
        %v2880 = vsel %vm2483, %v884, 0
        %v2883 = vsel %vm2483, %v1597, 0
        %v2886 = vsel %vm2483, %v1602, 0
        %2888 = vmatprep.subr.mxu0 0.0
        %2889 = vmatpush1.xpose.msra.mxu0 %v2883
        %2890 = vmatprep.subr.mxu0 0.0
        %2891 = vmatpush1.xpose.msra.mxu0 %v2886
        %2892 = vmatprep.subr.mxu0 0.0
        %2893 = vmatpush1.xpose.msra.mxu0 0.0
        %2894 = vmatprep.subr.mxu0 0.0
        %2895 = vmatpush1.xpose.msra.mxu0 0.0
        %2896 = vmatprep.subr.mxu0 0.0
        %2897 = vmatpush1.xpose.msra.mxu0 0.0
        %2898 = vmatprep.subr.mxu0 0.0
        %2899 = vmatpush1.xpose.msra.mxu0 0.0
        %2900 = vmatprep.subr.mxu0 0.0
        %2901 = vmatpush1.xpose.msra.mxu0 0.0
        %2902 = vmatprep.subr.mxu0 0.0
        %2903 = vmatpush1.xpose.msra.mxu0 0.0
        %2904 = vmatprep.subr.mxu0 0.0
        %2905 = vmatpush1.xpose.msra.mxu0 0.0
        %2906 = vmatprep.subr.mxu0 0.0
        %2907 = vmatpush1.xpose.msra.mxu0 0.0
        %2908 = vmatprep.subr.mxu0 0.0
        %2909 = vmatpush1.xpose.msra.mxu0 0.0
        %2910 = vmatprep.subr.mxu0 0.0
        %2911 = vmatpush1.xpose.msra.mxu0 0.0
        %2912 = vmatprep.subr.mxu0 0.0
        %2913 = vmatpush1.xpose.msra.mxu0 0.0
        %2914 = vmatprep.subr.mxu0 0.0
        %2915 = vmatpush1.xpose.msra.mxu0 0.0
        %2916 = vmatprep.subr.mxu0 0.0
        %2917 = vmatpush1.xpose.msra.mxu0 0.0
        %2918 = vmatprep.subr.mxu0 0.0
        %2919 = vmatpush1.xpose.msra.mxu0 0.0
        %2920 = vmatprep.subr.mxu0 0.0
        %2921 = vmatpush1.xpose.msra.mxu0 0.0
        %2922 = vmatprep.subr.mxu0 0.0
        %2923 = vmatpush1.xpose.msra.mxu0 0.0
        %2924 = vmatprep.subr.mxu0 0.0
        %2925 = vmatpush1.xpose.msra.mxu0 0.0
        %2926 = vmatprep.subr.mxu0 0.0
        %2927 = vmatpush1.xpose.msra.mxu0 0.0
        %2928 = vmatprep.subr.mxu0 0.0
        %2929 = vmatpush1.xpose.msra.mxu0 0.0
        %2930 = vmatprep.subr.mxu0 0.0
        %2931 = vmatpush1.xpose.msra.mxu0 0.0
        %2932 = vmatprep.subr.mxu0 0.0
        %2933 = vmatpush1.xpose.msra.mxu0 0.0
        %2934 = vmatprep.subr.mxu0 0.0
        %2935 = vmatpush1.xpose.msra.mxu0 0.0
        %2936 = vmatprep.subr.mxu0 0.0
        %2937 = vmatpush1.xpose.msra.mxu0 0.0
        %2938 = vmatprep.subr.mxu0 0.0
        %2939 = vmatpush1.xpose.msra.mxu0 0.0
        %2940 = vmatprep.subr.mxu0 0.0
        %2941 = vmatpush1.xpose.msra.mxu0 0.0
        %2942 = vmatprep.subr.mxu0 0.0
        %2943 = vmatpush1.xpose.msra.mxu0 0.0
        %2944 = vmatprep.subr.mxu0 0.0
        %2945 = vmatpush1.xpose.msra.mxu0 0.0
        %2946 = vmatprep.subr.mxu0 0.0
        %2947 = vmatpush1.xpose.msra.mxu0 0.0
        %2948 = vmatprep.subr.mxu0 0.0
        %2949 = vmatpush1.xpose.msra.mxu0 0.0
        %2950 = vmatprep.subr.mxu0 0.0
        %2951 = vmatpush1.xpose.msra.mxu0 0.0
        %2952 = vmatprep.mubr.f32.mxu0 0.0
        %2953 = vmatmul.mubr.f32.gmra.mrb[0].mxu0 %v2880
        %v2954 = vpop.f32.mrb[0].mxu0
        %v2955 = vadd.f32 0.0, %v2954
        %v2956 = vpop.f32.mrb[0].mxu0
        %2957 = vdwg.mxu0
        %v2959 = vsel %vm2483, %v954, 0
        %v2962 = vsel %vm2483, %v1672, 0
        %v2965 = vsel %vm2483, %v1677, 0
        %2967 = vmatprep.subr.mxu0 0.0
        %2968 = vmatpush1.xpose.msra.mxu0 %v2962
        %2969 = vmatprep.subr.mxu0 0.0
        %2970 = vmatpush1.xpose.msra.mxu0 %v2965
        %2971 = vmatprep.subr.mxu0 0.0
        %2972 = vmatpush1.xpose.msra.mxu0 0.0
        %2973 = vmatprep.subr.mxu0 0.0
        %2974 = vmatpush1.xpose.msra.mxu0 0.0
        %2975 = vmatprep.subr.mxu0 0.0
        %2976 = vmatpush1.xpose.msra.mxu0 0.0
        %2977 = vmatprep.subr.mxu0 0.0
        %2978 = vmatpush1.xpose.msra.mxu0 0.0
        %2979 = vmatprep.subr.mxu0 0.0
        %2980 = vmatpush1.xpose.msra.mxu0 0.0
        %2981 = vmatprep.subr.mxu0 0.0
        %2982 = vmatpush1.xpose.msra.mxu0 0.0
        %2983 = vmatprep.subr.mxu0 0.0
        %2984 = vmatpush1.xpose.msra.mxu0 0.0
        %2985 = vmatprep.subr.mxu0 0.0
        %2986 = vmatpush1.xpose.msra.mxu0 0.0
        %2987 = vmatprep.subr.mxu0 0.0
        %2988 = vmatpush1.xpose.msra.mxu0 0.0
        %2989 = vmatprep.subr.mxu0 0.0
        %2990 = vmatpush1.xpose.msra.mxu0 0.0
        %2991 = vmatprep.subr.mxu0 0.0
        %2992 = vmatpush1.xpose.msra.mxu0 0.0
        %2993 = vmatprep.subr.mxu0 0.0
        %2994 = vmatpush1.xpose.msra.mxu0 0.0
        %2995 = vmatprep.subr.mxu0 0.0
        %2996 = vmatpush1.xpose.msra.mxu0 0.0
        %2997 = vmatprep.subr.mxu0 0.0
        %2998 = vmatpush1.xpose.msra.mxu0 0.0
        %2999 = vmatprep.subr.mxu0 0.0
        %3000 = vmatpush1.xpose.msra.mxu0 0.0
        %3001 = vmatprep.subr.mxu0 0.0
        %3002 = vmatpush1.xpose.msra.mxu0 0.0
        %3003 = vmatprep.subr.mxu0 0.0
        %3004 = vmatpush1.xpose.msra.mxu0 0.0
        %3005 = vmatprep.subr.mxu0 0.0
        %3006 = vmatpush1.xpose.msra.mxu0 0.0
        %3007 = vmatprep.subr.mxu0 0.0
        %3008 = vmatpush1.xpose.msra.mxu0 0.0
        %3009 = vmatprep.subr.mxu0 0.0
        %3010 = vmatpush1.xpose.msra.mxu0 0.0
        %3011 = vmatprep.subr.mxu0 0.0
        %3012 = vmatpush1.xpose.msra.mxu0 0.0
        %3013 = vmatprep.subr.mxu0 0.0
        %3014 = vmatpush1.xpose.msra.mxu0 0.0
        %3015 = vmatprep.subr.mxu0 0.0
        %3016 = vmatpush1.xpose.msra.mxu0 0.0
        %3017 = vmatprep.subr.mxu0 0.0
        %3018 = vmatpush1.xpose.msra.mxu0 0.0
        %3019 = vmatprep.subr.mxu0 0.0
        %3020 = vmatpush1.xpose.msra.mxu0 0.0
        %3021 = vmatprep.subr.mxu0 0.0
        %3022 = vmatpush1.xpose.msra.mxu0 0.0
        %3023 = vmatprep.subr.mxu0 0.0
        %3024 = vmatpush1.xpose.msra.mxu0 0.0
        %3025 = vmatprep.subr.mxu0 0.0
        %3026 = vmatpush1.xpose.msra.mxu0 0.0
        %3027 = vmatprep.subr.mxu0 0.0
        %3028 = vmatpush1.xpose.msra.mxu0 0.0
        %3029 = vmatprep.subr.mxu0 0.0
        %3030 = vmatpush1.xpose.msra.mxu0 0.0
        %3031 = vmatprep.mubr.f32.mxu0 0.0
        %3032 = vmatmul.mubr.f32.gmra.mrb[0].mxu0 %v2959
        %v3033 = vpop.f32.mrb[0].mxu0
        %v3034 = vadd.f32 0.0, %v3033
        %v3035 = vpop.f32.mrb[0].mxu0
        %3036 = vdwg.mxu0
        %v3038 = vsel %vm2483, %v1024, 0
        %v3041 = vsel %vm2483, %v1747, 0
        %v3044 = vsel %vm2483, %v1752, 0
        %3046 = vmatprep.subr.mxu0 0.0
        %3047 = vmatpush1.xpose.msra.mxu0 %v3041
        %3048 = vmatprep.subr.mxu0 0.0
        %3049 = vmatpush1.xpose.msra.mxu0 %v3044
        %3050 = vmatprep.subr.mxu0 0.0
        %3051 = vmatpush1.xpose.msra.mxu0 0.0
        %3052 = vmatprep.subr.mxu0 0.0
        %3053 = vmatpush1.xpose.msra.mxu0 0.0
        %3054 = vmatprep.subr.mxu0 0.0
        %3055 = vmatpush1.xpose.msra.mxu0 0.0
        %3056 = vmatprep.subr.mxu0 0.0
        %3057 = vmatpush1.xpose.msra.mxu0 0.0
        %3058 = vmatprep.subr.mxu0 0.0
        %3059 = vmatpush1.xpose.msra.mxu0 0.0
        %3060 = vmatprep.subr.mxu0 0.0
        %3061 = vmatpush1.xpose.msra.mxu0 0.0
        %3062 = vmatprep.subr.mxu0 0.0
        %3063 = vmatpush1.xpose.msra.mxu0 0.0
        %3064 = vmatprep.subr.mxu0 0.0
        %3065 = vmatpush1.xpose.msra.mxu0 0.0
        %3066 = vmatprep.subr.mxu0 0.0
        %3067 = vmatpush1.xpose.msra.mxu0 0.0
        %3068 = vmatprep.subr.mxu0 0.0
        %3069 = vmatpush1.xpose.msra.mxu0 0.0
        %3070 = vmatprep.subr.mxu0 0.0
        %3071 = vmatpush1.xpose.msra.mxu0 0.0
        %3072 = vmatprep.subr.mxu0 0.0
        %3073 = vmatpush1.xpose.msra.mxu0 0.0
        %3074 = vmatprep.subr.mxu0 0.0
        %3075 = vmatpush1.xpose.msra.mxu0 0.0
        %3076 = vmatprep.subr.mxu0 0.0
        %3077 = vmatpush1.xpose.msra.mxu0 0.0
        %3078 = vmatprep.subr.mxu0 0.0
        %3079 = vmatpush1.xpose.msra.mxu0 0.0
        %3080 = vmatprep.subr.mxu0 0.0
        %3081 = vmatpush1.xpose.msra.mxu0 0.0
        %3082 = vmatprep.subr.mxu0 0.0
        %3083 = vmatpush1.xpose.msra.mxu0 0.0
        %3084 = vmatprep.subr.mxu0 0.0
        %3085 = vmatpush1.xpose.msra.mxu0 0.0
        %3086 = vmatprep.subr.mxu0 0.0
        %3087 = vmatpush1.xpose.msra.mxu0 0.0
        %3088 = vmatprep.subr.mxu0 0.0
        %3089 = vmatpush1.xpose.msra.mxu0 0.0
        %3090 = vmatprep.subr.mxu0 0.0
        %3091 = vmatpush1.xpose.msra.mxu0 0.0
        %3092 = vmatprep.subr.mxu0 0.0
        %3093 = vmatpush1.xpose.msra.mxu0 0.0
        %3094 = vmatprep.subr.mxu0 0.0
        %3095 = vmatpush1.xpose.msra.mxu0 0.0
        %3096 = vmatprep.subr.mxu0 0.0
        %3097 = vmatpush1.xpose.msra.mxu0 0.0
        %3098 = vmatprep.subr.mxu0 0.0
        %3099 = vmatpush1.xpose.msra.mxu0 0.0
        %3100 = vmatprep.subr.mxu0 0.0
        %3101 = vmatpush1.xpose.msra.mxu0 0.0
        %3102 = vmatprep.subr.mxu0 0.0
        %3103 = vmatpush1.xpose.msra.mxu0 0.0
        %3104 = vmatprep.subr.mxu0 0.0
        %3105 = vmatpush1.xpose.msra.mxu0 0.0
        %3106 = vmatprep.subr.mxu0 0.0
        %3107 = vmatpush1.xpose.msra.mxu0 0.0
        %3108 = vmatprep.subr.mxu0 0.0
        %3109 = vmatpush1.xpose.msra.mxu0 0.0
        %3110 = vmatprep.mubr.f32.mxu0 0.0
        %3111 = vmatmul.mubr.f32.gmra.mrb[0].mxu0 %v3038
        %v3112 = vpop.f32.mrb[0].mxu0
        %v3113 = vadd.f32 0.0, %v3112
        %v3114 = vpop.f32.mrb[0].mxu0
        %3115 = vdwg.mxu0
        %v3116 = vmul.f32 %v2560, 0.125
        %v3117 = vmul.f32 %v2639, 0.125
        %v3118 = vmul.f32 %v2718, 0.125
        %v3119 = vmul.f32 %v2797, 0.125
        %v3120 = vmul.f32 %v2876, 0.125
        %v3121 = vmul.f32 %v2955, 0.125
        %v3122 = vmul.f32 %v3034, 0.125
        %v3123 = vmul.f32 %v3113, 0.125
        %vm3124 = vcmp.gt.f32.partialorder %v338, 0.0
        %v3125 = vsel %vm3124, 1, 0
        %v3126 = vlaneseq
        %v3127 = vshrl.u32 %v3126, 7
        %v3128 = vsub.s32 0, %v3127
        %v3129 = vrot.slane %v3125, %v3128
        %vm3130 = vcmp.eq.s32.totalorder %v3129, 1
        %v3131 = vsel %vm3130, %v3116, -3.4028235e+38
        %v3132 = vsel %vm3130, %v3117, -3.4028235e+38
        %v3133 = vsel %vm3130, %v3118, -3.4028235e+38
        %v3134 = vsel %vm3130, %v3119, -3.4028235e+38
        %v3135 = vsel %vm3130, %v3120, -3.4028235e+38
        %v3136 = vsel %vm3130, %v3121, -3.4028235e+38
        %v3137 = vsel %vm3130, %v3122, -3.4028235e+38
        %v3138 = vsel %vm3130, %v3123, -3.4028235e+38
        %vm3139 = vcmask 130048
        %v3140 = vsel %vm3139, %v3131, -inf
        %3141 = vmax.xlane.f32.xlu0 %v3140
        %v3142 = vpop.xlane.xlu0 %3141
        %v3143 = vsel %vm3139, %v3132, -inf
        %3144 = vmax.xlane.f32.xlu0 %v3143
        %v3145 = vpop.xlane.xlu0 %3144
        %v3146 = vsel %vm3139, %v3133, -inf
        %3147 = vmax.xlane.f32.xlu0 %v3146
        %v3148 = vpop.xlane.xlu0 %3147
        %v3149 = vsel %vm3139, %v3134, -inf
        %3150 = vmax.xlane.f32.xlu0 %v3149
        %v3151 = vpop.xlane.xlu0 %3150
        %v3152 = vsel %vm3139, %v3135, -inf
        %3153 = vmax.xlane.f32.xlu0 %v3152
        %v3154 = vpop.xlane.xlu0 %3153
        %v3155 = vsel %vm3139, %v3136, -inf
        %3156 = vmax.xlane.f32.xlu0 %v3155
        %v3157 = vpop.xlane.xlu0 %3156
        %v3158 = vsel %vm3139, %v3137, -inf
        %3159 = vmax.xlane.f32.xlu0 %v3158
        %v3160 = vpop.xlane.xlu0 %3159
        %v3161 = vsel %vm3139, %v3138, -inf
        %3162 = vmax.xlane.f32.xlu0 %v3161
        %v3163 = vpop.xlane.xlu0 %3162
        %v3164 = vsub.f32 %v3131, %v3142
        %v3165 = vsub.f32 %v3132, %v3145
        %v3166 = vsub.f32 %v3133, %v3148
        %v3167 = vsub.f32 %v3134, %v3151
        %v3168 = vsub.f32 %v3135, %v3154
        %v3169 = vsub.f32 %v3136, %v3157
        %v3170 = vsub.f32 %v3137, %v3160
        %v3171 = vsub.f32 %v3138, %v3163
        %v3172 = vmul.f32 %v3164, 1.442695
        %v3173 = vpow.pop %v3172
        %v3174 = vmul.f32 %v3165, 1.442695
        %v3175 = vpow.pop %v3174
        %v3176 = vmul.f32 %v3166, 1.442695
        %v3177 = vpow.pop %v3176
        %v3178 = vmul.f32 %v3167, 1.442695
        %v3179 = vpow.pop %v3178
        %v3180 = vmul.f32 %v3168, 1.442695
        %v3181 = vpow.pop %v3180
        %v3182 = vmul.f32 %v3169, 1.442695
        %v3183 = vpow.pop %v3182
        %v3184 = vmul.f32 %v3170, 1.442695
        %v3185 = vpow.pop %v3184
        %v3186 = vmul.f32 %v3171, 1.442695
        %v3187 = vpow.pop %v3186
        %v3188 = vsel %vm3139, %v3173, 0.0
        %3189 = vadd.xlane.f32.xlu0 %v3188
        %v3190 = vpop.xlane.xlu0 %3189
        %v3191 = vsel %vm3139, %v3175, 0.0
        %3192 = vadd.xlane.f32.xlu0 %v3191
        %v3193 = vpop.xlane.xlu0 %3192
        %v3194 = vsel %vm3139, %v3177, 0.0
        %3195 = vadd.xlane.f32.xlu0 %v3194
        %v3196 = vpop.xlane.xlu0 %3195
        %v3197 = vsel %vm3139, %v3179, 0.0
        %3198 = vadd.xlane.f32.xlu0 %v3197
        %v3199 = vpop.xlane.xlu0 %3198
        %v3200 = vsel %vm3139, %v3181, 0.0
        %3201 = vadd.xlane.f32.xlu0 %v3200
        %v3202 = vpop.xlane.xlu0 %3201
        %v3203 = vsel %vm3139, %v3183, 0.0
        %3204 = vadd.xlane.f32.xlu0 %v3203
        %v3205 = vpop.xlane.xlu0 %3204
        %v3206 = vsel %vm3139, %v3185, 0.0
        %3207 = vadd.xlane.f32.xlu0 %v3206
        %v3208 = vpop.xlane.xlu0 %3207
        %v3209 = vsel %vm3139, %v3187, 0.0
        %3210 = vadd.xlane.f32.xlu0 %v3209
        %v3211 = vpop.xlane.xlu0 %3210
        %v3212 = vrcp.pop %v3190
        %v3213 = vrcp.pop %v3193
        %v3214 = vrcp.pop %v3196
        %v3215 = vrcp.pop %v3199
        %v3216 = vrcp.pop %v3202
        %v3217 = vrcp.pop %v3205
        %v3218 = vrcp.pop %v3208
        %v3219 = vrcp.pop %v3211
        %v3220 = vmul.f32 %v3173, %v3212
        %v3221 = vmul.f32 %v3175, %v3213
        %v3222 = vmul.f32 %v3177, %v3214
        %v3223 = vmul.f32 %v3179, %v3215
        %v3224 = vmul.f32 %v3181, %v3216
        %v3225 = vmul.f32 %v3183, %v3217
        %v3226 = vmul.f32 %v3185, %v3218
        %v3227 = vmul.f32 %v3187, %v3219
        %v3229 = vsel %vm3139, %v3220, 0
        %3231 = vmatprep.subr.mxu0 0.0
        %3232 = vmatpush1.msra.mxu0 %v1950
        %3233 = vmatprep.subr.mxu0 0.0
        %3234 = vmatpush1.msra.mxu0 %v1955
        %3235 = vmatprep.subr.mxu0 0.0
        %3236 = vmatpush1.msra.mxu0 0.0
        %3237 = vmatprep.subr.mxu0 0.0
        %3238 = vmatpush1.msra.mxu0 0.0
        %3239 = vmatprep.subr.mxu0 0.0
        %3240 = vmatpush1.msra.mxu0 0.0
        %3241 = vmatprep.subr.mxu0 0.0
        %3242 = vmatpush1.msra.mxu0 0.0
        %3243 = vmatprep.subr.mxu0 0.0
        %3244 = vmatpush1.msra.mxu0 0.0
        %3245 = vmatprep.subr.mxu0 0.0
        %3246 = vmatpush1.msra.mxu0 0.0
        %3247 = vmatprep.subr.mxu0 0.0
        %3248 = vmatpush1.msra.mxu0 0.0
        %3249 = vmatprep.subr.mxu0 0.0
        %3250 = vmatpush1.msra.mxu0 0.0
        %3251 = vmatprep.subr.mxu0 0.0
        %3252 = vmatpush1.msra.mxu0 0.0
        %3253 = vmatprep.subr.mxu0 0.0
        %3254 = vmatpush1.msra.mxu0 0.0
        %3255 = vmatprep.subr.mxu0 0.0
        %3256 = vmatpush1.msra.mxu0 0.0
        %3257 = vmatprep.subr.mxu0 0.0
        %3258 = vmatpush1.msra.mxu0 0.0
        %3259 = vmatprep.subr.mxu0 0.0
        %3260 = vmatpush1.msra.mxu0 0.0
        %3261 = vmatprep.subr.mxu0 0.0
        %3262 = vmatpush1.msra.mxu0 0.0
        %3263 = vmatprep.subr.mxu0 0.0
        %3264 = vmatpush1.msra.mxu0 0.0
        %3265 = vmatprep.subr.mxu0 0.0
        %3266 = vmatpush1.msra.mxu0 0.0
        %3267 = vmatprep.subr.mxu0 0.0
        %3268 = vmatpush1.msra.mxu0 0.0
        %3269 = vmatprep.subr.mxu0 0.0
        %3270 = vmatpush1.msra.mxu0 0.0
        %3271 = vmatprep.subr.mxu0 0.0
        %3272 = vmatpush1.msra.mxu0 0.0
        %3273 = vmatprep.subr.mxu0 0.0
        %3274 = vmatpush1.msra.mxu0 0.0
        %3275 = vmatprep.subr.mxu0 0.0
        %3276 = vmatpush1.msra.mxu0 0.0
        %3277 = vmatprep.subr.mxu0 0.0
        %3278 = vmatpush1.msra.mxu0 0.0
        %3279 = vmatprep.subr.mxu0 0.0
        %3280 = vmatpush1.msra.mxu0 0.0
        %3281 = vmatprep.subr.mxu0 0.0
        %3282 = vmatpush1.msra.mxu0 0.0
        %3283 = vmatprep.subr.mxu0 0.0
        %3284 = vmatpush1.msra.mxu0 0.0
        %3285 = vmatprep.subr.mxu0 0.0
        %3286 = vmatpush1.msra.mxu0 0.0
        %3287 = vmatprep.subr.mxu0 0.0
        %3288 = vmatpush1.msra.mxu0 0.0
        %3289 = vmatprep.subr.mxu0 0.0
        %3290 = vmatpush1.msra.mxu0 0.0
        %3291 = vmatprep.subr.mxu0 0.0
        %3292 = vmatpush1.msra.mxu0 0.0
        %3293 = vmatprep.subr.mxu0 0.0
        %3294 = vmatpush1.msra.mxu0 0.0
        %3295 = vmatprep.mubr.f32.mxu0 0.0
        %3296 = vmatmul.mubr.f32.gmra.mrb[0].mxu0 %v3229
        %v3297 = vpop.f32.mrb[0].mxu0
        %v3298 = vadd.f32 0.0, %v3297
        %v3299 = vpop.f32.mrb[0].mxu0
        %3300 = vdwg.mxu0
        %v3302 = vsel %vm3139, %v3221, 0
        %3304 = vmatprep.subr.mxu0 0.0
        %3305 = vmatpush1.msra.mxu0 %v2025
        %3306 = vmatprep.subr.mxu0 0.0
        %3307 = vmatpush1.msra.mxu0 %v2030
        %3308 = vmatprep.subr.mxu0 0.0
        %3309 = vmatpush1.msra.mxu0 0.0
        %3310 = vmatprep.subr.mxu0 0.0
        %3311 = vmatpush1.msra.mxu0 0.0
        %3312 = vmatprep.subr.mxu0 0.0
        %3313 = vmatpush1.msra.mxu0 0.0
        %3314 = vmatprep.subr.mxu0 0.0
        %3315 = vmatpush1.msra.mxu0 0.0
        %3316 = vmatprep.subr.mxu0 0.0
        %3317 = vmatpush1.msra.mxu0 0.0
        %3318 = vmatprep.subr.mxu0 0.0
        %3319 = vmatpush1.msra.mxu0 0.0
        %3320 = vmatprep.subr.mxu0 0.0
        %3321 = vmatpush1.msra.mxu0 0.0
        %3322 = vmatprep.subr.mxu0 0.0
        %3323 = vmatpush1.msra.mxu0 0.0
        %3324 = vmatprep.subr.mxu0 0.0
        %3325 = vmatpush1.msra.mxu0 0.0
        %3326 = vmatprep.subr.mxu0 0.0
        %3327 = vmatpush1.msra.mxu0 0.0
        %3328 = vmatprep.subr.mxu0 0.0
        %3329 = vmatpush1.msra.mxu0 0.0
        %3330 = vmatprep.subr.mxu0 0.0
        %3331 = vmatpush1.msra.mxu0 0.0
        %3332 = vmatprep.subr.mxu0 0.0
        %3333 = vmatpush1.msra.mxu0 0.0
        %3334 = vmatprep.subr.mxu0 0.0
        %3335 = vmatpush1.msra.mxu0 0.0
        %3336 = vmatprep.subr.mxu0 0.0
        %3337 = vmatpush1.msra.mxu0 0.0
        %3338 = vmatprep.subr.mxu0 0.0
        %3339 = vmatpush1.msra.mxu0 0.0
        %3340 = vmatprep.subr.mxu0 0.0
        %3341 = vmatpush1.msra.mxu0 0.0
        %3342 = vmatprep.subr.mxu0 0.0
        %3343 = vmatpush1.msra.mxu0 0.0
        %3344 = vmatprep.subr.mxu0 0.0
        %3345 = vmatpush1.msra.mxu0 0.0
        %3346 = vmatprep.subr.mxu0 0.0
        %3347 = vmatpush1.msra.mxu0 0.0
        %3348 = vmatprep.subr.mxu0 0.0
        %3349 = vmatpush1.msra.mxu0 0.0
        %3350 = vmatprep.subr.mxu0 0.0
        %3351 = vmatpush1.msra.mxu0 0.0
        %3352 = vmatprep.subr.mxu0 0.0
        %3353 = vmatpush1.msra.mxu0 0.0
        %3354 = vmatprep.subr.mxu0 0.0
        %3355 = vmatpush1.msra.mxu0 0.0
        %3356 = vmatprep.subr.mxu0 0.0
        %3357 = vmatpush1.msra.mxu0 0.0
        %3358 = vmatprep.subr.mxu0 0.0
        %3359 = vmatpush1.msra.mxu0 0.0
        %3360 = vmatprep.subr.mxu0 0.0
        %3361 = vmatpush1.msra.mxu0 0.0
        %3362 = vmatprep.subr.mxu0 0.0
        %3363 = vmatpush1.msra.mxu0 0.0
        %3364 = vmatprep.subr.mxu0 0.0
        %3365 = vmatpush1.msra.mxu0 0.0
        %3366 = vmatprep.subr.mxu0 0.0
        %3367 = vmatpush1.msra.mxu0 0.0
        %3368 = vmatprep.mubr.f32.mxu0 0.0
        %3369 = vmatmul.mubr.f32.gmra.mrb[0].mxu0 %v3302
        %v3370 = vpop.f32.mrb[0].mxu0
        %v3371 = vadd.f32 0.0, %v3370
        %v3372 = vpop.f32.mrb[0].mxu0
        %3373 = vdwg.mxu0
        %v3375 = vsel %vm3139, %v3222, 0
        %3377 = vmatprep.subr.mxu0 0.0
        %3378 = vmatpush1.msra.mxu0 %v2100
        %3379 = vmatprep.subr.mxu0 0.0
        %3380 = vmatpush1.msra.mxu0 %v2105
        %3381 = vmatprep.subr.mxu0 0.0
        %3382 = vmatpush1.msra.mxu0 0.0
        %3383 = vmatprep.subr.mxu0 0.0
        %3384 = vmatpush1.msra.mxu0 0.0
        %3385 = vmatprep.subr.mxu0 0.0
        %3386 = vmatpush1.msra.mxu0 0.0
        %3387 = vmatprep.subr.mxu0 0.0
        %3388 = vmatpush1.msra.mxu0 0.0
        %3389 = vmatprep.subr.mxu0 0.0
        %3390 = vmatpush1.msra.mxu0 0.0
        %3391 = vmatprep.subr.mxu0 0.0
        %3392 = vmatpush1.msra.mxu0 0.0
        %3393 = vmatprep.subr.mxu0 0.0
        %3394 = vmatpush1.msra.mxu0 0.0
        %3395 = vmatprep.subr.mxu0 0.0
        %3396 = vmatpush1.msra.mxu0 0.0
        %3397 = vmatprep.subr.mxu0 0.0
        %3398 = vmatpush1.msra.mxu0 0.0
        %3399 = vmatprep.subr.mxu0 0.0
        %3400 = vmatpush1.msra.mxu0 0.0
        %3401 = vmatprep.subr.mxu0 0.0
        %3402 = vmatpush1.msra.mxu0 0.0
        %3403 = vmatprep.subr.mxu0 0.0
        %3404 = vmatpush1.msra.mxu0 0.0
        %3405 = vmatprep.subr.mxu0 0.0
        %3406 = vmatpush1.msra.mxu0 0.0
        %3407 = vmatprep.subr.mxu0 0.0
        %3408 = vmatpush1.msra.mxu0 0.0
        %3409 = vmatprep.subr.mxu0 0.0
        %3410 = vmatpush1.msra.mxu0 0.0
        %3411 = vmatprep.subr.mxu0 0.0
        %3412 = vmatpush1.msra.mxu0 0.0
        %3413 = vmatprep.subr.mxu0 0.0
        %3414 = vmatpush1.msra.mxu0 0.0
        %3415 = vmatprep.subr.mxu0 0.0
        %3416 = vmatpush1.msra.mxu0 0.0
        %3417 = vmatprep.subr.mxu0 0.0
        %3418 = vmatpush1.msra.mxu0 0.0
        %3419 = vmatprep.subr.mxu0 0.0
        %3420 = vmatpush1.msra.mxu0 0.0
        %3421 = vmatprep.subr.mxu0 0.0
        %3422 = vmatpush1.msra.mxu0 0.0
        %3423 = vmatprep.subr.mxu0 0.0
        %3424 = vmatpush1.msra.mxu0 0.0
        %3425 = vmatprep.subr.mxu0 0.0
        %3426 = vmatpush1.msra.mxu0 0.0
        %3427 = vmatprep.subr.mxu0 0.0
        %3428 = vmatpush1.msra.mxu0 0.0
        %3429 = vmatprep.subr.mxu0 0.0
        %3430 = vmatpush1.msra.mxu0 0.0
        %3431 = vmatprep.subr.mxu0 0.0
        %3432 = vmatpush1.msra.mxu0 0.0
        %3433 = vmatprep.subr.mxu0 0.0
        %3434 = vmatpush1.msra.mxu0 0.0
        %3435 = vmatprep.subr.mxu0 0.0
        %3436 = vmatpush1.msra.mxu0 0.0
        %3437 = vmatprep.subr.mxu0 0.0
        %3438 = vmatpush1.msra.mxu0 0.0
        %3439 = vmatprep.subr.mxu0 0.0
        %3440 = vmatpush1.msra.mxu0 0.0
        %3441 = vmatprep.mubr.f32.mxu0 0.0
        %3442 = vmatmul.mubr.f32.gmra.mrb[0].mxu0 %v3375
        %v3443 = vpop.f32.mrb[0].mxu0
        %v3444 = vadd.f32 0.0, %v3443
        %v3445 = vpop.f32.mrb[0].mxu0
        %3446 = vdwg.mxu0
        %v3448 = vsel %vm3139, %v3223, 0
        %3450 = vmatprep.subr.mxu0 0.0
        %3451 = vmatpush1.msra.mxu0 %v2175
        %3452 = vmatprep.subr.mxu0 0.0
        %3453 = vmatpush1.msra.mxu0 %v2180
        %3454 = vmatprep.subr.mxu0 0.0
        %3455 = vmatpush1.msra.mxu0 0.0
        %3456 = vmatprep.subr.mxu0 0.0
        %3457 = vmatpush1.msra.mxu0 0.0
        %3458 = vmatprep.subr.mxu0 0.0
        %3459 = vmatpush1.msra.mxu0 0.0
        %3460 = vmatprep.subr.mxu0 0.0
        %3461 = vmatpush1.msra.mxu0 0.0
        %3462 = vmatprep.subr.mxu0 0.0
        %3463 = vmatpush1.msra.mxu0 0.0
        %3464 = vmatprep.subr.mxu0 0.0
        %3465 = vmatpush1.msra.mxu0 0.0
        %3466 = vmatprep.subr.mxu0 0.0
        %3467 = vmatpush1.msra.mxu0 0.0
        %3468 = vmatprep.subr.mxu0 0.0
        %3469 = vmatpush1.msra.mxu0 0.0
        %3470 = vmatprep.subr.mxu0 0.0
        %3471 = vmatpush1.msra.mxu0 0.0
        %3472 = vmatprep.subr.mxu0 0.0
        %3473 = vmatpush1.msra.mxu0 0.0
        %3474 = vmatprep.subr.mxu0 0.0
        %3475 = vmatpush1.msra.mxu0 0.0
        %3476 = vmatprep.subr.mxu0 0.0
        %3477 = vmatpush1.msra.mxu0 0.0
        %3478 = vmatprep.subr.mxu0 0.0
        %3479 = vmatpush1.msra.mxu0 0.0
        %3480 = vmatprep.subr.mxu0 0.0
        %3481 = vmatpush1.msra.mxu0 0.0
        %3482 = vmatprep.subr.mxu0 0.0
        %3483 = vmatpush1.msra.mxu0 0.0
        %3484 = vmatprep.subr.mxu0 0.0
        %3485 = vmatpush1.msra.mxu0 0.0
        %3486 = vmatprep.subr.mxu0 0.0
        %3487 = vmatpush1.msra.mxu0 0.0
        %3488 = vmatprep.subr.mxu0 0.0
        %3489 = vmatpush1.msra.mxu0 0.0
        %3490 = vmatprep.subr.mxu0 0.0
        %3491 = vmatpush1.msra.mxu0 0.0
        %3492 = vmatprep.subr.mxu0 0.0
        %3493 = vmatpush1.msra.mxu0 0.0
        %3494 = vmatprep.subr.mxu0 0.0
        %3495 = vmatpush1.msra.mxu0 0.0
        %3496 = vmatprep.subr.mxu0 0.0
        %3497 = vmatpush1.msra.mxu0 0.0
        %3498 = vmatprep.subr.mxu0 0.0
        %3499 = vmatpush1.msra.mxu0 0.0
        %3500 = vmatprep.subr.mxu0 0.0
        %3501 = vmatpush1.msra.mxu0 0.0
        %3502 = vmatprep.subr.mxu0 0.0
        %3503 = vmatpush1.msra.mxu0 0.0
        %3504 = vmatprep.subr.mxu0 0.0
        %3505 = vmatpush1.msra.mxu0 0.0
        %3506 = vmatprep.subr.mxu0 0.0
        %3507 = vmatpush1.msra.mxu0 0.0
        %3508 = vmatprep.subr.mxu0 0.0
        %3509 = vmatpush1.msra.mxu0 0.0
        %3510 = vmatprep.subr.mxu0 0.0
        %3511 = vmatpush1.msra.mxu0 0.0
        %3512 = vmatprep.subr.mxu0 0.0
        %3513 = vmatpush1.msra.mxu0 0.0
        %3514 = vmatprep.mubr.f32.mxu0 0.0
        %3515 = vmatmul.mubr.f32.gmra.mrb[0].mxu0 %v3448
        %v3516 = vpop.f32.mrb[0].mxu0
        %v3517 = vadd.f32 0.0, %v3516
        %v3518 = vpop.f32.mrb[0].mxu0
        %3519 = vdwg.mxu0
        %v3521 = vsel %vm3139, %v3224, 0
        %3523 = vmatprep.subr.mxu0 0.0
        %3524 = vmatpush1.msra.mxu0 %v2250
        %3525 = vmatprep.subr.mxu0 0.0
        %3526 = vmatpush1.msra.mxu0 %v2255
        %3527 = vmatprep.subr.mxu0 0.0
        %3528 = vmatpush1.msra.mxu0 0.0
        %3529 = vmatprep.subr.mxu0 0.0
        %3530 = vmatpush1.msra.mxu0 0.0
        %3531 = vmatprep.subr.mxu0 0.0
        %3532 = vmatpush1.msra.mxu0 0.0
        %3533 = vmatprep.subr.mxu0 0.0
        %3534 = vmatpush1.msra.mxu0 0.0
        %3535 = vmatprep.subr.mxu0 0.0
        %3536 = vmatpush1.msra.mxu0 0.0
        %3537 = vmatprep.subr.mxu0 0.0
        %3538 = vmatpush1.msra.mxu0 0.0
        %3539 = vmatprep.subr.mxu0 0.0
        %3540 = vmatpush1.msra.mxu0 0.0
        %3541 = vmatprep.subr.mxu0 0.0
        %3542 = vmatpush1.msra.mxu0 0.0
        %3543 = vmatprep.subr.mxu0 0.0
        %3544 = vmatpush1.msra.mxu0 0.0
        %3545 = vmatprep.subr.mxu0 0.0
        %3546 = vmatpush1.msra.mxu0 0.0
        %3547 = vmatprep.subr.mxu0 0.0
        %3548 = vmatpush1.msra.mxu0 0.0
        %3549 = vmatprep.subr.mxu0 0.0
        %3550 = vmatpush1.msra.mxu0 0.0
        %3551 = vmatprep.subr.mxu0 0.0
        %3552 = vmatpush1.msra.mxu0 0.0
        %3553 = vmatprep.subr.mxu0 0.0
        %3554 = vmatpush1.msra.mxu0 0.0
        %3555 = vmatprep.subr.mxu0 0.0
        %3556 = vmatpush1.msra.mxu0 0.0
        %3557 = vmatprep.subr.mxu0 0.0
        %3558 = vmatpush1.msra.mxu0 0.0
        %3559 = vmatprep.subr.mxu0 0.0
        %3560 = vmatpush1.msra.mxu0 0.0
        %3561 = vmatprep.subr.mxu0 0.0
        %3562 = vmatpush1.msra.mxu0 0.0
        %3563 = vmatprep.subr.mxu0 0.0
        %3564 = vmatpush1.msra.mxu0 0.0
        %3565 = vmatprep.subr.mxu0 0.0
        %3566 = vmatpush1.msra.mxu0 0.0
        %3567 = vmatprep.subr.mxu0 0.0
        %3568 = vmatpush1.msra.mxu0 0.0
        %3569 = vmatprep.subr.mxu0 0.0
        %3570 = vmatpush1.msra.mxu0 0.0
        %3571 = vmatprep.subr.mxu0 0.0
        %3572 = vmatpush1.msra.mxu0 0.0
        %3573 = vmatprep.subr.mxu0 0.0
        %3574 = vmatpush1.msra.mxu0 0.0
        %3575 = vmatprep.subr.mxu0 0.0
        %3576 = vmatpush1.msra.mxu0 0.0
        %3577 = vmatprep.subr.mxu0 0.0
        %3578 = vmatpush1.msra.mxu0 0.0
        %3579 = vmatprep.subr.mxu0 0.0
        %3580 = vmatpush1.msra.mxu0 0.0
        %3581 = vmatprep.subr.mxu0 0.0
        %3582 = vmatpush1.msra.mxu0 0.0
        %3583 = vmatprep.subr.mxu0 0.0
        %3584 = vmatpush1.msra.mxu0 0.0
        %3585 = vmatprep.subr.mxu0 0.0
        %3586 = vmatpush1.msra.mxu0 0.0
        %3587 = vmatprep.mubr.f32.mxu0 0.0
        %3588 = vmatmul.mubr.f32.gmra.mrb[0].mxu0 %v3521
        %v3589 = vpop.f32.mrb[0].mxu0
        %v3590 = vadd.f32 0.0, %v3589
        %v3591 = vpop.f32.mrb[0].mxu0
        %3592 = vdwg.mxu0
        %v3594 = vsel %vm3139, %v3225, 0
        %3596 = vmatprep.subr.mxu0 0.0
        %3597 = vmatpush1.msra.mxu0 %v2325
        %3598 = vmatprep.subr.mxu0 0.0
        %3599 = vmatpush1.msra.mxu0 %v2330
        %3600 = vmatprep.subr.mxu0 0.0
        %3601 = vmatpush1.msra.mxu0 0.0
        %3602 = vmatprep.subr.mxu0 0.0
        %3603 = vmatpush1.msra.mxu0 0.0
        %3604 = vmatprep.subr.mxu0 0.0
        %3605 = vmatpush1.msra.mxu0 0.0
        %3606 = vmatprep.subr.mxu0 0.0
        %3607 = vmatpush1.msra.mxu0 0.0
        %3608 = vmatprep.subr.mxu0 0.0
        %3609 = vmatpush1.msra.mxu0 0.0
        %3610 = vmatprep.subr.mxu0 0.0
        %3611 = vmatpush1.msra.mxu0 0.0
        %3612 = vmatprep.subr.mxu0 0.0
        %3613 = vmatpush1.msra.mxu0 0.0
        %3614 = vmatprep.subr.mxu0 0.0
        %3615 = vmatpush1.msra.mxu0 0.0
        %3616 = vmatprep.subr.mxu0 0.0
        %3617 = vmatpush1.msra.mxu0 0.0
        %3618 = vmatprep.subr.mxu0 0.0
        %3619 = vmatpush1.msra.mxu0 0.0
        %3620 = vmatprep.subr.mxu0 0.0
        %3621 = vmatpush1.msra.mxu0 0.0
        %3622 = vmatprep.subr.mxu0 0.0
        %3623 = vmatpush1.msra.mxu0 0.0
        %3624 = vmatprep.subr.mxu0 0.0
        %3625 = vmatpush1.msra.mxu0 0.0
        %3626 = vmatprep.subr.mxu0 0.0
        %3627 = vmatpush1.msra.mxu0 0.0
        %3628 = vmatprep.subr.mxu0 0.0
        %3629 = vmatpush1.msra.mxu0 0.0
        %3630 = vmatprep.subr.mxu0 0.0
        %3631 = vmatpush1.msra.mxu0 0.0
        %3632 = vmatprep.subr.mxu0 0.0
        %3633 = vmatpush1.msra.mxu0 0.0
        %3634 = vmatprep.subr.mxu0 0.0
        %3635 = vmatpush1.msra.mxu0 0.0
        %3636 = vmatprep.subr.mxu0 0.0
        %3637 = vmatpush1.msra.mxu0 0.0
        %3638 = vmatprep.subr.mxu0 0.0
        %3639 = vmatpush1.msra.mxu0 0.0
        %3640 = vmatprep.subr.mxu0 0.0
        %3641 = vmatpush1.msra.mxu0 0.0
        %3642 = vmatprep.subr.mxu0 0.0
        %3643 = vmatpush1.msra.mxu0 0.0
        %3644 = vmatprep.subr.mxu0 0.0
        %3645 = vmatpush1.msra.mxu0 0.0
        %3646 = vmatprep.subr.mxu0 0.0
        %3647 = vmatpush1.msra.mxu0 0.0
        %3648 = vmatprep.subr.mxu0 0.0
        %3649 = vmatpush1.msra.mxu0 0.0
        %3650 = vmatprep.subr.mxu0 0.0
        %3651 = vmatpush1.msra.mxu0 0.0
        %3652 = vmatprep.subr.mxu0 0.0
        %3653 = vmatpush1.msra.mxu0 0.0
        %3654 = vmatprep.subr.mxu0 0.0
        %3655 = vmatpush1.msra.mxu0 0.0
        %3656 = vmatprep.subr.mxu0 0.0
        %3657 = vmatpush1.msra.mxu0 0.0
        %3658 = vmatprep.subr.mxu0 0.0
        %3659 = vmatpush1.msra.mxu0 0.0
        %3660 = vmatprep.mubr.f32.mxu0 0.0
        %3661 = vmatmul.mubr.f32.gmra.mrb[0].mxu0 %v3594
        %v3662 = vpop.f32.mrb[0].mxu0
        %v3663 = vadd.f32 0.0, %v3662
        %v3664 = vpop.f32.mrb[0].mxu0
        %3665 = vdwg.mxu0
        %v3667 = vsel %vm3139, %v3226, 0
        %3669 = vmatprep.subr.mxu0 0.0
        %3670 = vmatpush1.msra.mxu0 %v2400
        %3671 = vmatprep.subr.mxu0 0.0
        %3672 = vmatpush1.msra.mxu0 %v2405
        %3673 = vmatprep.subr.mxu0 0.0
        %3674 = vmatpush1.msra.mxu0 0.0
        %3675 = vmatprep.subr.mxu0 0.0
        %3676 = vmatpush1.msra.mxu0 0.0
        %3677 = vmatprep.subr.mxu0 0.0
        %3678 = vmatpush1.msra.mxu0 0.0
        %3679 = vmatprep.subr.mxu0 0.0
        %3680 = vmatpush1.msra.mxu0 0.0
        %3681 = vmatprep.subr.mxu0 0.0
        %3682 = vmatpush1.msra.mxu0 0.0
        %3683 = vmatprep.subr.mxu0 0.0
        %3684 = vmatpush1.msra.mxu0 0.0
        %3685 = vmatprep.subr.mxu0 0.0
        %3686 = vmatpush1.msra.mxu0 0.0
        %3687 = vmatprep.subr.mxu0 0.0
        %3688 = vmatpush1.msra.mxu0 0.0
        %3689 = vmatprep.subr.mxu0 0.0
        %3690 = vmatpush1.msra.mxu0 0.0
        %3691 = vmatprep.subr.mxu0 0.0
        %3692 = vmatpush1.msra.mxu0 0.0
        %3693 = vmatprep.subr.mxu0 0.0
        %3694 = vmatpush1.msra.mxu0 0.0
        %3695 = vmatprep.subr.mxu0 0.0
        %3696 = vmatpush1.msra.mxu0 0.0
        %3697 = vmatprep.subr.mxu0 0.0
        %3698 = vmatpush1.msra.mxu0 0.0
        %3699 = vmatprep.subr.mxu0 0.0
        %3700 = vmatpush1.msra.mxu0 0.0
        %3701 = vmatprep.subr.mxu0 0.0
        %3702 = vmatpush1.msra.mxu0 0.0
        %3703 = vmatprep.subr.mxu0 0.0
        %3704 = vmatpush1.msra.mxu0 0.0
        %3705 = vmatprep.subr.mxu0 0.0
        %3706 = vmatpush1.msra.mxu0 0.0
        %3707 = vmatprep.subr.mxu0 0.0
        %3708 = vmatpush1.msra.mxu0 0.0
        %3709 = vmatprep.subr.mxu0 0.0
        %3710 = vmatpush1.msra.mxu0 0.0
        %3711 = vmatprep.subr.mxu0 0.0
        %3712 = vmatpush1.msra.mxu0 0.0
        %3713 = vmatprep.subr.mxu0 0.0
        %3714 = vmatpush1.msra.mxu0 0.0
        %3715 = vmatprep.subr.mxu0 0.0
        %3716 = vmatpush1.msra.mxu0 0.0
        %3717 = vmatprep.subr.mxu0 0.0
        %3718 = vmatpush1.msra.mxu0 0.0
        %3719 = vmatprep.subr.mxu0 0.0
        %3720 = vmatpush1.msra.mxu0 0.0
        %3721 = vmatprep.subr.mxu0 0.0
        %3722 = vmatpush1.msra.mxu0 0.0
        %3723 = vmatprep.subr.mxu0 0.0
        %3724 = vmatpush1.msra.mxu0 0.0
        %3725 = vmatprep.subr.mxu0 0.0
        %3726 = vmatpush1.msra.mxu0 0.0
        %3727 = vmatprep.subr.mxu0 0.0
        %3728 = vmatpush1.msra.mxu0 0.0
        %3729 = vmatprep.subr.mxu0 0.0
        %3730 = vmatpush1.msra.mxu0 0.0
        %3731 = vmatprep.subr.mxu0 0.0
        %3732 = vmatpush1.msra.mxu0 0.0
        %3733 = vmatprep.mubr.f32.mxu0 0.0
        %3734 = vmatmul.mubr.f32.gmra.mrb[0].mxu0 %v3667
        %v3735 = vpop.f32.mrb[0].mxu0
        %v3736 = vadd.f32 0.0, %v3735
        %v3737 = vpop.f32.mrb[0].mxu0
        %3738 = vdwg.mxu0
        %v3740 = vsel %vm3139, %v3227, 0
        %3742 = vmatprep.subr.mxu0 0.0
        %3743 = vmatpush1.msra.mxu0 %v2475
        %3744 = vmatprep.subr.mxu0 0.0
        %3745 = vmatpush1.msra.mxu0 %v2480
        %3746 = vmatprep.subr.mxu0 0.0
        %3747 = vmatpush1.msra.mxu0 0.0
        %3748 = vmatprep.subr.mxu0 0.0
        %3749 = vmatpush1.msra.mxu0 0.0
        %3750 = vmatprep.subr.mxu0 0.0
        %3751 = vmatpush1.msra.mxu0 0.0
        %3752 = vmatprep.subr.mxu0 0.0
        %3753 = vmatpush1.msra.mxu0 0.0
        %3754 = vmatprep.subr.mxu0 0.0
        %3755 = vmatpush1.msra.mxu0 0.0
        %3756 = vmatprep.subr.mxu0 0.0
        %3757 = vmatpush1.msra.mxu0 0.0
        %3758 = vmatprep.subr.mxu0 0.0
        %3759 = vmatpush1.msra.mxu0 0.0
        %3760 = vmatprep.subr.mxu0 0.0
        %3761 = vmatpush1.msra.mxu0 0.0
        %3762 = vmatprep.subr.mxu0 0.0
        %3763 = vmatpush1.msra.mxu0 0.0
        %3764 = vmatprep.subr.mxu0 0.0
        %3765 = vmatpush1.msra.mxu0 0.0
        %3766 = vmatprep.subr.mxu0 0.0
        %3767 = vmatpush1.msra.mxu0 0.0
        %3768 = vmatprep.subr.mxu0 0.0
        %3769 = vmatpush1.msra.mxu0 0.0
        %3770 = vmatprep.subr.mxu0 0.0
        %3771 = vmatpush1.msra.mxu0 0.0
        %3772 = vmatprep.subr.mxu0 0.0
        %3773 = vmatpush1.msra.mxu0 0.0
        %3774 = vmatprep.subr.mxu0 0.0
        %3775 = vmatpush1.msra.mxu0 0.0
        %3776 = vmatprep.subr.mxu0 0.0
        %3777 = vmatpush1.msra.mxu0 0.0
        %3778 = vmatprep.subr.mxu0 0.0
        %3779 = vmatpush1.msra.mxu0 0.0
        %3780 = vmatprep.subr.mxu0 0.0
        %3781 = vmatpush1.msra.mxu0 0.0
        %3782 = vmatprep.subr.mxu0 0.0
        %3783 = vmatpush1.msra.mxu0 0.0
        %3784 = vmatprep.subr.mxu0 0.0
        %3785 = vmatpush1.msra.mxu0 0.0
        %3786 = vmatprep.subr.mxu0 0.0
        %3787 = vmatpush1.msra.mxu0 0.0
        %3788 = vmatprep.subr.mxu0 0.0
        %3789 = vmatpush1.msra.mxu0 0.0
        %3790 = vmatprep.subr.mxu0 0.0
        %3791 = vmatpush1.msra.mxu0 0.0
        %3792 = vmatprep.subr.mxu0 0.0
        %3793 = vmatpush1.msra.mxu0 0.0
        %3794 = vmatprep.subr.mxu0 0.0
        %3795 = vmatpush1.msra.mxu0 0.0
        %3796 = vmatprep.subr.mxu0 0.0
        %3797 = vmatpush1.msra.mxu0 0.0
        %3798 = vmatprep.subr.mxu0 0.0
        %3799 = vmatpush1.msra.mxu0 0.0
        %3800 = vmatprep.subr.mxu0 0.0
        %3801 = vmatpush1.msra.mxu0 0.0
        %3802 = vmatprep.subr.mxu0 0.0
        %3803 = vmatpush1.msra.mxu0 0.0
        %3804 = vmatprep.subr.mxu0 0.0
        %3805 = vmatpush1.msra.mxu0 0.0
        %3806 = vmatprep.mubr.f32.mxu0 0.0
        %3807 = vmatmul.mubr.f32.gmra.mrb[0].mxu0 %v3740
        %v3808 = vpop.f32.mrb[0].mxu0
        %v3809 = vadd.f32 0.0, %v3808
        %v3810 = vpop.f32.mrb[0].mxu0
        %3811 = vdwg.mxu0
        %v3812 = vld [vmem:[%s6] sm:$0xff]
        %v3813 = vld [vmem:[%s6 + $0x8] sm:$0xff]
        %v3814 = vld [vmem:[%s6 + $0x10] sm:$0xff]
        %v3815 = vld [vmem:[%s6 + $0x18] sm:$0xff]
        %v3816 = vld [vmem:[%s6 + $0x20] sm:$0xff]
        %v3817 = vld [vmem:[%s6 + $0x28] sm:$0xff]
        %v3818 = vld [vmem:[%s6 + $0x30] sm:$0xff]
        %v3819 = vld [vmem:[%s6 + $0x38] sm:$0xff]
        %v3820 = vld [vmem:[%s6 + $0x40] sm:$0xff]
        %v3821 = vld [vmem:[%s6 + $0x48] sm:$0xff]
        %v3822 = vld [vmem:[%s6 + $0x50] sm:$0xff]
        %v3823 = vld [vmem:[%s6 + $0x58] sm:$0xff]
        %v3824 = vld [vmem:[%s6 + $0x60] sm:$0xff]
        %v3825 = vld [vmem:[%s6 + $0x68] sm:$0xff]
        %v3826 = vld [vmem:[%s6 + $0x70] sm:$0xff]
        %v3827 = vld [vmem:[%s6 + $0x78] sm:$0xff]
        %v3828 = vld [vmem:[%s6 + $0x80] sm:$0xff]
        %v3829 = vld [vmem:[%s6 + $0x88] sm:$0xff]
        %v3830 = vld [vmem:[%s6 + $0x90] sm:$0xff]
        %v3831 = vld [vmem:[%s6 + $0x98] sm:$0xff]
        %v3832 = vld [vmem:[%s6 + $0xa0] sm:$0xff]
        %v3833 = vld [vmem:[%s6 + $0xa8] sm:$0xff]
        %v3834 = vld [vmem:[%s6 + $0xb0] sm:$0xff]
        %v3835 = vld [vmem:[%s6 + $0xb8] sm:$0xff]
        %v3836 = vld [vmem:[%s6 + $0xc0] sm:$0xff]
        %v3837 = vld [vmem:[%s6 + $0xc8] sm:$0xff]
        %v3838 = vld [vmem:[%s6 + $0xd0] sm:$0xff]
        %v3839 = vld [vmem:[%s6 + $0xd8] sm:$0xff]
        %v3840 = vld [vmem:[%s6 + $0xe0] sm:$0xff]
        %v3841 = vld [vmem:[%s6 + $0xe8] sm:$0xff]
        %v3842 = vld [vmem:[%s6 + $0xf0] sm:$0xff]
        %v3843 = vld [vmem:[%s6 + $0xf8] sm:$0xff]
        %v3844 = vld [vmem:[%s6 + $0x100] sm:$0xff]
        %v3845 = vld [vmem:[%s6 + $0x108] sm:$0xff]
        %v3846 = vld [vmem:[%s6 + $0x110] sm:$0xff]
        %v3847 = vld [vmem:[%s6 + $0x118] sm:$0xff]
        %v3848 = vld [vmem:[%s6 + $0x120] sm:$0xff]
        %v3849 = vld [vmem:[%s6 + $0x128] sm:$0xff]
        %v3850 = vld [vmem:[%s6 + $0x130] sm:$0xff]
        %v3851 = vld [vmem:[%s6 + $0x138] sm:$0xff]
        %v3852 = vld [vmem:[%s6 + $0x140] sm:$0xff]
        %v3853 = vld [vmem:[%s6 + $0x148] sm:$0xff]
        %v3854 = vld [vmem:[%s6 + $0x150] sm:$0xff]
        %v3855 = vld [vmem:[%s6 + $0x158] sm:$0xff]
        %v3856 = vld [vmem:[%s6 + $0x160] sm:$0xff]
        %v3857 = vld [vmem:[%s6 + $0x168] sm:$0xff]
        %v3858 = vld [vmem:[%s6 + $0x170] sm:$0xff]
        %v3859 = vld [vmem:[%s6 + $0x178] sm:$0xff]
        %v3860 = vld [vmem:[%s6 + $0x180] sm:$0xff]
        %v3861 = vld [vmem:[%s6 + $0x188] sm:$0xff]
        %v3862 = vld [vmem:[%s6 + $0x190] sm:$0xff]
        %v3863 = vld [vmem:[%s6 + $0x198] sm:$0xff]
        %v3864 = vld [vmem:[%s6 + $0x1a0] sm:$0xff]
        %v3865 = vld [vmem:[%s6 + $0x1a8] sm:$0xff]
        %v3866 = vld [vmem:[%s6 + $0x1b0] sm:$0xff]
        %v3867 = vld [vmem:[%s6 + $0x1b8] sm:$0xff]
        %v3868 = vld [vmem:[%s6 + $0x1c0] sm:$0xff]
        %v3869 = vld [vmem:[%s6 + $0x1c8] sm:$0xff]
        %v3870 = vld [vmem:[%s6 + $0x1d0] sm:$0xff]
        %v3871 = vld [vmem:[%s6 + $0x1d8] sm:$0xff]
        %v3872 = vld [vmem:[%s6 + $0x1e0] sm:$0xff]
        %v3873 = vld [vmem:[%s6 + $0x1e8] sm:$0xff]
        %v3874 = vld [vmem:[%s6 + $0x1f0] sm:$0xff]
        %v3875 = vld [vmem:[%s6 + $0x1f8] sm:$0xff]
        %v3877 = vsel %vm2483, %v3298, 0
        %3879 = vmatprep.subr.mxu0 0.0
        %3880 = vmatpush1.msra.mxu0 %v3812
        %3881 = vmatprep.subr.mxu0 0.0
        %3882 = vmatpush1.msra.mxu0 %v3813
        %3883 = vmatprep.subr.mxu0 0.0
        %3884 = vmatpush1.msra.mxu0 %v3814
        %3885 = vmatprep.subr.mxu0 0.0
        %3886 = vmatpush1.msra.mxu0 %v3815
        %3887 = vmatprep.subr.mxu0 0.0
        %3888 = vmatpush1.msra.mxu0 %v3816
        %3889 = vmatprep.subr.mxu0 0.0
        %3890 = vmatpush1.msra.mxu0 %v3817
        %3891 = vmatprep.subr.mxu0 0.0
        %3892 = vmatpush1.msra.mxu0 %v3818
        %3893 = vmatprep.subr.mxu0 0.0
        %3894 = vmatpush1.msra.mxu0 %v3819
        %3895 = vmatprep.subr.mxu0 0.0
        %3896 = vmatpush1.msra.mxu0 0.0
        %3897 = vmatprep.subr.mxu0 0.0
        %3898 = vmatpush1.msra.mxu0 0.0
        %3899 = vmatprep.subr.mxu0 0.0
        %3900 = vmatpush1.msra.mxu0 0.0
        %3901 = vmatprep.subr.mxu0 0.0
        %3902 = vmatpush1.msra.mxu0 0.0
        %3903 = vmatprep.subr.mxu0 0.0
        %3904 = vmatpush1.msra.mxu0 0.0
        %3905 = vmatprep.subr.mxu0 0.0
        %3906 = vmatpush1.msra.mxu0 0.0
        %3907 = vmatprep.subr.mxu0 0.0
        %3908 = vmatpush1.msra.mxu0 0.0
        %3909 = vmatprep.subr.mxu0 0.0
        %3910 = vmatpush1.msra.mxu0 0.0
        %3911 = vmatprep.subr.mxu0 0.0
        %3912 = vmatpush1.msra.mxu0 0.0
        %3913 = vmatprep.subr.mxu0 0.0
        %3914 = vmatpush1.msra.mxu0 0.0
        %3915 = vmatprep.subr.mxu0 0.0
        %3916 = vmatpush1.msra.mxu0 0.0
        %3917 = vmatprep.subr.mxu0 0.0
        %3918 = vmatpush1.msra.mxu0 0.0
        %3919 = vmatprep.subr.mxu0 0.0
        %3920 = vmatpush1.msra.mxu0 0.0
        %3921 = vmatprep.subr.mxu0 0.0
        %3922 = vmatpush1.msra.mxu0 0.0
        %3923 = vmatprep.subr.mxu0 0.0
        %3924 = vmatpush1.msra.mxu0 0.0
        %3925 = vmatprep.subr.mxu0 0.0
        %3926 = vmatpush1.msra.mxu0 0.0
        %3927 = vmatprep.subr.mxu0 0.0
        %3928 = vmatpush1.msra.mxu0 0.0
        %3929 = vmatprep.subr.mxu0 0.0
        %3930 = vmatpush1.msra.mxu0 0.0
        %3931 = vmatprep.subr.mxu0 0.0
        %3932 = vmatpush1.msra.mxu0 0.0
        %3933 = vmatprep.subr.mxu0 0.0
        %3934 = vmatpush1.msra.mxu0 0.0
        %3935 = vmatprep.subr.mxu0 0.0
        %3936 = vmatpush1.msra.mxu0 0.0
        %3937 = vmatprep.subr.mxu0 0.0
        %3938 = vmatpush1.msra.mxu0 0.0
        %3939 = vmatprep.subr.mxu0 0.0
        %3940 = vmatpush1.msra.mxu0 0.0
        %3941 = vmatprep.subr.mxu0 0.0
        %3942 = vmatpush1.msra.mxu0 0.0
        %3943 = vmatprep.mubr.f32.mxu0 0.0
        %3944 = vmatmul.mubr.f32.gmra.mrb[0].mxu0 %v3877
        %v3945 = vpop.f32.mrb[0].mxu0
        %v3946 = vadd.f32 0.0, %v3945
        %v3947 = vpop.f32.mrb[0].mxu0
        %3948 = vdwg.mxu0
        %v3950 = vsel %vm2483, %v3371, 0
        %3952 = vmatprep.subr.mxu0 0.0
        %3953 = vmatpush1.msra.mxu0 %v3820
        %3954 = vmatprep.subr.mxu0 0.0
        %3955 = vmatpush1.msra.mxu0 %v3821
        %3956 = vmatprep.subr.mxu0 0.0
        %3957 = vmatpush1.msra.mxu0 %v3822
        %3958 = vmatprep.subr.mxu0 0.0
        %3959 = vmatpush1.msra.mxu0 %v3823
        %3960 = vmatprep.subr.mxu0 0.0
        %3961 = vmatpush1.msra.mxu0 %v3824
        %3962 = vmatprep.subr.mxu0 0.0
        %3963 = vmatpush1.msra.mxu0 %v3825
        %3964 = vmatprep.subr.mxu0 0.0
        %3965 = vmatpush1.msra.mxu0 %v3826
        %3966 = vmatprep.subr.mxu0 0.0
        %3967 = vmatpush1.msra.mxu0 %v3827
        %3968 = vmatprep.subr.mxu0 0.0
        %3969 = vmatpush1.msra.mxu0 0.0
        %3970 = vmatprep.subr.mxu0 0.0
        %3971 = vmatpush1.msra.mxu0 0.0
        %3972 = vmatprep.subr.mxu0 0.0
        %3973 = vmatpush1.msra.mxu0 0.0
        %3974 = vmatprep.subr.mxu0 0.0
        %3975 = vmatpush1.msra.mxu0 0.0
        %3976 = vmatprep.subr.mxu0 0.0
        %3977 = vmatpush1.msra.mxu0 0.0
        %3978 = vmatprep.subr.mxu0 0.0
        %3979 = vmatpush1.msra.mxu0 0.0
        %3980 = vmatprep.subr.mxu0 0.0
        %3981 = vmatpush1.msra.mxu0 0.0
        %3982 = vmatprep.subr.mxu0 0.0
        %3983 = vmatpush1.msra.mxu0 0.0
        %3984 = vmatprep.subr.mxu0 0.0
        %3985 = vmatpush1.msra.mxu0 0.0
        %3986 = vmatprep.subr.mxu0 0.0
        %3987 = vmatpush1.msra.mxu0 0.0
        %3988 = vmatprep.subr.mxu0 0.0
        %3989 = vmatpush1.msra.mxu0 0.0
        %3990 = vmatprep.subr.mxu0 0.0
        %3991 = vmatpush1.msra.mxu0 0.0
        %3992 = vmatprep.subr.mxu0 0.0
        %3993 = vmatpush1.msra.mxu0 0.0
        %3994 = vmatprep.subr.mxu0 0.0
        %3995 = vmatpush1.msra.mxu0 0.0
        %3996 = vmatprep.subr.mxu0 0.0
        %3997 = vmatpush1.msra.mxu0 0.0
        %3998 = vmatprep.subr.mxu0 0.0
        %3999 = vmatpush1.msra.mxu0 0.0
        %4000 = vmatprep.subr.mxu0 0.0
        %4001 = vmatpush1.msra.mxu0 0.0
        %4002 = vmatprep.subr.mxu0 0.0
        %4003 = vmatpush1.msra.mxu0 0.0
        %4004 = vmatprep.subr.mxu0 0.0
        %4005 = vmatpush1.msra.mxu0 0.0
        %4006 = vmatprep.subr.mxu0 0.0
        %4007 = vmatpush1.msra.mxu0 0.0
        %4008 = vmatprep.subr.mxu0 0.0
        %4009 = vmatpush1.msra.mxu0 0.0
        %4010 = vmatprep.subr.mxu0 0.0
        %4011 = vmatpush1.msra.mxu0 0.0
        %4012 = vmatprep.subr.mxu0 0.0
        %4013 = vmatpush1.msra.mxu0 0.0
        %4014 = vmatprep.subr.mxu0 0.0
        %4015 = vmatpush1.msra.mxu0 0.0
        %4016 = vmatprep.mubr.f32.mxu0 0.0
        %4017 = vmatmul.mubr.f32.gmra.mrb[0].mxu0 %v3950
        %v4018 = vpop.f32.mrb[0].mxu0
        %v4019 = vadd.f32 0.0, %v4018
        %v4020 = vpop.f32.mrb[0].mxu0
        %4021 = vdwg.mxu0
        %v4023 = vsel %vm2483, %v3444, 0
        %4025 = vmatprep.subr.mxu0 0.0
        %4026 = vmatpush1.msra.mxu0 %v3828
        %4027 = vmatprep.subr.mxu0 0.0
        %4028 = vmatpush1.msra.mxu0 %v3829
        %4029 = vmatprep.subr.mxu0 0.0
        %4030 = vmatpush1.msra.mxu0 %v3830
        %4031 = vmatprep.subr.mxu0 0.0
        %4032 = vmatpush1.msra.mxu0 %v3831
        %4033 = vmatprep.subr.mxu0 0.0
        %4034 = vmatpush1.msra.mxu0 %v3832
        %4035 = vmatprep.subr.mxu0 0.0
        %4036 = vmatpush1.msra.mxu0 %v3833
        %4037 = vmatprep.subr.mxu0 0.0
        %4038 = vmatpush1.msra.mxu0 %v3834
        %4039 = vmatprep.subr.mxu0 0.0
        %4040 = vmatpush1.msra.mxu0 %v3835
        %4041 = vmatprep.subr.mxu0 0.0
        %4042 = vmatpush1.msra.mxu0 0.0
        %4043 = vmatprep.subr.mxu0 0.0
        %4044 = vmatpush1.msra.mxu0 0.0
        %4045 = vmatprep.subr.mxu0 0.0
        %4046 = vmatpush1.msra.mxu0 0.0
        %4047 = vmatprep.subr.mxu0 0.0
        %4048 = vmatpush1.msra.mxu0 0.0
        %4049 = vmatprep.subr.mxu0 0.0
        %4050 = vmatpush1.msra.mxu0 0.0
        %4051 = vmatprep.subr.mxu0 0.0
        %4052 = vmatpush1.msra.mxu0 0.0
        %4053 = vmatprep.subr.mxu0 0.0
        %4054 = vmatpush1.msra.mxu0 0.0
        %4055 = vmatprep.subr.mxu0 0.0
        %4056 = vmatpush1.msra.mxu0 0.0
        %4057 = vmatprep.subr.mxu0 0.0
        %4058 = vmatpush1.msra.mxu0 0.0
        %4059 = vmatprep.subr.mxu0 0.0
        %4060 = vmatpush1.msra.mxu0 0.0
        %4061 = vmatprep.subr.mxu0 0.0
        %4062 = vmatpush1.msra.mxu0 0.0
        %4063 = vmatprep.subr.mxu0 0.0
        %4064 = vmatpush1.msra.mxu0 0.0
        %4065 = vmatprep.subr.mxu0 0.0
        %4066 = vmatpush1.msra.mxu0 0.0
        %4067 = vmatprep.subr.mxu0 0.0
        %4068 = vmatpush1.msra.mxu0 0.0
        %4069 = vmatprep.subr.mxu0 0.0
        %4070 = vmatpush1.msra.mxu0 0.0
        %4071 = vmatprep.subr.mxu0 0.0
        %4072 = vmatpush1.msra.mxu0 0.0
        %4073 = vmatprep.subr.mxu0 0.0
        %4074 = vmatpush1.msra.mxu0 0.0
        %4075 = vmatprep.subr.mxu0 0.0
        %4076 = vmatpush1.msra.mxu0 0.0
        %4077 = vmatprep.subr.mxu0 0.0
        %4078 = vmatpush1.msra.mxu0 0.0
        %4079 = vmatprep.subr.mxu0 0.0
        %4080 = vmatpush1.msra.mxu0 0.0
        %4081 = vmatprep.subr.mxu0 0.0
        %4082 = vmatpush1.msra.mxu0 0.0
        %4083 = vmatprep.subr.mxu0 0.0
        %4084 = vmatpush1.msra.mxu0 0.0
        %4085 = vmatprep.subr.mxu0 0.0
        %4086 = vmatpush1.msra.mxu0 0.0
        %4087 = vmatprep.subr.mxu0 0.0
        %4088 = vmatpush1.msra.mxu0 0.0
        %4089 = vmatprep.mubr.f32.mxu0 0.0
        %4090 = vmatmul.mubr.f32.gmra.mrb[0].mxu0 %v4023
        %v4091 = vpop.f32.mrb[0].mxu0
        %v4092 = vadd.f32 0.0, %v4091
        %v4093 = vpop.f32.mrb[0].mxu0
        %4094 = vdwg.mxu0
        %v4096 = vsel %vm2483, %v3517, 0
        %4098 = vmatprep.subr.mxu0 0.0
        %4099 = vmatpush1.msra.mxu0 %v3836
        %4100 = vmatprep.subr.mxu0 0.0
        %4101 = vmatpush1.msra.mxu0 %v3837
        %4102 = vmatprep.subr.mxu0 0.0
        %4103 = vmatpush1.msra.mxu0 %v3838
        %4104 = vmatprep.subr.mxu0 0.0
        %4105 = vmatpush1.msra.mxu0 %v3839
        %4106 = vmatprep.subr.mxu0 0.0
        %4107 = vmatpush1.msra.mxu0 %v3840
        %4108 = vmatprep.subr.mxu0 0.0
        %4109 = vmatpush1.msra.mxu0 %v3841
        %4110 = vmatprep.subr.mxu0 0.0
        %4111 = vmatpush1.msra.mxu0 %v3842
        %4112 = vmatprep.subr.mxu0 0.0
        %4113 = vmatpush1.msra.mxu0 %v3843
        %4114 = vmatprep.subr.mxu0 0.0
        %4115 = vmatpush1.msra.mxu0 0.0
        %4116 = vmatprep.subr.mxu0 0.0
        %4117 = vmatpush1.msra.mxu0 0.0
        %4118 = vmatprep.subr.mxu0 0.0
        %4119 = vmatpush1.msra.mxu0 0.0
        %4120 = vmatprep.subr.mxu0 0.0
        %4121 = vmatpush1.msra.mxu0 0.0
        %4122 = vmatprep.subr.mxu0 0.0
        %4123 = vmatpush1.msra.mxu0 0.0
        %4124 = vmatprep.subr.mxu0 0.0
        %4125 = vmatpush1.msra.mxu0 0.0
        %4126 = vmatprep.subr.mxu0 0.0
        %4127 = vmatpush1.msra.mxu0 0.0
        %4128 = vmatprep.subr.mxu0 0.0
        %4129 = vmatpush1.msra.mxu0 0.0
        %4130 = vmatprep.subr.mxu0 0.0
        %4131 = vmatpush1.msra.mxu0 0.0
        %4132 = vmatprep.subr.mxu0 0.0
        %4133 = vmatpush1.msra.mxu0 0.0
        %4134 = vmatprep.subr.mxu0 0.0
        %4135 = vmatpush1.msra.mxu0 0.0
        %4136 = vmatprep.subr.mxu0 0.0
        %4137 = vmatpush1.msra.mxu0 0.0
        %4138 = vmatprep.subr.mxu0 0.0
        %4139 = vmatpush1.msra.mxu0 0.0
        %4140 = vmatprep.subr.mxu0 0.0
        %4141 = vmatpush1.msra.mxu0 0.0
        %4142 = vmatprep.subr.mxu0 0.0
        %4143 = vmatpush1.msra.mxu0 0.0
        %4144 = vmatprep.subr.mxu0 0.0
        %4145 = vmatpush1.msra.mxu0 0.0
        %4146 = vmatprep.subr.mxu0 0.0
        %4147 = vmatpush1.msra.mxu0 0.0
        %4148 = vmatprep.subr.mxu0 0.0
        %4149 = vmatpush1.msra.mxu0 0.0
        %4150 = vmatprep.subr.mxu0 0.0
        %4151 = vmatpush1.msra.mxu0 0.0
        %4152 = vmatprep.subr.mxu0 0.0
        %4153 = vmatpush1.msra.mxu0 0.0
        %4154 = vmatprep.subr.mxu0 0.0
        %4155 = vmatpush1.msra.mxu0 0.0
        %4156 = vmatprep.subr.mxu0 0.0
        %4157 = vmatpush1.msra.mxu0 0.0
        %4158 = vmatprep.subr.mxu0 0.0
        %4159 = vmatpush1.msra.mxu0 0.0
        %4160 = vmatprep.subr.mxu0 0.0
        %4161 = vmatpush1.msra.mxu0 0.0
        %4162 = vmatprep.mubr.f32.mxu0 0.0
        %4163 = vmatmul.mubr.f32.gmra.mrb[0].mxu0 %v4096
        %v4164 = vpop.f32.mrb[0].mxu0
        %v4165 = vadd.f32 0.0, %v4164
        %v4166 = vpop.f32.mrb[0].mxu0
        %4167 = vdwg.mxu0
        %v4169 = vsel %vm2483, %v3590, 0
        %4171 = vmatprep.subr.mxu0 0.0
        %4172 = vmatpush1.msra.mxu0 %v3844
        %4173 = vmatprep.subr.mxu0 0.0
        %4174 = vmatpush1.msra.mxu0 %v3845
        %4175 = vmatprep.subr.mxu0 0.0
        %4176 = vmatpush1.msra.mxu0 %v3846
        %4177 = vmatprep.subr.mxu0 0.0
        %4178 = vmatpush1.msra.mxu0 %v3847
        %4179 = vmatprep.subr.mxu0 0.0
        %4180 = vmatpush1.msra.mxu0 %v3848
        %4181 = vmatprep.subr.mxu0 0.0
        %4182 = vmatpush1.msra.mxu0 %v3849
        %4183 = vmatprep.subr.mxu0 0.0
        %4184 = vmatpush1.msra.mxu0 %v3850
        %4185 = vmatprep.subr.mxu0 0.0
        %4186 = vmatpush1.msra.mxu0 %v3851
        %4187 = vmatprep.subr.mxu0 0.0
        %4188 = vmatpush1.msra.mxu0 0.0
        %4189 = vmatprep.subr.mxu0 0.0
        %4190 = vmatpush1.msra.mxu0 0.0
        %4191 = vmatprep.subr.mxu0 0.0
        %4192 = vmatpush1.msra.mxu0 0.0
        %4193 = vmatprep.subr.mxu0 0.0
        %4194 = vmatpush1.msra.mxu0 0.0
        %4195 = vmatprep.subr.mxu0 0.0
        %4196 = vmatpush1.msra.mxu0 0.0
        %4197 = vmatprep.subr.mxu0 0.0
        %4198 = vmatpush1.msra.mxu0 0.0
        %4199 = vmatprep.subr.mxu0 0.0
        %4200 = vmatpush1.msra.mxu0 0.0
        %4201 = vmatprep.subr.mxu0 0.0
        %4202 = vmatpush1.msra.mxu0 0.0
        %4203 = vmatprep.subr.mxu0 0.0
        %4204 = vmatpush1.msra.mxu0 0.0
        %4205 = vmatprep.subr.mxu0 0.0
        %4206 = vmatpush1.msra.mxu0 0.0
        %4207 = vmatprep.subr.mxu0 0.0
        %4208 = vmatpush1.msra.mxu0 0.0
        %4209 = vmatprep.subr.mxu0 0.0
        %4210 = vmatpush1.msra.mxu0 0.0
        %4211 = vmatprep.subr.mxu0 0.0
        %4212 = vmatpush1.msra.mxu0 0.0
        %4213 = vmatprep.subr.mxu0 0.0
        %4214 = vmatpush1.msra.mxu0 0.0
        %4215 = vmatprep.subr.mxu0 0.0
        %4216 = vmatpush1.msra.mxu0 0.0
        %4217 = vmatprep.subr.mxu0 0.0
        %4218 = vmatpush1.msra.mxu0 0.0
        %4219 = vmatprep.subr.mxu0 0.0
        %4220 = vmatpush1.msra.mxu0 0.0
        %4221 = vmatprep.subr.mxu0 0.0
        %4222 = vmatpush1.msra.mxu0 0.0
        %4223 = vmatprep.subr.mxu0 0.0
        %4224 = vmatpush1.msra.mxu0 0.0
        %4225 = vmatprep.subr.mxu0 0.0
        %4226 = vmatpush1.msra.mxu0 0.0
        %4227 = vmatprep.subr.mxu0 0.0
        %4228 = vmatpush1.msra.mxu0 0.0
        %4229 = vmatprep.subr.mxu0 0.0
        %4230 = vmatpush1.msra.mxu0 0.0
        %4231 = vmatprep.subr.mxu0 0.0
        %4232 = vmatpush1.msra.mxu0 0.0
        %4233 = vmatprep.subr.mxu0 0.0
        %4234 = vmatpush1.msra.mxu0 0.0
        %4235 = vmatprep.mubr.f32.mxu0 0.0
        %4236 = vmatmul.mubr.f32.gmra.mrb[0].mxu0 %v4169
        %v4237 = vpop.f32.mrb[0].mxu0
        %v4238 = vadd.f32 0.0, %v4237
        %v4239 = vpop.f32.mrb[0].mxu0
        %4240 = vdwg.mxu0
        %v4242 = vsel %vm2483, %v3663, 0
        %4244 = vmatprep.subr.mxu0 0.0
        %4245 = vmatpush1.msra.mxu0 %v3852
        %4246 = vmatprep.subr.mxu0 0.0
        %4247 = vmatpush1.msra.mxu0 %v3853
        %4248 = vmatprep.subr.mxu0 0.0
        %4249 = vmatpush1.msra.mxu0 %v3854
        %4250 = vmatprep.subr.mxu0 0.0
        %4251 = vmatpush1.msra.mxu0 %v3855
        %4252 = vmatprep.subr.mxu0 0.0
        %4253 = vmatpush1.msra.mxu0 %v3856
        %4254 = vmatprep.subr.mxu0 0.0
        %4255 = vmatpush1.msra.mxu0 %v3857
        %4256 = vmatprep.subr.mxu0 0.0
        %4257 = vmatpush1.msra.mxu0 %v3858
        %4258 = vmatprep.subr.mxu0 0.0
        %4259 = vmatpush1.msra.mxu0 %v3859
        %4260 = vmatprep.subr.mxu0 0.0
        %4261 = vmatpush1.msra.mxu0 0.0
        %4262 = vmatprep.subr.mxu0 0.0
        %4263 = vmatpush1.msra.mxu0 0.0
        %4264 = vmatprep.subr.mxu0 0.0
        %4265 = vmatpush1.msra.mxu0 0.0
        %4266 = vmatprep.subr.mxu0 0.0
        %4267 = vmatpush1.msra.mxu0 0.0
        %4268 = vmatprep.subr.mxu0 0.0
        %4269 = vmatpush1.msra.mxu0 0.0
        %4270 = vmatprep.subr.mxu0 0.0
        %4271 = vmatpush1.msra.mxu0 0.0
        %4272 = vmatprep.subr.mxu0 0.0
        %4273 = vmatpush1.msra.mxu0 0.0
        %4274 = vmatprep.subr.mxu0 0.0
        %4275 = vmatpush1.msra.mxu0 0.0
        %4276 = vmatprep.subr.mxu0 0.0
        %4277 = vmatpush1.msra.mxu0 0.0
        %4278 = vmatprep.subr.mxu0 0.0
        %4279 = vmatpush1.msra.mxu0 0.0
        %4280 = vmatprep.subr.mxu0 0.0
        %4281 = vmatpush1.msra.mxu0 0.0
        %4282 = vmatprep.subr.mxu0 0.0
        %4283 = vmatpush1.msra.mxu0 0.0
        %4284 = vmatprep.subr.mxu0 0.0
        %4285 = vmatpush1.msra.mxu0 0.0
        %4286 = vmatprep.subr.mxu0 0.0
        %4287 = vmatpush1.msra.mxu0 0.0
        %4288 = vmatprep.subr.mxu0 0.0
        %4289 = vmatpush1.msra.mxu0 0.0
        %4290 = vmatprep.subr.mxu0 0.0
        %4291 = vmatpush1.msra.mxu0 0.0
        %4292 = vmatprep.subr.mxu0 0.0
        %4293 = vmatpush1.msra.mxu0 0.0
        %4294 = vmatprep.subr.mxu0 0.0
        %4295 = vmatpush1.msra.mxu0 0.0
        %4296 = vmatprep.subr.mxu0 0.0
        %4297 = vmatpush1.msra.mxu0 0.0
        %4298 = vmatprep.subr.mxu0 0.0
        %4299 = vmatpush1.msra.mxu0 0.0
        %4300 = vmatprep.subr.mxu0 0.0
        %4301 = vmatpush1.msra.mxu0 0.0
        %4302 = vmatprep.subr.mxu0 0.0
        %4303 = vmatpush1.msra.mxu0 0.0
        %4304 = vmatprep.subr.mxu0 0.0
        %4305 = vmatpush1.msra.mxu0 0.0
        %4306 = vmatprep.subr.mxu0 0.0
        %4307 = vmatpush1.msra.mxu0 0.0
        %4308 = vmatprep.mubr.f32.mxu0 0.0
        %4309 = vmatmul.mubr.f32.gmra.mrb[0].mxu0 %v4242
        %v4310 = vpop.f32.mrb[0].mxu0
        %v4311 = vadd.f32 0.0, %v4310
        %v4312 = vpop.f32.mrb[0].mxu0
        %4313 = vdwg.mxu0
        %v4315 = vsel %vm2483, %v3736, 0
        %4317 = vmatprep.subr.mxu0 0.0
        %4318 = vmatpush1.msra.mxu0 %v3860
        %4319 = vmatprep.subr.mxu0 0.0
        %4320 = vmatpush1.msra.mxu0 %v3861
        %4321 = vmatprep.subr.mxu0 0.0
        %4322 = vmatpush1.msra.mxu0 %v3862
        %4323 = vmatprep.subr.mxu0 0.0
        %4324 = vmatpush1.msra.mxu0 %v3863
        %4325 = vmatprep.subr.mxu0 0.0
        %4326 = vmatpush1.msra.mxu0 %v3864
        %4327 = vmatprep.subr.mxu0 0.0
        %4328 = vmatpush1.msra.mxu0 %v3865
        %4329 = vmatprep.subr.mxu0 0.0
        %4330 = vmatpush1.msra.mxu0 %v3866
        %4331 = vmatprep.subr.mxu0 0.0
        %4332 = vmatpush1.msra.mxu0 %v3867
        %4333 = vmatprep.subr.mxu0 0.0
        %4334 = vmatpush1.msra.mxu0 0.0
        %4335 = vmatprep.subr.mxu0 0.0
        %4336 = vmatpush1.msra.mxu0 0.0
        %4337 = vmatprep.subr.mxu0 0.0
        %4338 = vmatpush1.msra.mxu0 0.0
        %4339 = vmatprep.subr.mxu0 0.0
        %4340 = vmatpush1.msra.mxu0 0.0
        %4341 = vmatprep.subr.mxu0 0.0
        %4342 = vmatpush1.msra.mxu0 0.0
        %4343 = vmatprep.subr.mxu0 0.0
        %4344 = vmatpush1.msra.mxu0 0.0
        %4345 = vmatprep.subr.mxu0 0.0
        %4346 = vmatpush1.msra.mxu0 0.0
        %4347 = vmatprep.subr.mxu0 0.0
        %4348 = vmatpush1.msra.mxu0 0.0
        %4349 = vmatprep.subr.mxu0 0.0
        %4350 = vmatpush1.msra.mxu0 0.0
        %4351 = vmatprep.subr.mxu0 0.0
        %4352 = vmatpush1.msra.mxu0 0.0
        %4353 = vmatprep.subr.mxu0 0.0
        %4354 = vmatpush1.msra.mxu0 0.0
        %4355 = vmatprep.subr.mxu0 0.0
        %4356 = vmatpush1.msra.mxu0 0.0
        %4357 = vmatprep.subr.mxu0 0.0
        %4358 = vmatpush1.msra.mxu0 0.0
        %4359 = vmatprep.subr.mxu0 0.0
        %4360 = vmatpush1.msra.mxu0 0.0
        %4361 = vmatprep.subr.mxu0 0.0
        %4362 = vmatpush1.msra.mxu0 0.0
        %4363 = vmatprep.subr.mxu0 0.0
        %4364 = vmatpush1.msra.mxu0 0.0
        %4365 = vmatprep.subr.mxu0 0.0
        %4366 = vmatpush1.msra.mxu0 0.0
        %4367 = vmatprep.subr.mxu0 0.0
        %4368 = vmatpush1.msra.mxu0 0.0
        %4369 = vmatprep.subr.mxu0 0.0
        %4370 = vmatpush1.msra.mxu0 0.0
        %4371 = vmatprep.subr.mxu0 0.0
        %4372 = vmatpush1.msra.mxu0 0.0
        %4373 = vmatprep.subr.mxu0 0.0
        %4374 = vmatpush1.msra.mxu0 0.0
        %4375 = vmatprep.subr.mxu0 0.0
        %4376 = vmatpush1.msra.mxu0 0.0
        %4377 = vmatprep.subr.mxu0 0.0
        %4378 = vmatpush1.msra.mxu0 0.0
        %4379 = vmatprep.subr.mxu0 0.0
        %4380 = vmatpush1.msra.mxu0 0.0
        %4381 = vmatprep.mubr.f32.mxu0 0.0
        %4382 = vmatmul.mubr.f32.gmra.mrb[0].mxu0 %v4315
        %v4383 = vpop.f32.mrb[0].mxu0
        %v4384 = vadd.f32 0.0, %v4383
        %v4385 = vpop.f32.mrb[0].mxu0
        %4386 = vdwg.mxu0
        %v4388 = vsel %vm2483, %v3809, 0
        %4390 = vmatprep.subr.mxu0 0.0
        %4391 = vmatpush1.msra.mxu0 %v3868
        %4392 = vmatprep.subr.mxu0 0.0
        %4393 = vmatpush1.msra.mxu0 %v3869
        %4394 = vmatprep.subr.mxu0 0.0
        %4395 = vmatpush1.msra.mxu0 %v3870
        %4396 = vmatprep.subr.mxu0 0.0
        %4397 = vmatpush1.msra.mxu0 %v3871
        %4398 = vmatprep.subr.mxu0 0.0
        %4399 = vmatpush1.msra.mxu0 %v3872
        %4400 = vmatprep.subr.mxu0 0.0
        %4401 = vmatpush1.msra.mxu0 %v3873
        %4402 = vmatprep.subr.mxu0 0.0
        %4403 = vmatpush1.msra.mxu0 %v3874
        %4404 = vmatprep.subr.mxu0 0.0
        %4405 = vmatpush1.msra.mxu0 %v3875
        %4406 = vmatprep.subr.mxu0 0.0
        %4407 = vmatpush1.msra.mxu0 0.0
        %4408 = vmatprep.subr.mxu0 0.0
        %4409 = vmatpush1.msra.mxu0 0.0
        %4410 = vmatprep.subr.mxu0 0.0
        %4411 = vmatpush1.msra.mxu0 0.0
        %4412 = vmatprep.subr.mxu0 0.0
        %4413 = vmatpush1.msra.mxu0 0.0
        %4414 = vmatprep.subr.mxu0 0.0
        %4415 = vmatpush1.msra.mxu0 0.0
        %4416 = vmatprep.subr.mxu0 0.0
        %4417 = vmatpush1.msra.mxu0 0.0
        %4418 = vmatprep.subr.mxu0 0.0
        %4419 = vmatpush1.msra.mxu0 0.0
        %4420 = vmatprep.subr.mxu0 0.0
        %4421 = vmatpush1.msra.mxu0 0.0
        %4422 = vmatprep.subr.mxu0 0.0
        %4423 = vmatpush1.msra.mxu0 0.0
        %4424 = vmatprep.subr.mxu0 0.0
        %4425 = vmatpush1.msra.mxu0 0.0
        %4426 = vmatprep.subr.mxu0 0.0
        %4427 = vmatpush1.msra.mxu0 0.0
        %4428 = vmatprep.subr.mxu0 0.0
        %4429 = vmatpush1.msra.mxu0 0.0
        %4430 = vmatprep.subr.mxu0 0.0
        %4431 = vmatpush1.msra.mxu0 0.0
        %4432 = vmatprep.subr.mxu0 0.0
        %4433 = vmatpush1.msra.mxu0 0.0
        %4434 = vmatprep.subr.mxu0 0.0
        %4435 = vmatpush1.msra.mxu0 0.0
        %4436 = vmatprep.subr.mxu0 0.0
        %4437 = vmatpush1.msra.mxu0 0.0
        %4438 = vmatprep.subr.mxu0 0.0
        %4439 = vmatpush1.msra.mxu0 0.0
        %4440 = vmatprep.subr.mxu0 0.0
        %4441 = vmatpush1.msra.mxu0 0.0
        %4442 = vmatprep.subr.mxu0 0.0
        %4443 = vmatpush1.msra.mxu0 0.0
        %4444 = vmatprep.subr.mxu0 0.0
        %4445 = vmatpush1.msra.mxu0 0.0
        %4446 = vmatprep.subr.mxu0 0.0
        %4447 = vmatpush1.msra.mxu0 0.0
        %4448 = vmatprep.subr.mxu0 0.0
        %4449 = vmatpush1.msra.mxu0 0.0
        %4450 = vmatprep.subr.mxu0 0.0
        %4451 = vmatpush1.msra.mxu0 0.0
        %4452 = vmatprep.subr.mxu0 0.0
        %4453 = vmatpush1.msra.mxu0 0.0
        %4454 = vmatprep.mubr.f32.mxu0 0.0
        %4455 = vmatmul.mubr.f32.gmra.mrb[0].mxu0 %v4388
        %v4456 = vpop.f32.mrb[0].mxu0
        %v4457 = vadd.f32 0.0, %v4456
        %v4458 = vpop.f32.mrb[0].mxu0
        %4459 = vdwg.mxu0
        %v4460 = vadd.f32 %v3946, %v4019
        %v4461 = vadd.f32 %v4460, %v4092
        %v4462 = vadd.f32 %v4461, %v4165
        %v4463 = vadd.f32 %v4462, %v4238
        %v4464 = vadd.f32 %v4463, %v4311
        %v4465 = vadd.f32 %v4464, %v4384
        %v4466 = vadd.f32 %v4465, %v4457
        %v4467 = vld [vmem:[%s7] sm:$0x1]
        %v4469 = vlaneseq
        %v4470 = vshrl.u32 %v4469, 7
        %v4471 = vsub.s32 0, %v4470
        %v4472 = vrot.slane %v4467, %v4471
        %v4474 = vadd.f32 %v4466, %v4472
        %4475 = vst [vmem:[%s322] sm:$0xff] %v4474
        %s4476 = sand.u32 %s213, 1
        %s4477 = scalar_lea.sflag [#allocation3], %s4476
        %s4478 = sand.u32 %s213, 1
        %s4479 = smul.addr %s4478, 8
        %s4480 = scalar_lea.vmem [#allocation2], %s4479
        // Predicated region
        $region53: #{tpu_custom_call.1} parent=51 // pred_check
          %p4481 = pneg %p223
        $region54: #{tpu_custom_call.1} parent=51 // pred_check_branch
          %4483 = sbr.rel (%p4481) target = $region56
        $region55: #{tpu_custom_call.1} parent=51 // pred_region
          %s4485 = ssub.s32 128, 128
          %4486 = vsyncadd %s4477, %s4485
          %s4487 = smul.addr %s22, 128
          %s4488 = scalar_lea.hbm %s8, %s4487
          %s4490 = sshll.u32 %s4480, 4
          %s4491 = int_to_ptr.vmem [resolvable:$true] %s4490
          %4493 = dma.vmem_to_hbm [thread:$0]  %s4491, 128, %s4488, %s4477
        $region56: #{tpu_custom_call.1} parent=51 // pred_fallthru
          _
      $region52: #{tpu_custom_call.1} parent=5 // pred_fallthru
        _
      %p4494 = scmp.le.s32.totalorder 2, %s17
      // Predicated region
      $region57: #{tpu_custom_call.1} parent=5 // pred_check
        %p4495 = pneg %p4494
      $region58: #{tpu_custom_call.1} parent=5 // pred_check_branch
        %4497 = sbr.rel (%p4495) target = $region60
      $region59: #{tpu_custom_call.1} parent=5 // pred_region
        %s4498 = ssub.s32 %s17, 2
        // Predicated region
        $region61: #{tpu_custom_call.1} parent=59 // pred_check
          %p4499 = pneg %p229
        $region62: #{tpu_custom_call.1} parent=59 // pred_check_branch
          %4501 = sbr.rel (%p4499) target = $region64
        $region63: #{tpu_custom_call.1} parent=59 // pred_region
          %s4502 = sand.u32 %s214, 1
          %s4503 = scalar_lea.sflag [#allocation3], %s4502
          %s4504 = sand.u32 %s214, 1
          %s4505 = smul.addr %s4504, 8
          %s4506 = scalar_lea.vmem [#allocation2], %s4505
          %4507 = dma.done %s4503, 128
        $region64: #{tpu_custom_call.1} parent=59 // pred_fallthru
          _
      $region60: #{tpu_custom_call.1} parent=5 // pred_fallthru
        _
    $region6: #{tpu_custom_call.1} parent=1 // loop_footer
      %s21 = sadd.s32 1, %s17
    $region7: #{tpu_custom_call.1} parent=1 // loop_footer_branch
      %16 = sbr.rel target = $region3
    $region8: #{tpu_custom_call.1} parent=1 // loop_exit
      _
    %4508 = vsyncpa [#allocation3], 1
    %s4509 = scalar_lea.sflag [#allocation3], 1
    %4510 = vsyncpa %s4509, 1

</llo_original>
